<compile_context>
chip_gen: v6e
topology: v6e:2x2x1
jax: 0.10.0
libtpu: 0.0.40
codegen_flags: <defaults>
</compile_context>

<pallas_src>
import jax
import jax.numpy as jnp
from jax.experimental import pallas as pl
from jax.experimental.pallas import tpu as pltpu

# ----------------- small synthetic BERT config -----------------
VOCAB = 100
TYPE_VOCAB = 2
MAX_POS = 64
HIDDEN = 32
HEADS = 4
HEAD_DIM = HIDDEN // HEADS
INTER = 64
LAYERS = 2
LN_EPS = 1e-12


# ----------------- in-kernel helpers (f32 elementwise math) -----------------
def _layernorm(x, g, b):
    x = x.astype(jnp.float32)
    mu = jnp.mean(x, axis=-1, keepdims=True)
    var = jnp.mean((x - mu) * (x - mu), axis=-1, keepdims=True)
    return (x - mu) * jax.lax.rsqrt(var + LN_EPS) * g + b


def _gelu(y):
    # TODO(synk): HF BERT uses exact erf-GELU; tanh approximation used here.
    return 0.5 * y * (1.0 + jnp.tanh(0.7978845608028654 * (y + 0.044715 * y * y * y)))


# ----------------- fused whole-encoder kernel (one batch element / program) ---------
def _encoder_kernel(emb_ref, mask_ref,
                    eg_ref, eb_ref,
                    wqkv_ref, bqkv_ref, wo_ref, bo_ref,
                    g1_ref, be1_ref,
                    w1_ref, b1_ref, w2_ref, b2_ref,
                    g2_ref, be2_ref,
                    o_ref):
    S = emb_ref.shape[1]

    # additive attention mask, broadcast in-kernel (no jnp.repeat / HBM trip)
    amask = (1.0 - mask_ref[0].astype(jnp.float32)) * -10000.0        # (1, S)

    # embedding LayerNorm (no zero-residual DMA)
    h = _layernorm(emb_ref[0], eg_ref[...], eb_ref[...])              # (S, H) f32

    for li in range(LAYERS):
        # ---- fused per-head Q/K/V projection: one batched contraction; q/k/v and
        #      head selection happen on the LEADING axis (no lane-offset slicing) ----
        x16 = jnp.broadcast_to(h.astype(jnp.bfloat16)[None],
                               (3 * HEADS, S, HIDDEN))                 # bf16 MXU input
        qkv = jnp.einsum('gsc,gcd->gsd', x16, wqkv_ref[li],
                         preferred_element_type=jnp.float32) + bqkv_ref[li]
        q = qkv[:HEADS]                     # (HEADS, S, HEAD_DIM); scale folded in Wq
        k = qkv[HEADS:2 * HEADS]
        v = qkv[2 * HEADS:]

        # ---- all heads in one batched attention contraction ----
        sc = jnp.einsum('hqd,hkd->hqk',
                        q.astype(jnp.bfloat16), k.astype(jnp.bfloat16),
                        preferred_element_type=jnp.float32)            # (HEADS, S, S)
        sc = sc + amask[None, :, :]
        mmax = jnp.max(sc, axis=-1, keepdims=True)
        e = jnp.exp(sc - mmax)
        p = e * pl.reciprocal(jnp.sum(e, axis=-1, keepdims=True), approx=True)
        ctx = jnp.einsum('hqk,hkd->hqd',
                         p.astype(jnp.bfloat16), v.astype(jnp.bfloat16),
                         preferred_element_type=jnp.float32)           # (HEADS, S, Hd)

        # ---- output projection with the head merge folded into the contraction:
        #      per-head partial projections + major-axis sum (VPU adds, no concat) ----
        attn_parts = jnp.einsum('hqd,hdc->hqc',
                                ctx.astype(jnp.bfloat16), wo_ref[li],
                                preferred_element_type=jnp.float32)    # (HEADS, S, H)
        attn_out = jnp.sum(attn_parts, axis=0) + bo_ref[li]            # (S, H)
        h = _layernorm(attn_out + h, g1_ref[li], be1_ref[li])

        # ---- FFN (gelu) + add & LayerNorm ----
        ff = _gelu(jnp.dot(h.astype(jnp.bfloat16), w1_ref[li],
                           preferred_element_type=jnp.float32) + b1_ref[li])
        ff2 = (jnp.dot(ff.astype(jnp.bfloat16), w2_ref[li],
                       preferred_element_type=jnp.float32) + b2_ref[li])
        h = _layernorm(ff2 + h, g2_ref[li], be2_ref[li])

    o_ref[0] = h.astype(o_ref.dtype)


def _run_encoder(emb, mask3d, params):
    B, S, _ = emb.shape

    weights = (params['emb_ln_g'], params['emb_ln_b'],
               params['wqkv'], params['bqkv'], params['wo'], params['bo'],
               params['ln1_g'], params['ln1_b'],
               params['w1'], params['b1'], params['w2'], params['b2'],
               params['ln2_g'], params['ln2_b'])

    def _full(arr):
        # full-array block, constant index -> DMA'd once, resident across grid steps
        n = arr.ndim
        return pl.BlockSpec(arr.shape, lambda b, _n=n: (0,) * _n)

    return pl.pallas_call(
        _encoder_kernel,
        out_shape=jax.ShapeDtypeStruct((B, S, HIDDEN), jnp.float32),
        grid=(B,),
        in_specs=[pl.BlockSpec((1, S, HIDDEN), lambda b: (b, 0, 0)),
                  pl.BlockSpec((1, 1, S), lambda b: (b, 0, 0))]
                 + [_full(w) for w in weights],
        out_specs=pl.BlockSpec((1, S, HIDDEN), lambda b: (b, 0, 0)),
        compiler_params=pltpu.CompilerParams(
            dimension_semantics=("parallel",)),   # shards batch across v7x's 2 TCs
    )(emb, mask3d, *weights)


# ----------------- deterministic parameter init (head-major, bf16 matmul weights) ----
def init_params(key):
    def nrm(k, shape):
        return 0.02 * jax.random.normal(k, shape, dtype=jnp.float32)

    def to_heads_in(w):   # (HIDDEN, HIDDEN) -> (HEADS, HIDDEN, HEAD_DIM)
        return w.reshape(HIDDEN, HEADS, HEAD_DIM).transpose(1, 0, 2)

    keys = jax.random.split(key, 3 + LAYERS)
    scale = 1.0 / (HEAD_DIM ** 0.5)

    wqkv, bqkv, wo, bo = [], [], [], []
    ln1_g, ln1_b, w1, b1 = [], [], [], []
    w2, b2, ln2_g, ln2_b = [], [], [], []
    for li in range(LAYERS):
        lk = jax.random.split(keys[3 + li], 6)
        wq = nrm(lk[0], (HIDDEN, HIDDEN))
        wk = nrm(lk[1], (HIDDEN, HIDDEN))
        wv = nrm(lk[2], (HIDDEN, HIDDEN))
        # fold 1/sqrt(head_dim) into Wq (valid only because the Q bias is zero);
        # head-major (3*HEADS, HIDDEN, HEAD_DIM) layout so the kernel never lane-slices
        wqkv.append(jnp.concatenate(
            [to_heads_in(wq * scale), to_heads_in(wk), to_heads_in(wv)],
            axis=0).astype(jnp.bfloat16))
        bqkv.append(jnp.zeros((3 * HEADS, 1, HEAD_DIM), jnp.float32))
        # Wo stored (HEADS, HEAD_DIM, HIDDEN): head-merge folds into the contraction
        wo.append(nrm(lk[3], (HIDDEN, HIDDEN))
                  .reshape(HEADS, HEAD_DIM, HIDDEN).astype(jnp.bfloat16))
        bo.append(jnp.zeros((1, HIDDEN), jnp.float32))
        ln1_g.append(jnp.ones((1, HIDDEN), jnp.float32))
        ln1_b.append(jnp.zeros((1, HIDDEN), jnp.float32))
        w1.append(nrm(lk[4], (HIDDEN, INTER)).astype(jnp.bfloat16))
        b1.append(jnp.zeros((1, INTER), jnp.float32))
        w2.append(nrm(lk[5], (INTER, HIDDEN)).astype(jnp.bfloat16))
        b2.append(jnp.zeros((1, HIDDEN), jnp.float32))
        ln2_g.append(jnp.ones((1, HIDDEN), jnp.float32))
        ln2_b.append(jnp.zeros((1, HIDDEN), jnp.float32))

    return {
        'word_emb': nrm(keys[0], (VOCAB, HIDDEN)),
        'pos_emb': nrm(keys[1], (MAX_POS, HIDDEN)),
        'type_emb': nrm(keys[2], (TYPE_VOCAB, HIDDEN)),
        'emb_ln_g': jnp.ones((1, HIDDEN), jnp.float32),
        'emb_ln_b': jnp.zeros((1, HIDDEN), jnp.float32),
        'wqkv': jnp.stack(wqkv), 'bqkv': jnp.stack(bqkv),
        'wo': jnp.stack(wo), 'bo': jnp.stack(bo),
        'ln1_g': jnp.stack(ln1_g), 'ln1_b': jnp.stack(ln1_b),
        'w1': jnp.stack(w1), 'b1': jnp.stack(b1),
        'w2': jnp.stack(w2), 'b2': jnp.stack(b2),
        'ln2_g': jnp.stack(ln2_g), 'ln2_b': jnp.stack(ln2_b),
    }


# ----------------- BERTEncoder.forward equivalent -----------------
def bert_encoder_forward(params, x1, x2, mask1=None, mask2=None):
    B = x1.shape[0]
    L1, L2 = x1.shape[1], x2.shape[1]
    S = L1 + L2

    # concat segments + build token_type_ids (0 for x1 part, 1 for x2 part)
    x = jnp.concatenate([x1, x2], axis=1)
    type_ids = jnp.concatenate(
        [jnp.zeros((B, L1), jnp.int32), jnp.ones((B, L2), jnp.int32)], axis=1)

    if mask1 is not None and mask2 is not None:
        mask = jnp.concatenate([mask1, mask2], axis=1).astype(jnp.float32)
    else:
        mask = jnp.ones((B, S), jnp.float32)

    # embedding gathers (data-dependent) stay in plain JAX glue (see TODO above)
    pos_ids = jnp.arange(S, dtype=jnp.int32)
    emb = (params['word_emb'][x]
           + params['pos_emb'][pos_ids][None, :, :]
           + params['type_emb'][type_ids]).astype(jnp.float32)          # (B, S, H)

    # whole 2-layer encoder in one fused Pallas kernel, gridded over batch
    h = _run_encoder(emb, mask.reshape(B, 1, S), params)

    return h, mask1, mask2


# ----------------- main -----------------
if __name__ == "__main__":
    key = jax.random.PRNGKey(0)
    k_param, k_x1, k_x2 = jax.random.split(key, 3)

    B, L1, L2 = 2, 4, 4
    params = init_params(k_param)
    x1 = jax.random.randint(k_x1, (B, L1), 0, VOCAB, dtype=jnp.int32)
    x2 = jax.random.randint(k_x2, (B, L2), 0, VOCAB, dtype=jnp.int32)
    mask1 = jnp.ones((B, L1), jnp.float32)
    mask2 = jnp.ones((B, L2), jnp.float32).at[:, -1].set(0.0)   # pad last x2 token

    fwd = jax.jit(bert_encoder_forward)
    out, m1, m2 = fwd(params, x1, x2, mask1, mask2)
    out = jax.block_until_ready(out)

    assert out.shape == (B, L1 + L2, HIDDEN)
    assert jnp.all(jnp.isfinite(out))
    print("KERNEL_OK")
</pallas_src>

<mosaic_0001>
module attributes {stable_mosaic.version = 11 : i64} {
  func.func @_encoder_kernel(%arg0: i32, %arg1: memref<1x8x32xf32, #tpu.memory_space<vmem>>, %arg2: memref<1x1x8xf32, #tpu.memory_space<vmem>>, %arg3: memref<1x32xf32, #tpu.memory_space<vmem>>, %arg4: memref<1x32xf32, #tpu.memory_space<vmem>>, %arg5: memref<2x12x32x8xbf16, #tpu.memory_space<vmem>>, %arg6: memref<2x12x1x8xf32, #tpu.memory_space<vmem>>, %arg7: memref<2x4x8x32xbf16, #tpu.memory_space<vmem>>, %arg8: memref<2x1x32xf32, #tpu.memory_space<vmem>>, %arg9: memref<2x1x32xf32, #tpu.memory_space<vmem>>, %arg10: memref<2x1x32xf32, #tpu.memory_space<vmem>>, %arg11: memref<2x32x64xbf16, #tpu.memory_space<vmem>>, %arg12: memref<2x1x64xf32, #tpu.memory_space<vmem>>, %arg13: memref<2x64x32xbf16, #tpu.memory_space<vmem>>, %arg14: memref<2x1x32xf32, #tpu.memory_space<vmem>>, %arg15: memref<2x1x32xf32, #tpu.memory_space<vmem>>, %arg16: memref<2x1x32xf32, #tpu.memory_space<vmem>>, %arg17: memref<1x8x32xf32, #tpu.memory_space<vmem>>) attributes {dimension_semantics = [#tpu.dimension_semantics<parallel>], iteration_bounds = array<i64: 2>, scalar_prefetch = 0 : i64, scratch_operands = 0 : i64, tpu.core_type = #tpu.core_type<tc>, window_params = [{transform_indices = @transform_0, window_bounds = array<i64: 1, 8, 32>}, {transform_indices = @transform_1, window_bounds = array<i64: 1, 1, 8>}, {pipeline_mode = #tpu.pipeline_mode<synchronous>, transform_indices = @transform_2, window_bounds = array<i64: 1, 32>}, {pipeline_mode = #tpu.pipeline_mode<synchronous>, transform_indices = @transform_3, window_bounds = array<i64: 1, 32>}, {pipeline_mode = #tpu.pipeline_mode<synchronous>, transform_indices = @transform_4, window_bounds = array<i64: 2, 12, 32, 8>}, {pipeline_mode = #tpu.pipeline_mode<synchronous>, transform_indices = @transform_5, window_bounds = array<i64: 2, 12, 1, 8>}, {pipeline_mode = #tpu.pipeline_mode<synchronous>, transform_indices = @transform_6, window_bounds = array<i64: 2, 4, 8, 32>}, {pipeline_mode = #tpu.pipeline_mode<synchronous>, transform_indices = @transform_7, window_bounds = array<i64: 2, 1, 32>}, {pipeline_mode = #tpu.pipeline_mode<synchronous>, transform_indices = @transform_8, window_bounds = array<i64: 2, 1, 32>}, {pipeline_mode = #tpu.pipeline_mode<synchronous>, transform_indices = @transform_9, window_bounds = array<i64: 2, 1, 32>}, {pipeline_mode = #tpu.pipeline_mode<synchronous>, transform_indices = @transform_10, window_bounds = array<i64: 2, 32, 64>}, {pipeline_mode = #tpu.pipeline_mode<synchronous>, transform_indices = @transform_11, window_bounds = array<i64: 2, 1, 64>}, {pipeline_mode = #tpu.pipeline_mode<synchronous>, transform_indices = @transform_12, window_bounds = array<i64: 2, 64, 32>}, {pipeline_mode = #tpu.pipeline_mode<synchronous>, transform_indices = @transform_13, window_bounds = array<i64: 2, 1, 32>}, {pipeline_mode = #tpu.pipeline_mode<synchronous>, transform_indices = @transform_14, window_bounds = array<i64: 2, 1, 32>}, {pipeline_mode = #tpu.pipeline_mode<synchronous>, transform_indices = @transform_15, window_bounds = array<i64: 2, 1, 32>}, {transform_indices = @transform_16, window_bounds = array<i64: 1, 8, 32>}]} {
    %c0 = arith.constant 0 : index
    %c0_0 = arith.constant 0 : index
    %c0_1 = arith.constant 0 : index
    %0 = vector.load %arg2[%c0, %c0_0, %c0_1] : memref<1x1x8xf32, #tpu.memory_space<vmem>>, vector<1x1x8xf32>
    %1 = vector.shape_cast %0 : vector<1x1x8xf32> to vector<1x8xf32>
    %cst = arith.constant 1.000000e+00 : f32
    %2 = vector.broadcast %cst : f32 to vector<1x8xf32>
    %3 = arith.subf %2, %1 : vector<1x8xf32>
    %cst_2 = arith.constant -1.000000e+04 : f32
    %4 = vector.broadcast %cst_2 : f32 to vector<1x8xf32>
    %5 = arith.mulf %3, %4 : vector<1x8xf32>
    %c0_3 = arith.constant 0 : index
    %c0_4 = arith.constant 0 : index
    %c0_5 = arith.constant 0 : index
    %6 = vector.load %arg1[%c0_3, %c0_4, %c0_5] : memref<1x8x32xf32, #tpu.memory_space<vmem>>, vector<1x8x32xf32>
    %7 = vector.shape_cast %6 : vector<1x8x32xf32> to vector<8x32xf32>
    %c0_6 = arith.constant 0 : index
    %c0_7 = arith.constant 0 : index
    %8 = vector.load %arg3[%c0_6, %c0_7] : memref<1x32xf32, #tpu.memory_space<vmem>>, vector<1x32xf32>
    %c0_8 = arith.constant 0 : index
    %c0_9 = arith.constant 0 : index
    %9 = vector.load %arg4[%c0_8, %c0_9] : memref<1x32xf32, #tpu.memory_space<vmem>>, vector<1x32xf32>
    %cst_10 = arith.constant dense<0.000000e+00> : vector<8xf32>
    %10 = vector.multi_reduction <add>, %7, %cst_10 [1] : vector<8x32xf32> to vector<8xf32>
    %11 = vector.shape_cast %10 : vector<8xf32> to vector<8x1xf32>
    %cst_11 = arith.constant 3.200000e+01 : f32
    %12 = vector.broadcast %cst_11 : f32 to vector<8x1xf32>
    %13 = arith.divf %11, %12 : vector<8x1xf32>
    %14 = vector.broadcast %13 : vector<8x1xf32> to vector<8x32xf32>
    %15 = arith.subf %7, %14 : vector<8x32xf32>
    %16 = vector.broadcast %13 : vector<8x1xf32> to vector<8x32xf32>
    %17 = arith.subf %7, %16 : vector<8x32xf32>
    %18 = arith.mulf %15, %17 : vector<8x32xf32>
    %cst_12 = arith.constant dense<0.000000e+00> : vector<8xf32>
    %19 = vector.multi_reduction <add>, %18, %cst_12 [1] : vector<8x32xf32> to vector<8xf32>
    %20 = vector.shape_cast %19 : vector<8xf32> to vector<8x1xf32>
    %cst_13 = arith.constant 3.200000e+01 : f32
    %21 = vector.broadcast %cst_13 : f32 to vector<8x1xf32>
    %22 = arith.divf %20, %21 : vector<8x1xf32>
    %23 = vector.broadcast %13 : vector<8x1xf32> to vector<8x32xf32>
    %24 = arith.subf %7, %23 : vector<8x32xf32>
    %cst_14 = arith.constant 9.99999996E-13 : f32
    %25 = vector.broadcast %cst_14 : f32 to vector<8x1xf32>
    %26 = arith.addf %22, %25 : vector<8x1xf32>
    %27 = math.rsqrt %26 : vector<8x1xf32>
    %28 = vector.broadcast %27 : vector<8x1xf32> to vector<8x32xf32>
    %29 = arith.mulf %24, %28 : vector<8x32xf32>
    %30 = vector.broadcast %8 : vector<1x32xf32> to vector<8x32xf32>
    %31 = arith.mulf %29, %30 : vector<8x32xf32>
    %32 = vector.broadcast %9 : vector<1x32xf32> to vector<8x32xf32>
    %33 = arith.addf %31, %32 : vector<8x32xf32>
    %34 = arith.truncf %33 : vector<8x32xf32> to vector<8x32xbf16>
    %35 = vector.shape_cast %34 : vector<8x32xbf16> to vector<1x8x32xbf16>
    %36 = vector.shape_cast %35 : vector<1x8x32xbf16> to vector<1x8x32xbf16>
    %37 = vector.broadcast %36 : vector<1x8x32xbf16> to vector<12x8x32xbf16>
    %c0_15 = arith.constant 0 : index
    %c0_16 = arith.constant 0 : index
    %c0_17 = arith.constant 0 : index
    %c0_18 = arith.constant 0 : index
    %38 = vector.load %arg5[%c0_15, %c0_16, %c0_17, %c0_18] : memref<2x12x32x8xbf16, #tpu.memory_space<vmem>>, vector<1x12x32x8xbf16>
    %39 = vector.shape_cast %38 : vector<1x12x32x8xbf16> to vector<12x32x8xbf16>
    "tpu.trace_start"() <{level = 10 : i32, message = "gsc,gcd->gsd"}> : () -> ()
    %cst_19 = arith.constant dense<0.000000e+00> : vector<12x8x8xf32>
    %40 = tpu.matmul %37, %39, %cst_19 {dimension_numbers = #tpu.dot_dimension_numbers<[2], [1], [1], [2], [0, 0, 0, 1, 1, 2], [0], [0]>} : vector<12x8x32xbf16>, vector<12x32x8xbf16>, vector<12x8x8xf32> -> vector<12x8x8xf32>
    "tpu.trace_stop"() : () -> ()
    %c0_20 = arith.constant 0 : index
    %c0_21 = arith.constant 0 : index
    %c0_22 = arith.constant 0 : index
    %c0_23 = arith.constant 0 : index
    %41 = vector.load %arg6[%c0_20, %c0_21, %c0_22, %c0_23] : memref<2x12x1x8xf32, #tpu.memory_space<vmem>>, vector<1x12x1x8xf32>
    %42 = vector.shape_cast %41 : vector<1x12x1x8xf32> to vector<12x1x8xf32>
    %43 = vector.broadcast %42 : vector<12x1x8xf32> to vector<12x8x8xf32>
    %44 = arith.addf %40, %43 : vector<12x8x8xf32>
    %45 = vector.extract_strided_slice %44 {offsets = [0, 0, 0], sizes = [4, 8, 8], strides = [1, 1, 1]} : vector<12x8x8xf32> to vector<4x8x8xf32>
    %46 = vector.extract_strided_slice %44 {offsets = [4, 0, 0], sizes = [4, 8, 8], strides = [1, 1, 1]} : vector<12x8x8xf32> to vector<4x8x8xf32>
    %47 = vector.extract_strided_slice %44 {offsets = [8, 0, 0], sizes = [4, 8, 8], strides = [1, 1, 1]} : vector<12x8x8xf32> to vector<4x8x8xf32>
    %48 = arith.truncf %45 : vector<4x8x8xf32> to vector<4x8x8xbf16>
    %49 = arith.truncf %46 : vector<4x8x8xf32> to vector<4x8x8xbf16>
    "tpu.trace_start"() <{level = 10 : i32, message = "hqd,hkd->hqk"}> : () -> ()
    %cst_24 = arith.constant dense<0.000000e+00> : vector<4x8x8xf32>
    %50 = tpu.matmul %48, %49, %cst_24 {dimension_numbers = #tpu.dot_dimension_numbers<[2], [2], [1], [1], [0, 0, 0, 1, 1, 1], [0], [0]>} : vector<4x8x8xbf16>, vector<4x8x8xbf16>, vector<4x8x8xf32> -> vector<4x8x8xf32>
    "tpu.trace_stop"() : () -> ()
    %51 = vector.shape_cast %5 : vector<1x8xf32> to vector<1x1x8xf32>
    %52 = vector.broadcast %51 : vector<1x1x8xf32> to vector<4x8x8xf32>
    %53 = arith.addf %50, %52 : vector<4x8x8xf32>
    %cst_25 = arith.constant dense<0xFF800000> : vector<4x8xf32>
    %54 = vector.multi_reduction <maximumf>, %53, %cst_25 [2] : vector<4x8x8xf32> to vector<4x8xf32>
    %55 = vector.shape_cast %54 : vector<4x8xf32> to vector<4x8x1xf32>
    %56 = vector.broadcast %55 : vector<4x8x1xf32> to vector<4x8x8xf32>
    %57 = arith.subf %53, %56 : vector<4x8x8xf32>
    %58 = math.exp %57 : vector<4x8x8xf32>
    %cst_26 = arith.constant dense<0.000000e+00> : vector<4x8xf32>
    %59 = vector.multi_reduction <add>, %58, %cst_26 [2] : vector<4x8x8xf32> to vector<4x8xf32>
    %60 = vector.shape_cast %59 : vector<4x8xf32> to vector<4x8x1xf32>
    %61 = tpu.reciprocal %60 {approx = true} : vector<4x8x1xf32> -> vector<4x8x1xf32>
    %62 = vector.broadcast %61 : vector<4x8x1xf32> to vector<4x8x8xf32>
    %63 = arith.mulf %58, %62 : vector<4x8x8xf32>
    %64 = arith.truncf %63 : vector<4x8x8xf32> to vector<4x8x8xbf16>
    %65 = arith.truncf %47 : vector<4x8x8xf32> to vector<4x8x8xbf16>
    "tpu.trace_start"() <{level = 10 : i32, message = "hqk,hkd->hqd"}> : () -> ()
    %cst_27 = arith.constant dense<0.000000e+00> : vector<4x8x8xf32>
    %66 = tpu.matmul %64, %65, %cst_27 {dimension_numbers = #tpu.dot_dimension_numbers<[2], [1], [1], [2], [0, 0, 0, 1, 1, 2], [0], [0]>} : vector<4x8x8xbf16>, vector<4x8x8xbf16>, vector<4x8x8xf32> -> vector<4x8x8xf32>
    "tpu.trace_stop"() : () -> ()
    %67 = arith.truncf %66 : vector<4x8x8xf32> to vector<4x8x8xbf16>
    %c0_28 = arith.constant 0 : index
    %c0_29 = arith.constant 0 : index
    %c0_30 = arith.constant 0 : index
    %c0_31 = arith.constant 0 : index
    %68 = vector.load %arg7[%c0_28, %c0_29, %c0_30, %c0_31] : memref<2x4x8x32xbf16, #tpu.memory_space<vmem>>, vector<1x4x8x32xbf16>
    %69 = vector.shape_cast %68 : vector<1x4x8x32xbf16> to vector<4x8x32xbf16>
    "tpu.trace_start"() <{level = 10 : i32, message = "hqd,hdc->hqc"}> : () -> ()
    %cst_32 = arith.constant dense<0.000000e+00> : vector<4x8x32xf32>
    %70 = tpu.matmul %67, %69, %cst_32 {dimension_numbers = #tpu.dot_dimension_numbers<[2], [1], [1], [2], [0, 0, 0, 1, 1, 2], [0], [0]>} : vector<4x8x8xbf16>, vector<4x8x32xbf16>, vector<4x8x32xf32> -> vector<4x8x32xf32>
    "tpu.trace_stop"() : () -> ()
    %cst_33 = arith.constant dense<0.000000e+00> : vector<8x32xf32>
    %71 = vector.multi_reduction <add>, %70, %cst_33 [0] : vector<4x8x32xf32> to vector<8x32xf32>
    %c0_34 = arith.constant 0 : index
    %c0_35 = arith.constant 0 : index
    %c0_36 = arith.constant 0 : index
    %72 = vector.load %arg8[%c0_34, %c0_35, %c0_36] : memref<2x1x32xf32, #tpu.memory_space<vmem>>, vector<1x1x32xf32>
    %73 = vector.shape_cast %72 : vector<1x1x32xf32> to vector<1x32xf32>
    %74 = vector.broadcast %73 : vector<1x32xf32> to vector<8x32xf32>
    %75 = arith.addf %71, %74 : vector<8x32xf32>
    %76 = arith.addf %75, %33 : vector<8x32xf32>
    %c0_37 = arith.constant 0 : index
    %c0_38 = arith.constant 0 : index
    %c0_39 = arith.constant 0 : index
    %77 = vector.load %arg9[%c0_37, %c0_38, %c0_39] : memref<2x1x32xf32, #tpu.memory_space<vmem>>, vector<1x1x32xf32>
    %78 = vector.shape_cast %77 : vector<1x1x32xf32> to vector<1x32xf32>
    %c0_40 = arith.constant 0 : index
    %c0_41 = arith.constant 0 : index
    %c0_42 = arith.constant 0 : index
    %79 = vector.load %arg10[%c0_40, %c0_41, %c0_42] : memref<2x1x32xf32, #tpu.memory_space<vmem>>, vector<1x1x32xf32>
    %80 = vector.shape_cast %79 : vector<1x1x32xf32> to vector<1x32xf32>
    %cst_43 = arith.constant dense<0.000000e+00> : vector<8xf32>
    %81 = vector.multi_reduction <add>, %76, %cst_43 [1] : vector<8x32xf32> to vector<8xf32>
    %82 = vector.shape_cast %81 : vector<8xf32> to vector<8x1xf32>
    %cst_44 = arith.constant 3.200000e+01 : f32
    %83 = vector.broadcast %cst_44 : f32 to vector<8x1xf32>
    %84 = arith.divf %82, %83 : vector<8x1xf32>
    %85 = vector.broadcast %84 : vector<8x1xf32> to vector<8x32xf32>
    %86 = arith.subf %76, %85 : vector<8x32xf32>
    %87 = vector.broadcast %84 : vector<8x1xf32> to vector<8x32xf32>
    %88 = arith.subf %76, %87 : vector<8x32xf32>
    %89 = arith.mulf %86, %88 : vector<8x32xf32>
    %cst_45 = arith.constant dense<0.000000e+00> : vector<8xf32>
    %90 = vector.multi_reduction <add>, %89, %cst_45 [1] : vector<8x32xf32> to vector<8xf32>
    %91 = vector.shape_cast %90 : vector<8xf32> to vector<8x1xf32>
    %cst_46 = arith.constant 3.200000e+01 : f32
    %92 = vector.broadcast %cst_46 : f32 to vector<8x1xf32>
    %93 = arith.divf %91, %92 : vector<8x1xf32>
    %94 = vector.broadcast %84 : vector<8x1xf32> to vector<8x32xf32>
    %95 = arith.subf %76, %94 : vector<8x32xf32>
    %cst_47 = arith.constant 9.99999996E-13 : f32
    %96 = vector.broadcast %cst_47 : f32 to vector<8x1xf32>
    %97 = arith.addf %93, %96 : vector<8x1xf32>
    %98 = math.rsqrt %97 : vector<8x1xf32>
    %99 = vector.broadcast %98 : vector<8x1xf32> to vector<8x32xf32>
    %100 = arith.mulf %95, %99 : vector<8x32xf32>
    %101 = vector.broadcast %78 : vector<1x32xf32> to vector<8x32xf32>
    %102 = arith.mulf %100, %101 : vector<8x32xf32>
    %103 = vector.broadcast %80 : vector<1x32xf32> to vector<8x32xf32>
    %104 = arith.addf %102, %103 : vector<8x32xf32>
    %105 = arith.truncf %104 : vector<8x32xf32> to vector<8x32xbf16>
    %c0_48 = arith.constant 0 : index
    %c0_49 = arith.constant 0 : index
    %c0_50 = arith.constant 0 : index
    %106 = vector.load %arg11[%c0_48, %c0_49, %c0_50] : memref<2x32x64xbf16, #tpu.memory_space<vmem>>, vector<1x32x64xbf16>
    %107 = vector.shape_cast %106 : vector<1x32x64xbf16> to vector<32x64xbf16>
    %cst_51 = arith.constant dense<0.000000e+00> : vector<8x64xf32>
    %108 = tpu.matmul %105, %107, %cst_51 {dimension_numbers = #tpu.dot_dimension_numbers<[1], [0], [0], [1], [0, 0, 1, 1], [], []>} : vector<8x32xbf16>, vector<32x64xbf16>, vector<8x64xf32> -> vector<8x64xf32>
    %c0_52 = arith.constant 0 : index
    %c0_53 = arith.constant 0 : index
    %c0_54 = arith.constant 0 : index
    %109 = vector.load %arg12[%c0_52, %c0_53, %c0_54] : memref<2x1x64xf32, #tpu.memory_space<vmem>>, vector<1x1x64xf32>
    %110 = vector.shape_cast %109 : vector<1x1x64xf32> to vector<1x64xf32>
    %111 = vector.broadcast %110 : vector<1x64xf32> to vector<8x64xf32>
    %112 = arith.addf %108, %111 : vector<8x64xf32>
    %cst_55 = arith.constant 5.000000e-01 : f32
    %113 = vector.broadcast %cst_55 : f32 to vector<8x64xf32>
    %114 = arith.mulf %113, %112 : vector<8x64xf32>
    %cst_56 = arith.constant 4.471500e-02 : f32
    %115 = vector.broadcast %cst_56 : f32 to vector<8x64xf32>
    %116 = arith.mulf %115, %112 : vector<8x64xf32>
    %117 = arith.mulf %116, %112 : vector<8x64xf32>
    %118 = arith.mulf %117, %112 : vector<8x64xf32>
    %119 = arith.addf %112, %118 : vector<8x64xf32>
    %cst_57 = arith.constant 0.797884583 : f32
    %120 = vector.broadcast %cst_57 : f32 to vector<8x64xf32>
    %121 = arith.mulf %120, %119 : vector<8x64xf32>
    %122 = math.tanh %121 : vector<8x64xf32>
    %cst_58 = arith.constant 1.000000e+00 : f32
    %123 = vector.broadcast %cst_58 : f32 to vector<8x64xf32>
    %124 = arith.addf %123, %122 : vector<8x64xf32>
    %125 = arith.mulf %114, %124 : vector<8x64xf32>
    %126 = arith.truncf %125 : vector<8x64xf32> to vector<8x64xbf16>
    %c0_59 = arith.constant 0 : index
    %c0_60 = arith.constant 0 : index
    %c0_61 = arith.constant 0 : index
    %127 = vector.load %arg13[%c0_59, %c0_60, %c0_61] : memref<2x64x32xbf16, #tpu.memory_space<vmem>>, vector<1x64x32xbf16>
    %128 = vector.shape_cast %127 : vector<1x64x32xbf16> to vector<64x32xbf16>
    %cst_62 = arith.constant dense<0.000000e+00> : vector<8x32xf32>
    %129 = tpu.matmul %126, %128, %cst_62 {dimension_numbers = #tpu.dot_dimension_numbers<[1], [0], [0], [1], [0, 0, 1, 1], [], []>} : vector<8x64xbf16>, vector<64x32xbf16>, vector<8x32xf32> -> vector<8x32xf32>
    %c0_63 = arith.constant 0 : index
    %c0_64 = arith.constant 0 : index
    %c0_65 = arith.constant 0 : index
    %130 = vector.load %arg14[%c0_63, %c0_64, %c0_65] : memref<2x1x32xf32, #tpu.memory_space<vmem>>, vector<1x1x32xf32>
    %131 = vector.shape_cast %130 : vector<1x1x32xf32> to vector<1x32xf32>
    %132 = vector.broadcast %131 : vector<1x32xf32> to vector<8x32xf32>
    %133 = arith.addf %129, %132 : vector<8x32xf32>
    %134 = arith.addf %133, %104 : vector<8x32xf32>
    %c0_66 = arith.constant 0 : index
    %c0_67 = arith.constant 0 : index
    %c0_68 = arith.constant 0 : index
    %135 = vector.load %arg15[%c0_66, %c0_67, %c0_68] : memref<2x1x32xf32, #tpu.memory_space<vmem>>, vector<1x1x32xf32>
    %136 = vector.shape_cast %135 : vector<1x1x32xf32> to vector<1x32xf32>
    %c0_69 = arith.constant 0 : index
    %c0_70 = arith.constant 0 : index
    %c0_71 = arith.constant 0 : index
    %137 = vector.load %arg16[%c0_69, %c0_70, %c0_71] : memref<2x1x32xf32, #tpu.memory_space<vmem>>, vector<1x1x32xf32>
    %138 = vector.shape_cast %137 : vector<1x1x32xf32> to vector<1x32xf32>
    %cst_72 = arith.constant dense<0.000000e+00> : vector<8xf32>
    %139 = vector.multi_reduction <add>, %134, %cst_72 [1] : vector<8x32xf32> to vector<8xf32>
    %140 = vector.shape_cast %139 : vector<8xf32> to vector<8x1xf32>
    %cst_73 = arith.constant 3.200000e+01 : f32
    %141 = vector.broadcast %cst_73 : f32 to vector<8x1xf32>
    %142 = arith.divf %140, %141 : vector<8x1xf32>
    %143 = vector.broadcast %142 : vector<8x1xf32> to vector<8x32xf32>
    %144 = arith.subf %134, %143 : vector<8x32xf32>
    %145 = vector.broadcast %142 : vector<8x1xf32> to vector<8x32xf32>
    %146 = arith.subf %134, %145 : vector<8x32xf32>
    %147 = arith.mulf %144, %146 : vector<8x32xf32>
    %cst_74 = arith.constant dense<0.000000e+00> : vector<8xf32>
    %148 = vector.multi_reduction <add>, %147, %cst_74 [1] : vector<8x32xf32> to vector<8xf32>
    %149 = vector.shape_cast %148 : vector<8xf32> to vector<8x1xf32>
    %cst_75 = arith.constant 3.200000e+01 : f32
    %150 = vector.broadcast %cst_75 : f32 to vector<8x1xf32>
    %151 = arith.divf %149, %150 : vector<8x1xf32>
    %152 = vector.broadcast %142 : vector<8x1xf32> to vector<8x32xf32>
    %153 = arith.subf %134, %152 : vector<8x32xf32>
    %cst_76 = arith.constant 9.99999996E-13 : f32
    %154 = vector.broadcast %cst_76 : f32 to vector<8x1xf32>
    %155 = arith.addf %151, %154 : vector<8x1xf32>
    %156 = math.rsqrt %155 : vector<8x1xf32>
    %157 = vector.broadcast %156 : vector<8x1xf32> to vector<8x32xf32>
    %158 = arith.mulf %153, %157 : vector<8x32xf32>
    %159 = vector.broadcast %136 : vector<1x32xf32> to vector<8x32xf32>
    %160 = arith.mulf %158, %159 : vector<8x32xf32>
    %161 = vector.broadcast %138 : vector<1x32xf32> to vector<8x32xf32>
    %162 = arith.addf %160, %161 : vector<8x32xf32>
    %163 = arith.truncf %162 : vector<8x32xf32> to vector<8x32xbf16>
    %164 = vector.shape_cast %163 : vector<8x32xbf16> to vector<1x8x32xbf16>
    %165 = vector.shape_cast %164 : vector<1x8x32xbf16> to vector<1x8x32xbf16>
    %166 = vector.broadcast %165 : vector<1x8x32xbf16> to vector<12x8x32xbf16>
    %c1 = arith.constant 1 : index
    %c0_77 = arith.constant 0 : index
    %c0_78 = arith.constant 0 : index
    %c0_79 = arith.constant 0 : index
    %167 = vector.load %arg5[%c1, %c0_77, %c0_78, %c0_79] : memref<2x12x32x8xbf16, #tpu.memory_space<vmem>>, vector<1x12x32x8xbf16>
    %168 = vector.shape_cast %167 : vector<1x12x32x8xbf16> to vector<12x32x8xbf16>
    "tpu.trace_start"() <{level = 10 : i32, message = "gsc,gcd->gsd"}> : () -> ()
    %cst_80 = arith.constant dense<0.000000e+00> : vector<12x8x8xf32>
    %169 = tpu.matmul %166, %168, %cst_80 {dimension_numbers = #tpu.dot_dimension_numbers<[2], [1], [1], [2], [0, 0, 0, 1, 1, 2], [0], [0]>} : vector<12x8x32xbf16>, vector<12x32x8xbf16>, vector<12x8x8xf32> -> vector<12x8x8xf32>
    "tpu.trace_stop"() : () -> ()
    %c1_81 = arith.constant 1 : index
    %c0_82 = arith.constant 0 : index
    %c0_83 = arith.constant 0 : index
    %c0_84 = arith.constant 0 : index
    %170 = vector.load %arg6[%c1_81, %c0_82, %c0_83, %c0_84] : memref<2x12x1x8xf32, #tpu.memory_space<vmem>>, vector<1x12x1x8xf32>
    %171 = vector.shape_cast %170 : vector<1x12x1x8xf32> to vector<12x1x8xf32>
    %172 = vector.broadcast %171 : vector<12x1x8xf32> to vector<12x8x8xf32>
    %173 = arith.addf %169, %172 : vector<12x8x8xf32>
    %174 = vector.extract_strided_slice %173 {offsets = [0, 0, 0], sizes = [4, 8, 8], strides = [1, 1, 1]} : vector<12x8x8xf32> to vector<4x8x8xf32>
    %175 = vector.extract_strided_slice %173 {offsets = [4, 0, 0], sizes = [4, 8, 8], strides = [1, 1, 1]} : vector<12x8x8xf32> to vector<4x8x8xf32>
    %176 = vector.extract_strided_slice %173 {offsets = [8, 0, 0], sizes = [4, 8, 8], strides = [1, 1, 1]} : vector<12x8x8xf32> to vector<4x8x8xf32>
    %177 = arith.truncf %174 : vector<4x8x8xf32> to vector<4x8x8xbf16>
    %178 = arith.truncf %175 : vector<4x8x8xf32> to vector<4x8x8xbf16>
    "tpu.trace_start"() <{level = 10 : i32, message = "hqd,hkd->hqk"}> : () -> ()
    %cst_85 = arith.constant dense<0.000000e+00> : vector<4x8x8xf32>
    %179 = tpu.matmul %177, %178, %cst_85 {dimension_numbers = #tpu.dot_dimension_numbers<[2], [2], [1], [1], [0, 0, 0, 1, 1, 1], [0], [0]>} : vector<4x8x8xbf16>, vector<4x8x8xbf16>, vector<4x8x8xf32> -> vector<4x8x8xf32>
    "tpu.trace_stop"() : () -> ()
    %180 = vector.shape_cast %5 : vector<1x8xf32> to vector<1x1x8xf32>
    %181 = vector.broadcast %180 : vector<1x1x8xf32> to vector<4x8x8xf32>
    %182 = arith.addf %179, %181 : vector<4x8x8xf32>
    %cst_86 = arith.constant dense<0xFF800000> : vector<4x8xf32>
    %183 = vector.multi_reduction <maximumf>, %182, %cst_86 [2] : vector<4x8x8xf32> to vector<4x8xf32>
    %184 = vector.shape_cast %183 : vector<4x8xf32> to vector<4x8x1xf32>
    %185 = vector.broadcast %184 : vector<4x8x1xf32> to vector<4x8x8xf32>
    %186 = arith.subf %182, %185 : vector<4x8x8xf32>
    %187 = math.exp %186 : vector<4x8x8xf32>
    %cst_87 = arith.constant dense<0.000000e+00> : vector<4x8xf32>
    %188 = vector.multi_reduction <add>, %187, %cst_87 [2] : vector<4x8x8xf32> to vector<4x8xf32>
    %189 = vector.shape_cast %188 : vector<4x8xf32> to vector<4x8x1xf32>
    %190 = tpu.reciprocal %189 {approx = true} : vector<4x8x1xf32> -> vector<4x8x1xf32>
    %191 = vector.broadcast %190 : vector<4x8x1xf32> to vector<4x8x8xf32>
    %192 = arith.mulf %187, %191 : vector<4x8x8xf32>
    %193 = arith.truncf %192 : vector<4x8x8xf32> to vector<4x8x8xbf16>
    %194 = arith.truncf %176 : vector<4x8x8xf32> to vector<4x8x8xbf16>
    "tpu.trace_start"() <{level = 10 : i32, message = "hqk,hkd->hqd"}> : () -> ()
    %cst_88 = arith.constant dense<0.000000e+00> : vector<4x8x8xf32>
    %195 = tpu.matmul %193, %194, %cst_88 {dimension_numbers = #tpu.dot_dimension_numbers<[2], [1], [1], [2], [0, 0, 0, 1, 1, 2], [0], [0]>} : vector<4x8x8xbf16>, vector<4x8x8xbf16>, vector<4x8x8xf32> -> vector<4x8x8xf32>
    "tpu.trace_stop"() : () -> ()
    %196 = arith.truncf %195 : vector<4x8x8xf32> to vector<4x8x8xbf16>
    %c1_89 = arith.constant 1 : index
    %c0_90 = arith.constant 0 : index
    %c0_91 = arith.constant 0 : index
    %c0_92 = arith.constant 0 : index
    %197 = vector.load %arg7[%c1_89, %c0_90, %c0_91, %c0_92] : memref<2x4x8x32xbf16, #tpu.memory_space<vmem>>, vector<1x4x8x32xbf16>
    %198 = vector.shape_cast %197 : vector<1x4x8x32xbf16> to vector<4x8x32xbf16>
    "tpu.trace_start"() <{level = 10 : i32, message = "hqd,hdc->hqc"}> : () -> ()
    %cst_93 = arith.constant dense<0.000000e+00> : vector<4x8x32xf32>
    %199 = tpu.matmul %196, %198, %cst_93 {dimension_numbers = #tpu.dot_dimension_numbers<[2], [1], [1], [2], [0, 0, 0, 1, 1, 2], [0], [0]>} : vector<4x8x8xbf16>, vector<4x8x32xbf16>, vector<4x8x32xf32> -> vector<4x8x32xf32>
    "tpu.trace_stop"() : () -> ()
    %cst_94 = arith.constant dense<0.000000e+00> : vector<8x32xf32>
    %200 = vector.multi_reduction <add>, %199, %cst_94 [0] : vector<4x8x32xf32> to vector<8x32xf32>
    %c1_95 = arith.constant 1 : index
    %c0_96 = arith.constant 0 : index
    %c0_97 = arith.constant 0 : index
    %201 = vector.load %arg8[%c1_95, %c0_96, %c0_97] : memref<2x1x32xf32, #tpu.memory_space<vmem>>, vector<1x1x32xf32>
    %202 = vector.shape_cast %201 : vector<1x1x32xf32> to vector<1x32xf32>
    %203 = vector.broadcast %202 : vector<1x32xf32> to vector<8x32xf32>
    %204 = arith.addf %200, %203 : vector<8x32xf32>
    %205 = arith.addf %204, %162 : vector<8x32xf32>
    %c1_98 = arith.constant 1 : index
    %c0_99 = arith.constant 0 : index
    %c0_100 = arith.constant 0 : index
    %206 = vector.load %arg9[%c1_98, %c0_99, %c0_100] : memref<2x1x32xf32, #tpu.memory_space<vmem>>, vector<1x1x32xf32>
    %207 = vector.shape_cast %206 : vector<1x1x32xf32> to vector<1x32xf32>
    %c1_101 = arith.constant 1 : index
    %c0_102 = arith.constant 0 : index
    %c0_103 = arith.constant 0 : index
    %208 = vector.load %arg10[%c1_101, %c0_102, %c0_103] : memref<2x1x32xf32, #tpu.memory_space<vmem>>, vector<1x1x32xf32>
    %209 = vector.shape_cast %208 : vector<1x1x32xf32> to vector<1x32xf32>
    %cst_104 = arith.constant dense<0.000000e+00> : vector<8xf32>
    %210 = vector.multi_reduction <add>, %205, %cst_104 [1] : vector<8x32xf32> to vector<8xf32>
    %211 = vector.shape_cast %210 : vector<8xf32> to vector<8x1xf32>
    %cst_105 = arith.constant 3.200000e+01 : f32
    %212 = vector.broadcast %cst_105 : f32 to vector<8x1xf32>
    %213 = arith.divf %211, %212 : vector<8x1xf32>
    %214 = vector.broadcast %213 : vector<8x1xf32> to vector<8x32xf32>
    %215 = arith.subf %205, %214 : vector<8x32xf32>
    %216 = vector.broadcast %213 : vector<8x1xf32> to vector<8x32xf32>
    %217 = arith.subf %205, %216 : vector<8x32xf32>
    %218 = arith.mulf %215, %217 : vector<8x32xf32>
    %cst_106 = arith.constant dense<0.000000e+00> : vector<8xf32>
    %219 = vector.multi_reduction <add>, %218, %cst_106 [1] : vector<8x32xf32> to vector<8xf32>
    %220 = vector.shape_cast %219 : vector<8xf32> to vector<8x1xf32>
    %cst_107 = arith.constant 3.200000e+01 : f32
    %221 = vector.broadcast %cst_107 : f32 to vector<8x1xf32>
    %222 = arith.divf %220, %221 : vector<8x1xf32>
    %223 = vector.broadcast %213 : vector<8x1xf32> to vector<8x32xf32>
    %224 = arith.subf %205, %223 : vector<8x32xf32>
    %cst_108 = arith.constant 9.99999996E-13 : f32
    %225 = vector.broadcast %cst_108 : f32 to vector<8x1xf32>
    %226 = arith.addf %222, %225 : vector<8x1xf32>
    %227 = math.rsqrt %226 : vector<8x1xf32>
    %228 = vector.broadcast %227 : vector<8x1xf32> to vector<8x32xf32>
    %229 = arith.mulf %224, %228 : vector<8x32xf32>
    %230 = vector.broadcast %207 : vector<1x32xf32> to vector<8x32xf32>
    %231 = arith.mulf %229, %230 : vector<8x32xf32>
    %232 = vector.broadcast %209 : vector<1x32xf32> to vector<8x32xf32>
    %233 = arith.addf %231, %232 : vector<8x32xf32>
    %234 = arith.truncf %233 : vector<8x32xf32> to vector<8x32xbf16>
    %c1_109 = arith.constant 1 : index
    %c0_110 = arith.constant 0 : index
    %c0_111 = arith.constant 0 : index
    %235 = vector.load %arg11[%c1_109, %c0_110, %c0_111] : memref<2x32x64xbf16, #tpu.memory_space<vmem>>, vector<1x32x64xbf16>
    %236 = vector.shape_cast %235 : vector<1x32x64xbf16> to vector<32x64xbf16>
    %cst_112 = arith.constant dense<0.000000e+00> : vector<8x64xf32>
    %237 = tpu.matmul %234, %236, %cst_112 {dimension_numbers = #tpu.dot_dimension_numbers<[1], [0], [0], [1], [0, 0, 1, 1], [], []>} : vector<8x32xbf16>, vector<32x64xbf16>, vector<8x64xf32> -> vector<8x64xf32>
    %c1_113 = arith.constant 1 : index
    %c0_114 = arith.constant 0 : index
    %c0_115 = arith.constant 0 : index
    %238 = vector.load %arg12[%c1_113, %c0_114, %c0_115] : memref<2x1x64xf32, #tpu.memory_space<vmem>>, vector<1x1x64xf32>
    %239 = vector.shape_cast %238 : vector<1x1x64xf32> to vector<1x64xf32>
    %240 = vector.broadcast %239 : vector<1x64xf32> to vector<8x64xf32>
    %241 = arith.addf %237, %240 : vector<8x64xf32>
    %cst_116 = arith.constant 5.000000e-01 : f32
    %242 = vector.broadcast %cst_116 : f32 to vector<8x64xf32>
    %243 = arith.mulf %242, %241 : vector<8x64xf32>
    %cst_117 = arith.constant 4.471500e-02 : f32
    %244 = vector.broadcast %cst_117 : f32 to vector<8x64xf32>
    %245 = arith.mulf %244, %241 : vector<8x64xf32>
    %246 = arith.mulf %245, %241 : vector<8x64xf32>
    %247 = arith.mulf %246, %241 : vector<8x64xf32>
    %248 = arith.addf %241, %247 : vector<8x64xf32>
    %cst_118 = arith.constant 0.797884583 : f32
    %249 = vector.broadcast %cst_118 : f32 to vector<8x64xf32>
    %250 = arith.mulf %249, %248 : vector<8x64xf32>
    %251 = math.tanh %250 : vector<8x64xf32>
    %cst_119 = arith.constant 1.000000e+00 : f32
    %252 = vector.broadcast %cst_119 : f32 to vector<8x64xf32>
    %253 = arith.addf %252, %251 : vector<8x64xf32>
    %254 = arith.mulf %243, %253 : vector<8x64xf32>
    %255 = arith.truncf %254 : vector<8x64xf32> to vector<8x64xbf16>
    %c1_120 = arith.constant 1 : index
    %c0_121 = arith.constant 0 : index
    %c0_122 = arith.constant 0 : index
    %256 = vector.load %arg13[%c1_120, %c0_121, %c0_122] : memref<2x64x32xbf16, #tpu.memory_space<vmem>>, vector<1x64x32xbf16>
    %257 = vector.shape_cast %256 : vector<1x64x32xbf16> to vector<64x32xbf16>
    %cst_123 = arith.constant dense<0.000000e+00> : vector<8x32xf32>
    %258 = tpu.matmul %255, %257, %cst_123 {dimension_numbers = #tpu.dot_dimension_numbers<[1], [0], [0], [1], [0, 0, 1, 1], [], []>} : vector<8x64xbf16>, vector<64x32xbf16>, vector<8x32xf32> -> vector<8x32xf32>
    %c1_124 = arith.constant 1 : index
    %c0_125 = arith.constant 0 : index
    %c0_126 = arith.constant 0 : index
    %259 = vector.load %arg14[%c1_124, %c0_125, %c0_126] : memref<2x1x32xf32, #tpu.memory_space<vmem>>, vector<1x1x32xf32>
    %260 = vector.shape_cast %259 : vector<1x1x32xf32> to vector<1x32xf32>
    %261 = vector.broadcast %260 : vector<1x32xf32> to vector<8x32xf32>
    %262 = arith.addf %258, %261 : vector<8x32xf32>
    %263 = arith.addf %262, %233 : vector<8x32xf32>
    %c1_127 = arith.constant 1 : index
    %c0_128 = arith.constant 0 : index
    %c0_129 = arith.constant 0 : index
    %264 = vector.load %arg15[%c1_127, %c0_128, %c0_129] : memref<2x1x32xf32, #tpu.memory_space<vmem>>, vector<1x1x32xf32>
    %265 = vector.shape_cast %264 : vector<1x1x32xf32> to vector<1x32xf32>
    %c1_130 = arith.constant 1 : index
    %c0_131 = arith.constant 0 : index
    %c0_132 = arith.constant 0 : index
    %266 = vector.load %arg16[%c1_130, %c0_131, %c0_132] : memref<2x1x32xf32, #tpu.memory_space<vmem>>, vector<1x1x32xf32>
    %267 = vector.shape_cast %266 : vector<1x1x32xf32> to vector<1x32xf32>
    %cst_133 = arith.constant dense<0.000000e+00> : vector<8xf32>
    %268 = vector.multi_reduction <add>, %263, %cst_133 [1] : vector<8x32xf32> to vector<8xf32>
    %269 = vector.shape_cast %268 : vector<8xf32> to vector<8x1xf32>
    %cst_134 = arith.constant 3.200000e+01 : f32
    %270 = vector.broadcast %cst_134 : f32 to vector<8x1xf32>
    %271 = arith.divf %269, %270 : vector<8x1xf32>
    %272 = vector.broadcast %271 : vector<8x1xf32> to vector<8x32xf32>
    %273 = arith.subf %263, %272 : vector<8x32xf32>
    %274 = vector.broadcast %271 : vector<8x1xf32> to vector<8x32xf32>
    %275 = arith.subf %263, %274 : vector<8x32xf32>
    %276 = arith.mulf %273, %275 : vector<8x32xf32>
    %cst_135 = arith.constant dense<0.000000e+00> : vector<8xf32>
    %277 = vector.multi_reduction <add>, %276, %cst_135 [1] : vector<8x32xf32> to vector<8xf32>
    %278 = vector.shape_cast %277 : vector<8xf32> to vector<8x1xf32>
    %cst_136 = arith.constant 3.200000e+01 : f32
    %279 = vector.broadcast %cst_136 : f32 to vector<8x1xf32>
    %280 = arith.divf %278, %279 : vector<8x1xf32>
    %281 = vector.broadcast %271 : vector<8x1xf32> to vector<8x32xf32>
    %282 = arith.subf %263, %281 : vector<8x32xf32>
    %cst_137 = arith.constant 9.99999996E-13 : f32
    %283 = vector.broadcast %cst_137 : f32 to vector<8x1xf32>
    %284 = arith.addf %280, %283 : vector<8x1xf32>
    %285 = math.rsqrt %284 : vector<8x1xf32>
    %286 = vector.broadcast %285 : vector<8x1xf32> to vector<8x32xf32>
    %287 = arith.mulf %282, %286 : vector<8x32xf32>
    %288 = vector.broadcast %265 : vector<1x32xf32> to vector<8x32xf32>
    %289 = arith.mulf %287, %288 : vector<8x32xf32>
    %290 = vector.broadcast %267 : vector<1x32xf32> to vector<8x32xf32>
    %291 = arith.addf %289, %290 : vector<8x32xf32>
    %c0_138 = arith.constant 0 : index
    %c0_139 = arith.constant 0 : index
    %c0_140 = arith.constant 0 : index
    %292 = vector.load %arg17[%c0_138, %c0_139, %c0_140] : memref<1x8x32xf32, #tpu.memory_space<vmem>>, vector<1x8x32xf32>
    %293 = vector.shape_cast %292 : vector<1x8x32xf32> to vector<8x32xf32>
    %294 = vector.shape_cast %291 : vector<8x32xf32> to vector<1x8x32xf32>
    tpu.vector_store %arg17[%c0_138, %c0_139, %c0_140], %294 {strides = array<i32>} : memref<1x8x32xf32, #tpu.memory_space<vmem>>, vector<1x8x32xf32>,
    return
  }
  func.func @transform_0(%arg0: i32) -> (i32, i32, i32) {
    %c0_i32 = arith.constant 0 : i32
    %c0_i32_0 = arith.constant 0 : i32
    %c0_i32_1 = arith.constant 0 : i32
    return %arg0, %c0_i32, %c0_i32_0 : i32, i32, i32
  }
  func.func @transform_1(%arg0: i32) -> (i32, i32, i32) {
    %c0_i32 = arith.constant 0 : i32
    %c0_i32_0 = arith.constant 0 : i32
    %c0_i32_1 = arith.constant 0 : i32
    return %arg0, %c0_i32, %c0_i32_0 : i32, i32, i32
  }
  func.func @transform_2(%arg0: i32) -> (i32, i32) {
    %c0_i32 = arith.constant 0 : i32
    %c0_i32_0 = arith.constant 0 : i32
    %c0_i32_1 = arith.constant 0 : i32
    return %c0_i32, %c0_i32_0 : i32, i32
  }
  func.func @transform_3(%arg0: i32) -> (i32, i32) {
    %c0_i32 = arith.constant 0 : i32
    %c0_i32_0 = arith.constant 0 : i32
    %c0_i32_1 = arith.constant 0 : i32
    return %c0_i32, %c0_i32_0 : i32, i32
  }
  func.func @transform_4(%arg0: i32) -> (i32, i32, i32, i32) {
    %c0_i32 = arith.constant 0 : i32
    %c0_i32_0 = arith.constant 0 : i32
    %c0_i32_1 = arith.constant 0 : i32
    %c0_i32_2 = arith.constant 0 : i32
    %c0_i32_3 = arith.constant 0 : i32
    return %c0_i32, %c0_i32_0, %c0_i32_1, %c0_i32_2 : i32, i32, i32, i32
  }
  func.func @transform_5(%arg0: i32) -> (i32, i32, i32, i32) {
    %c0_i32 = arith.constant 0 : i32
    %c0_i32_0 = arith.constant 0 : i32
    %c0_i32_1 = arith.constant 0 : i32
    %c0_i32_2 = arith.constant 0 : i32
    %c0_i32_3 = arith.constant 0 : i32
    return %c0_i32, %c0_i32_0, %c0_i32_1, %c0_i32_2 : i32, i32, i32, i32
  }
  func.func @transform_6(%arg0: i32) -> (i32, i32, i32, i32) {
    %c0_i32 = arith.constant 0 : i32
    %c0_i32_0 = arith.constant 0 : i32
    %c0_i32_1 = arith.constant 0 : i32
    %c0_i32_2 = arith.constant 0 : i32
    %c0_i32_3 = arith.constant 0 : i32
    return %c0_i32, %c0_i32_0, %c0_i32_1, %c0_i32_2 : i32, i32, i32, i32
  }
  func.func @transform_7(%arg0: i32) -> (i32, i32, i32) {
    %c0_i32 = arith.constant 0 : i32
    %c0_i32_0 = arith.constant 0 : i32
    %c0_i32_1 = arith.constant 0 : i32
    %c0_i32_2 = arith.constant 0 : i32
    return %c0_i32, %c0_i32_0, %c0_i32_1 : i32, i32, i32
  }
  func.func @transform_8(%arg0: i32) -> (i32, i32, i32) {
    %c0_i32 = arith.constant 0 : i32
    %c0_i32_0 = arith.constant 0 : i32
    %c0_i32_1 = arith.constant 0 : i32
    %c0_i32_2 = arith.constant 0 : i32
    return %c0_i32, %c0_i32_0, %c0_i32_1 : i32, i32, i32
  }
  func.func @transform_9(%arg0: i32) -> (i32, i32, i32) {
    %c0_i32 = arith.constant 0 : i32
    %c0_i32_0 = arith.constant 0 : i32
    %c0_i32_1 = arith.constant 0 : i32
    %c0_i32_2 = arith.constant 0 : i32
    return %c0_i32, %c0_i32_0, %c0_i32_1 : i32, i32, i32
  }
  func.func @transform_10(%arg0: i32) -> (i32, i32, i32) {
    %c0_i32 = arith.constant 0 : i32
    %c0_i32_0 = arith.constant 0 : i32
    %c0_i32_1 = arith.constant 0 : i32
    %c0_i32_2 = arith.constant 0 : i32
    return %c0_i32, %c0_i32_0, %c0_i32_1 : i32, i32, i32
  }
  func.func @transform_11(%arg0: i32) -> (i32, i32, i32) {
    %c0_i32 = arith.constant 0 : i32
    %c0_i32_0 = arith.constant 0 : i32
    %c0_i32_1 = arith.constant 0 : i32
    %c0_i32_2 = arith.constant 0 : i32
    return %c0_i32, %c0_i32_0, %c0_i32_1 : i32, i32, i32
  }
  func.func @transform_12(%arg0: i32) -> (i32, i32, i32) {
    %c0_i32 = arith.constant 0 : i32
    %c0_i32_0 = arith.constant 0 : i32
    %c0_i32_1 = arith.constant 0 : i32
    %c0_i32_2 = arith.constant 0 : i32
    return %c0_i32, %c0_i32_0, %c0_i32_1 : i32, i32, i32
  }
  func.func @transform_13(%arg0: i32) -> (i32, i32, i32) {
    %c0_i32 = arith.constant 0 : i32
    %c0_i32_0 = arith.constant 0 : i32
    %c0_i32_1 = arith.constant 0 : i32
    %c0_i32_2 = arith.constant 0 : i32
    return %c0_i32, %c0_i32_0, %c0_i32_1 : i32, i32, i32
  }
  func.func @transform_14(%arg0: i32) -> (i32, i32, i32) {
    %c0_i32 = arith.constant 0 : i32
    %c0_i32_0 = arith.constant 0 : i32
    %c0_i32_1 = arith.constant 0 : i32
    %c0_i32_2 = arith.constant 0 : i32
    return %c0_i32, %c0_i32_0, %c0_i32_1 : i32, i32, i32
  }
  func.func @transform_15(%arg0: i32) -> (i32, i32, i32) {
    %c0_i32 = arith.constant 0 : i32
    %c0_i32_0 = arith.constant 0 : i32
    %c0_i32_1 = arith.constant 0 : i32
    %c0_i32_2 = arith.constant 0 : i32
    return %c0_i32, %c0_i32_0, %c0_i32_1 : i32, i32, i32
  }
  func.func @transform_16(%arg0: i32) -> (i32, i32, i32) {
    %c0_i32 = arith.constant 0 : i32
    %c0_i32_0 = arith.constant 0 : i32
    %c0_i32_1 = arith.constant 0 : i32
    return %arg0, %c0_i32, %c0_i32_0 : i32, i32, i32
  }
}

</mosaic_0001>

<llo_original>
// kernel: bert_encoder_forward.1
$region0: #{bert_encoder_forward.1}
  #allocation0 [shape = 'u32[]', space=smem, size = 0x4, offset = 0x4, fixed_abs, tag = 'smem constant byte address 0x4 - core index']
  #allocation1 [shape = 'u32[144,128]{1,0:T(1,128)}', space=vmem, size = 0x12000, scoped, tag = 'internal scratch']
  %s0 = inlined_call_operand.vmem [shape: f32[2,8,32], index: 0, kind: input, shape index: {}]
  %s1 = inlined_call_operand.vmem [shape: f32[2,1,8], index: 1, kind: input, shape index: {}]
  %s2 = inlined_call_operand.vmem [shape: f32[1,32], index: 2, kind: input, shape index: {}]
  %s3 = inlined_call_operand.vmem [shape: f32[1,32], index: 3, kind: input, shape index: {}]
  %s4 = inlined_call_operand.vmem [shape: bf16[2,12,32,8], index: 4, kind: input, shape index: {}]
  %s5 = inlined_call_operand.vmem [shape: f32[2,12,1,8], index: 5, kind: input, shape index: {}]
  %s6 = inlined_call_operand.vmem [shape: bf16[2,4,8,32], index: 6, kind: input, shape index: {}]
  %s7 = inlined_call_operand.vmem [shape: f32[2,1,32], index: 7, kind: input, shape index: {}]
  %s8 = inlined_call_operand.vmem [shape: f32[2,1,32], index: 8, kind: input, shape index: {}]
  %s9 = inlined_call_operand.vmem [shape: f32[2,1,32], index: 9, kind: input, shape index: {}]
  %s10 = inlined_call_operand.vmem [shape: bf16[2,32,64], index: 10, kind: input, shape index: {}]
  %s11 = inlined_call_operand.vmem [shape: f32[2,1,64], index: 11, kind: input, shape index: {}]
  %s12 = inlined_call_operand.vmem [shape: bf16[2,64,32], index: 12, kind: input, shape index: {}]
  %s13 = inlined_call_operand.vmem [shape: f32[2,1,32], index: 13, kind: input, shape index: {}]
  %s14 = inlined_call_operand.vmem [shape: f32[2,1,32], index: 14, kind: input, shape index: {}]
  %s15 = inlined_call_operand.vmem [shape: f32[2,1,32], index: 15, kind: input, shape index: {}]
  %s16 = inlined_call_operand.hbm [shape: f32[2,8,32], index: 16, kind: output, shape index: {}]
  %s17 = sld [smem:[#allocation0]]
  $region97: #{bert_encoder_forward.1} parent=0
    _
  %s19 = ssub.s32 1, %s17
  %s20 = scalar_select 0, %s19, %s17
  $region1: #{bert_encoder_forward.1} parent=0
    #allocation2 [shape = 'u8[8192]{0}', space=vmem, size = 0x2000, scoped, tag = 'output window, operand 0']
    #allocation3 [shape = 's32[2]{0}', space=sflag, size = 0x8, scoped, tag = 'scoped memory for bert_encoder_forward.1']
    %21 = vsyncpa [#allocation3], 0
    %s22 = scalar_lea.sflag [#allocation3], 1
    %23 = vsyncpa %s22, 0
    loop: start=0, step=1, limit=4
    $region2: #{bert_encoder_forward.1} parent=1 // loop_pre_header
      _
    $region3: #{bert_encoder_forward.1} parent=1 // loop_header
      %s25 = sphi 0, %s29
      %p26 = scmp.ge.s32.totalorder %s25, 4
      %s35 = sphi 0, %s37
      %s38 = sphi 0, %s35
      %s39 = sphi 0, %s38
      %s55 = sphi 0, %s39
      %s61 = sphi 0, %s63
      %s64 = sphi 0, %s61
      %s65 = sphi 0, %s64
      %s81 = sphi 0, %s65
      %s85 = sphi 0, %s85
      %s87 = sphi 0, %s85
      %s88 = sphi 0, %s87
      %s102 = sphi 0, %s88
      %s106 = sphi 0, %s106
      %s108 = sphi 0, %s106
      %s109 = sphi 0, %s108
      %s123 = sphi 0, %s109
      %s127 = sphi 0, %s127
      %s129 = sphi 0, %s127
      %s130 = sphi 0, %s129
      %s144 = sphi 0, %s130
      %s148 = sphi 0, %s148
      %s150 = sphi 0, %s148
      %s151 = sphi 0, %s150
      %s165 = sphi 0, %s151
      %s169 = sphi 0, %s169
      %s171 = sphi 0, %s169
      %s172 = sphi 0, %s171
      %s186 = sphi 0, %s172
      %s190 = sphi 0, %s190
      %s192 = sphi 0, %s190
      %s193 = sphi 0, %s192
      %s207 = sphi 0, %s193
      %s211 = sphi 0, %s211
      %s213 = sphi 0, %s211
      %s214 = sphi 0, %s213
      %s228 = sphi 0, %s214
      %s232 = sphi 0, %s232
      %s234 = sphi 0, %s232
      %s235 = sphi 0, %s234
      %s249 = sphi 0, %s235
      %s253 = sphi 0, %s253
      %s255 = sphi 0, %s253
      %s256 = sphi 0, %s255
      %s270 = sphi 0, %s256
      %s274 = sphi 0, %s274
      %s276 = sphi 0, %s274
      %s277 = sphi 0, %s276
      %s291 = sphi 0, %s277
      %s295 = sphi 0, %s295
      %s297 = sphi 0, %s295
      %s298 = sphi 0, %s297
      %s312 = sphi 0, %s298
      %s316 = sphi 0, %s316
      %s318 = sphi 0, %s316
      %s319 = sphi 0, %s318
      %s333 = sphi 0, %s319
      %s337 = sphi 0, %s337
      %s339 = sphi 0, %s337
      %s340 = sphi 0, %s339
      %s354 = sphi 0, %s340
      %s358 = sphi 0, %s358
      %s360 = sphi 0, %s358
      %s361 = sphi 0, %s360
      %s375 = sphi 0, %s361
      %s381 = sphi 0, %s383
      %s384 = sphi 0, %s381
      %s385 = sphi 0, %s384
      %s401 = sphi 0, %s385
    $region4: #{bert_encoder_forward.1} parent=1 // loop_header_branch
      %28 = sbr.rel (%p26) target = $region8
    $region5: #{bert_encoder_forward.1} parent=1 // loop_body
      %s30 = ssub.s32 %s25, 1
      %s31 = ssub.s32 %s25, 2
      %s32 = sadd.s32 %s25, 1
      %s33 = ssub.s32 %s25, %s32
      %p34 = scmp.eq.s32.totalorder %s33, 0
      %s36 = sadd.s32 %s35, 1
      %s37 = scalar_select %p34, %s35, %s36
      %p40 = pneg %p34
      %p41 = scmp.eq.s32.totalorder %s25, 1
      %p42 = por %p40, %p41
      %p43 = scmp.ne.s32.totalorder %s35, %s38
      %p44 = scmp.eq.s32.totalorder %s25, 0
      %p45 = por %p43, %p44
      %p46 = scmp.ne.s32.totalorder %s35, %s38
      %p47 = scmp.eq.s32.totalorder %s30, 1
      %p48 = por %p46, %p47
      %p49 = scmp.ne.s32.totalorder %s38, %s39
      %p50 = scmp.eq.s32.totalorder %s30, 0
      %p51 = por %p49, %p50
      %p52 = scmp.ne.s32.totalorder %s38, %s39
      %p53 = scmp.eq.s32.totalorder %s31, 1
      %p54 = por %p52, %p53
      %p56 = scmp.ne.s32.totalorder %s39, %s55
      %p57 = scmp.eq.s32.totalorder %s31, 0
      %p58 = por %p56, %p57
      %s59 = ssub.s32 %s25, %s32
      %p60 = scmp.eq.s32.totalorder %s59, 0
      %s62 = sadd.s32 %s61, 1
      %s63 = scalar_select %p60, %s61, %s62
      %p66 = pneg %p60
      %p67 = scmp.eq.s32.totalorder %s25, 1
      %p68 = por %p66, %p67
      %p69 = scmp.ne.s32.totalorder %s61, %s64
      %p70 = scmp.eq.s32.totalorder %s25, 0
      %p71 = por %p69, %p70
      %p72 = scmp.ne.s32.totalorder %s61, %s64
      %p73 = scmp.eq.s32.totalorder %s30, 1
      %p74 = por %p72, %p73
      %p75 = scmp.ne.s32.totalorder %s64, %s65
      %p76 = scmp.eq.s32.totalorder %s30, 0
      %p77 = por %p75, %p76
      %p78 = scmp.ne.s32.totalorder %s64, %s65
      %p79 = scmp.eq.s32.totalorder %s31, 1
      %p80 = por %p78, %p79
      %p82 = scmp.ne.s32.totalorder %s65, %s81
      %p83 = scmp.eq.s32.totalorder %s31, 0
      %p84 = por %p82, %p83
      %s86 = sadd.s32 %s85, 1
      %p89 = scmp.eq.s32.totalorder %s25, 1
      %p90 = scmp.ne.s32.totalorder %s85, %s87
      %p91 = scmp.eq.s32.totalorder %s25, 0
      %p92 = por %p90, %p91
      %p93 = scmp.ne.s32.totalorder %s85, %s87
      %p94 = scmp.eq.s32.totalorder %s30, 1
      %p95 = por %p93, %p94
      %p96 = scmp.ne.s32.totalorder %s87, %s88
      %p97 = scmp.eq.s32.totalorder %s30, 0
      %p98 = por %p96, %p97
      %p99 = scmp.ne.s32.totalorder %s87, %s88
      %p100 = scmp.eq.s32.totalorder %s31, 1
      %p101 = por %p99, %p100
      %p103 = scmp.ne.s32.totalorder %s88, %s102
      %p104 = scmp.eq.s32.totalorder %s31, 0
      %p105 = por %p103, %p104
      %s107 = sadd.s32 %s106, 1
      %p110 = scmp.eq.s32.totalorder %s25, 1
      %p111 = scmp.ne.s32.totalorder %s106, %s108
      %p112 = scmp.eq.s32.totalorder %s25, 0
      %p113 = por %p111, %p112
      %p114 = scmp.ne.s32.totalorder %s106, %s108
      %p115 = scmp.eq.s32.totalorder %s30, 1
      %p116 = por %p114, %p115
      %p117 = scmp.ne.s32.totalorder %s108, %s109
      %p118 = scmp.eq.s32.totalorder %s30, 0
      %p119 = por %p117, %p118
      %p120 = scmp.ne.s32.totalorder %s108, %s109
      %p121 = scmp.eq.s32.totalorder %s31, 1
      %p122 = por %p120, %p121
      %p124 = scmp.ne.s32.totalorder %s109, %s123
      %p125 = scmp.eq.s32.totalorder %s31, 0
      %p126 = por %p124, %p125
      %s128 = sadd.s32 %s127, 1
      %p131 = scmp.eq.s32.totalorder %s25, 1
      %p132 = scmp.ne.s32.totalorder %s127, %s129
      %p133 = scmp.eq.s32.totalorder %s25, 0
      %p134 = por %p132, %p133
      %p135 = scmp.ne.s32.totalorder %s127, %s129
      %p136 = scmp.eq.s32.totalorder %s30, 1
      %p137 = por %p135, %p136
      %p138 = scmp.ne.s32.totalorder %s129, %s130
      %p139 = scmp.eq.s32.totalorder %s30, 0
      %p140 = por %p138, %p139
      %p141 = scmp.ne.s32.totalorder %s129, %s130
      %p142 = scmp.eq.s32.totalorder %s31, 1
      %p143 = por %p141, %p142
      %p145 = scmp.ne.s32.totalorder %s130, %s144
      %p146 = scmp.eq.s32.totalorder %s31, 0
      %p147 = por %p145, %p146
      %s149 = sadd.s32 %s148, 1
      %p152 = scmp.eq.s32.totalorder %s25, 1
      %p153 = scmp.ne.s32.totalorder %s148, %s150
      %p154 = scmp.eq.s32.totalorder %s25, 0
      %p155 = por %p153, %p154
      %p156 = scmp.ne.s32.totalorder %s148, %s150
      %p157 = scmp.eq.s32.totalorder %s30, 1
      %p158 = por %p156, %p157
      %p159 = scmp.ne.s32.totalorder %s150, %s151
      %p160 = scmp.eq.s32.totalorder %s30, 0
      %p161 = por %p159, %p160
      %p162 = scmp.ne.s32.totalorder %s150, %s151
      %p163 = scmp.eq.s32.totalorder %s31, 1
      %p164 = por %p162, %p163
      %p166 = scmp.ne.s32.totalorder %s151, %s165
      %p167 = scmp.eq.s32.totalorder %s31, 0
      %p168 = por %p166, %p167
      %s170 = sadd.s32 %s169, 1
      %p173 = scmp.eq.s32.totalorder %s25, 1
      %p174 = scmp.ne.s32.totalorder %s169, %s171
      %p175 = scmp.eq.s32.totalorder %s25, 0
      %p176 = por %p174, %p175
      %p177 = scmp.ne.s32.totalorder %s169, %s171
      %p178 = scmp.eq.s32.totalorder %s30, 1
      %p179 = por %p177, %p178
      %p180 = scmp.ne.s32.totalorder %s171, %s172
      %p181 = scmp.eq.s32.totalorder %s30, 0
      %p182 = por %p180, %p181
      %p183 = scmp.ne.s32.totalorder %s171, %s172
      %p184 = scmp.eq.s32.totalorder %s31, 1
      %p185 = por %p183, %p184
      %p187 = scmp.ne.s32.totalorder %s172, %s186
      %p188 = scmp.eq.s32.totalorder %s31, 0
      %p189 = por %p187, %p188
      %s191 = sadd.s32 %s190, 1
      %p194 = scmp.eq.s32.totalorder %s25, 1
      %p195 = scmp.ne.s32.totalorder %s190, %s192
      %p196 = scmp.eq.s32.totalorder %s25, 0
      %p197 = por %p195, %p196
      %p198 = scmp.ne.s32.totalorder %s190, %s192
      %p199 = scmp.eq.s32.totalorder %s30, 1
      %p200 = por %p198, %p199
      %p201 = scmp.ne.s32.totalorder %s192, %s193
      %p202 = scmp.eq.s32.totalorder %s30, 0
      %p203 = por %p201, %p202
      %p204 = scmp.ne.s32.totalorder %s192, %s193
      %p205 = scmp.eq.s32.totalorder %s31, 1
      %p206 = por %p204, %p205
      %p208 = scmp.ne.s32.totalorder %s193, %s207
      %p209 = scmp.eq.s32.totalorder %s31, 0
      %p210 = por %p208, %p209
      %s212 = sadd.s32 %s211, 1
      %p215 = scmp.eq.s32.totalorder %s25, 1
      %p216 = scmp.ne.s32.totalorder %s211, %s213
      %p217 = scmp.eq.s32.totalorder %s25, 0
      %p218 = por %p216, %p217
      %p219 = scmp.ne.s32.totalorder %s211, %s213
      %p220 = scmp.eq.s32.totalorder %s30, 1
      %p221 = por %p219, %p220
      %p222 = scmp.ne.s32.totalorder %s213, %s214
      %p223 = scmp.eq.s32.totalorder %s30, 0
      %p224 = por %p222, %p223
      %p225 = scmp.ne.s32.totalorder %s213, %s214
      %p226 = scmp.eq.s32.totalorder %s31, 1
      %p227 = por %p225, %p226
      %p229 = scmp.ne.s32.totalorder %s214, %s228
      %p230 = scmp.eq.s32.totalorder %s31, 0
      %p231 = por %p229, %p230
      %s233 = sadd.s32 %s232, 1
      %p236 = scmp.eq.s32.totalorder %s25, 1
      %p237 = scmp.ne.s32.totalorder %s232, %s234
      %p238 = scmp.eq.s32.totalorder %s25, 0
      %p239 = por %p237, %p238
      %p240 = scmp.ne.s32.totalorder %s232, %s234
      %p241 = scmp.eq.s32.totalorder %s30, 1
      %p242 = por %p240, %p241
      %p243 = scmp.ne.s32.totalorder %s234, %s235
      %p244 = scmp.eq.s32.totalorder %s30, 0
      %p245 = por %p243, %p244
      %p246 = scmp.ne.s32.totalorder %s234, %s235
      %p247 = scmp.eq.s32.totalorder %s31, 1
      %p248 = por %p246, %p247
      %p250 = scmp.ne.s32.totalorder %s235, %s249
      %p251 = scmp.eq.s32.totalorder %s31, 0
      %p252 = por %p250, %p251
      %s254 = sadd.s32 %s253, 1
      %p257 = scmp.eq.s32.totalorder %s25, 1
      %p258 = scmp.ne.s32.totalorder %s253, %s255
      %p259 = scmp.eq.s32.totalorder %s25, 0
      %p260 = por %p258, %p259
      %p261 = scmp.ne.s32.totalorder %s253, %s255
      %p262 = scmp.eq.s32.totalorder %s30, 1
      %p263 = por %p261, %p262
      %p264 = scmp.ne.s32.totalorder %s255, %s256
      %p265 = scmp.eq.s32.totalorder %s30, 0
      %p266 = por %p264, %p265
      %p267 = scmp.ne.s32.totalorder %s255, %s256
      %p268 = scmp.eq.s32.totalorder %s31, 1
      %p269 = por %p267, %p268
      %p271 = scmp.ne.s32.totalorder %s256, %s270
      %p272 = scmp.eq.s32.totalorder %s31, 0
      %p273 = por %p271, %p272
      %s275 = sadd.s32 %s274, 1
      %p278 = scmp.eq.s32.totalorder %s25, 1
      %p279 = scmp.ne.s32.totalorder %s274, %s276
      %p280 = scmp.eq.s32.totalorder %s25, 0
      %p281 = por %p279, %p280
      %p282 = scmp.ne.s32.totalorder %s274, %s276
      %p283 = scmp.eq.s32.totalorder %s30, 1
      %p284 = por %p282, %p283
      %p285 = scmp.ne.s32.totalorder %s276, %s277
      %p286 = scmp.eq.s32.totalorder %s30, 0
      %p287 = por %p285, %p286
      %p288 = scmp.ne.s32.totalorder %s276, %s277
      %p289 = scmp.eq.s32.totalorder %s31, 1
      %p290 = por %p288, %p289
      %p292 = scmp.ne.s32.totalorder %s277, %s291
      %p293 = scmp.eq.s32.totalorder %s31, 0
      %p294 = por %p292, %p293
      %s296 = sadd.s32 %s295, 1
      %p299 = scmp.eq.s32.totalorder %s25, 1
      %p300 = scmp.ne.s32.totalorder %s295, %s297
      %p301 = scmp.eq.s32.totalorder %s25, 0
      %p302 = por %p300, %p301
      %p303 = scmp.ne.s32.totalorder %s295, %s297
      %p304 = scmp.eq.s32.totalorder %s30, 1
      %p305 = por %p303, %p304
      %p306 = scmp.ne.s32.totalorder %s297, %s298
      %p307 = scmp.eq.s32.totalorder %s30, 0
      %p308 = por %p306, %p307
      %p309 = scmp.ne.s32.totalorder %s297, %s298
      %p310 = scmp.eq.s32.totalorder %s31, 1
      %p311 = por %p309, %p310
      %p313 = scmp.ne.s32.totalorder %s298, %s312
      %p314 = scmp.eq.s32.totalorder %s31, 0
      %p315 = por %p313, %p314
      %s317 = sadd.s32 %s316, 1
      %p320 = scmp.eq.s32.totalorder %s25, 1
      %p321 = scmp.ne.s32.totalorder %s316, %s318
      %p322 = scmp.eq.s32.totalorder %s25, 0
      %p323 = por %p321, %p322
      %p324 = scmp.ne.s32.totalorder %s316, %s318
      %p325 = scmp.eq.s32.totalorder %s30, 1
      %p326 = por %p324, %p325
      %p327 = scmp.ne.s32.totalorder %s318, %s319
      %p328 = scmp.eq.s32.totalorder %s30, 0
      %p329 = por %p327, %p328
      %p330 = scmp.ne.s32.totalorder %s318, %s319
      %p331 = scmp.eq.s32.totalorder %s31, 1
      %p332 = por %p330, %p331
      %p334 = scmp.ne.s32.totalorder %s319, %s333
      %p335 = scmp.eq.s32.totalorder %s31, 0
      %p336 = por %p334, %p335
      %s338 = sadd.s32 %s337, 1
      %p341 = scmp.eq.s32.totalorder %s25, 1
      %p342 = scmp.ne.s32.totalorder %s337, %s339
      %p343 = scmp.eq.s32.totalorder %s25, 0
      %p344 = por %p342, %p343
      %p345 = scmp.ne.s32.totalorder %s337, %s339
      %p346 = scmp.eq.s32.totalorder %s30, 1
      %p347 = por %p345, %p346
      %p348 = scmp.ne.s32.totalorder %s339, %s340
      %p349 = scmp.eq.s32.totalorder %s30, 0
      %p350 = por %p348, %p349
      %p351 = scmp.ne.s32.totalorder %s339, %s340
      %p352 = scmp.eq.s32.totalorder %s31, 1
      %p353 = por %p351, %p352
      %p355 = scmp.ne.s32.totalorder %s340, %s354
      %p356 = scmp.eq.s32.totalorder %s31, 0
      %p357 = por %p355, %p356
      %s359 = sadd.s32 %s358, 1
      %p362 = scmp.eq.s32.totalorder %s25, 1
      %p363 = scmp.ne.s32.totalorder %s358, %s360
      %p364 = scmp.eq.s32.totalorder %s25, 0
      %p365 = por %p363, %p364
      %p366 = scmp.ne.s32.totalorder %s358, %s360
      %p367 = scmp.eq.s32.totalorder %s30, 1
      %p368 = por %p366, %p367
      %p369 = scmp.ne.s32.totalorder %s360, %s361
      %p370 = scmp.eq.s32.totalorder %s30, 0
      %p371 = por %p369, %p370
      %p372 = scmp.ne.s32.totalorder %s360, %s361
      %p373 = scmp.eq.s32.totalorder %s31, 1
      %p374 = por %p372, %p373
      %p376 = scmp.ne.s32.totalorder %s361, %s375
      %p377 = scmp.eq.s32.totalorder %s31, 0
      %p378 = por %p376, %p377
      %s379 = ssub.s32 %s25, %s32
      %p380 = scmp.eq.s32.totalorder %s379, 0
      %s382 = sadd.s32 %s381, 1
      %s383 = scalar_select %p380, %s381, %s382
      %p386 = pneg %p380
      %p387 = scmp.eq.s32.totalorder %s25, 1
      %p388 = por %p386, %p387
      %p389 = scmp.ne.s32.totalorder %s381, %s384
      %p390 = scmp.eq.s32.totalorder %s25, 0
      %p391 = por %p389, %p390
      %p392 = scmp.ne.s32.totalorder %s381, %s384
      %p393 = scmp.eq.s32.totalorder %s30, 1
      %p394 = por %p392, %p393
      %p395 = scmp.ne.s32.totalorder %s384, %s385
      %p396 = scmp.eq.s32.totalorder %s30, 0
      %p397 = por %p395, %p396
      %p398 = scmp.ne.s32.totalorder %s384, %s385
      %p399 = scmp.eq.s32.totalorder %s31, 1
      %p400 = por %p398, %p399
      %p402 = scmp.ne.s32.totalorder %s385, %s401
      %p403 = scmp.eq.s32.totalorder %s31, 0
      %p404 = por %p402, %p403
      %p405 = scmp.le.s32.totalorder 1, %s25
      %p406 = scmp.lt.s32.totalorder %s25, 3
      %p407 = pnand %p405, %p406
      %p408 = pneg %p407
      // Predicated region
      $region9: #{bert_encoder_forward.1} parent=5 // pred_check
        _
      $region10: #{bert_encoder_forward.1} parent=5 // pred_check_branch
        %410 = sbr.rel (%p407) target = $region12
      $region11: #{bert_encoder_forward.1} parent=5 // pred_region
        %s411 = ssub.s32 %s25, 1
        // Predicated region
        $region13: #{bert_encoder_forward.1} parent=11 // pred_check
          %p412 = pneg %p98
        $region14: #{bert_encoder_forward.1} parent=11 // pred_check_branch
          %414 = sbr.rel (%p412) target = $region16
        $region15: #{bert_encoder_forward.1} parent=11 // pred_region
          _
        $region16: #{bert_encoder_forward.1} parent=11 // pred_fallthru
          _
        // Predicated region
        $region17: #{bert_encoder_forward.1} parent=11 // pred_check
          %p415 = pneg %p119
        $region18: #{bert_encoder_forward.1} parent=11 // pred_check_branch
          %417 = sbr.rel (%p415) target = $region20
        $region19: #{bert_encoder_forward.1} parent=11 // pred_region
          _
        $region20: #{bert_encoder_forward.1} parent=11 // pred_fallthru
          _
        // Predicated region
        $region21: #{bert_encoder_forward.1} parent=11 // pred_check
          %p418 = pneg %p140
        $region22: #{bert_encoder_forward.1} parent=11 // pred_check_branch
          %420 = sbr.rel (%p418) target = $region24
        $region23: #{bert_encoder_forward.1} parent=11 // pred_region
          _
        $region24: #{bert_encoder_forward.1} parent=11 // pred_fallthru
          _
        // Predicated region
        $region25: #{bert_encoder_forward.1} parent=11 // pred_check
          %p421 = pneg %p161
        $region26: #{bert_encoder_forward.1} parent=11 // pred_check_branch
          %423 = sbr.rel (%p421) target = $region28
        $region27: #{bert_encoder_forward.1} parent=11 // pred_region
          _
        $region28: #{bert_encoder_forward.1} parent=11 // pred_fallthru
          _
        // Predicated region
        $region29: #{bert_encoder_forward.1} parent=11 // pred_check
          %p424 = pneg %p182
        $region30: #{bert_encoder_forward.1} parent=11 // pred_check_branch
          %426 = sbr.rel (%p424) target = $region32
        $region31: #{bert_encoder_forward.1} parent=11 // pred_region
          _
        $region32: #{bert_encoder_forward.1} parent=11 // pred_fallthru
          _
        // Predicated region
        $region33: #{bert_encoder_forward.1} parent=11 // pred_check
          %p427 = pneg %p203
        $region34: #{bert_encoder_forward.1} parent=11 // pred_check_branch
          %429 = sbr.rel (%p427) target = $region36
        $region35: #{bert_encoder_forward.1} parent=11 // pred_region
          _
        $region36: #{bert_encoder_forward.1} parent=11 // pred_fallthru
          _
        // Predicated region
        $region37: #{bert_encoder_forward.1} parent=11 // pred_check
          %p430 = pneg %p224
        $region38: #{bert_encoder_forward.1} parent=11 // pred_check_branch
          %432 = sbr.rel (%p430) target = $region40
        $region39: #{bert_encoder_forward.1} parent=11 // pred_region
          _
        $region40: #{bert_encoder_forward.1} parent=11 // pred_fallthru
          _
        // Predicated region
        $region41: #{bert_encoder_forward.1} parent=11 // pred_check
          %p433 = pneg %p245
        $region42: #{bert_encoder_forward.1} parent=11 // pred_check_branch
          %435 = sbr.rel (%p433) target = $region44
        $region43: #{bert_encoder_forward.1} parent=11 // pred_region
          _
        $region44: #{bert_encoder_forward.1} parent=11 // pred_fallthru
          _
        // Predicated region
        $region45: #{bert_encoder_forward.1} parent=11 // pred_check
          %p436 = pneg %p266
        $region46: #{bert_encoder_forward.1} parent=11 // pred_check_branch
          %438 = sbr.rel (%p436) target = $region48
        $region47: #{bert_encoder_forward.1} parent=11 // pred_region
          _
        $region48: #{bert_encoder_forward.1} parent=11 // pred_fallthru
          _
        // Predicated region
        $region49: #{bert_encoder_forward.1} parent=11 // pred_check
          %p439 = pneg %p287
        $region50: #{bert_encoder_forward.1} parent=11 // pred_check_branch
          %441 = sbr.rel (%p439) target = $region52
        $region51: #{bert_encoder_forward.1} parent=11 // pred_region
          _
        $region52: #{bert_encoder_forward.1} parent=11 // pred_fallthru
          _
        // Predicated region
        $region53: #{bert_encoder_forward.1} parent=11 // pred_check
          %p442 = pneg %p308
        $region54: #{bert_encoder_forward.1} parent=11 // pred_check_branch
          %444 = sbr.rel (%p442) target = $region56
        $region55: #{bert_encoder_forward.1} parent=11 // pred_region
          _
        $region56: #{bert_encoder_forward.1} parent=11 // pred_fallthru
          _
        // Predicated region
        $region57: #{bert_encoder_forward.1} parent=11 // pred_check
          %p445 = pneg %p329
        $region58: #{bert_encoder_forward.1} parent=11 // pred_check_branch
          %447 = sbr.rel (%p445) target = $region60
        $region59: #{bert_encoder_forward.1} parent=11 // pred_region
          _
        $region60: #{bert_encoder_forward.1} parent=11 // pred_fallthru
          _
        // Predicated region
        $region61: #{bert_encoder_forward.1} parent=11 // pred_check
          %p448 = pneg %p350
        $region62: #{bert_encoder_forward.1} parent=11 // pred_check_branch
          %450 = sbr.rel (%p448) target = $region64
        $region63: #{bert_encoder_forward.1} parent=11 // pred_region
          _
        $region64: #{bert_encoder_forward.1} parent=11 // pred_fallthru
          _
        // Predicated region
        $region65: #{bert_encoder_forward.1} parent=11 // pred_check
          %p451 = pneg %p371
        $region66: #{bert_encoder_forward.1} parent=11 // pred_check_branch
          %453 = sbr.rel (%p451) target = $region68
        $region67: #{bert_encoder_forward.1} parent=11 // pred_region
          _
        $region68: #{bert_encoder_forward.1} parent=11 // pred_fallthru
          _
      $region12: #{bert_encoder_forward.1} parent=5 // pred_fallthru
        _
      %p454 = scmp.lt.s32.totalorder %s25, 2
      // Predicated region
      $region69: #{bert_encoder_forward.1} parent=5 // pred_check
        %p455 = pneg %p454
      $region70: #{bert_encoder_forward.1} parent=5 // pred_check_branch
        %457 = sbr.rel (%p455) target = $region72
      $region71: #{bert_encoder_forward.1} parent=5 // pred_region
        // Predicated region
        $region73: #{bert_encoder_forward.1} parent=71 // pred_check
          %p458 = pneg %p45
        $region74: #{bert_encoder_forward.1} parent=71 // pred_check_branch
          %460 = sbr.rel (%p458) target = $region76
        $region75: #{bert_encoder_forward.1} parent=71 // pred_region
          %p461 = scmp.lt.s32.totalorder %s25, 1
          %s462 = scalar_select %p461, %s25, 1
          %s463 = smul.addr %s462, 8
          %s464 = scalar_lea.vmem %s0, %s463
        $region76: #{bert_encoder_forward.1} parent=71 // pred_fallthru
          _
        // Predicated region
        $region77: #{bert_encoder_forward.1} parent=71 // pred_check
          %p465 = pneg %p71
        $region78: #{bert_encoder_forward.1} parent=71 // pred_check_branch
          %467 = sbr.rel (%p465) target = $region80
        $region79: #{bert_encoder_forward.1} parent=71 // pred_region
          %p468 = scmp.lt.s32.totalorder %s25, 1
          %s469 = scalar_select %p468, %s25, 1
          %s470 = scalar_lea.vmem %s1, %s469
        $region80: #{bert_encoder_forward.1} parent=71 // pred_fallthru
          _
      $region72: #{bert_encoder_forward.1} parent=5 // pred_fallthru
        _
      %p471 = scmp.le.s32.totalorder 1, %s25
      %p472 = scmp.lt.s32.totalorder %s25, 3
      %p473 = pnand %p471, %p472
      %p474 = pneg %p473
      // Predicated region
      $region81: #{bert_encoder_forward.1} parent=5 // pred_check
        _
      $region82: #{bert_encoder_forward.1} parent=5 // pred_check_branch
        %476 = sbr.rel (%p473) target = $region84
      $region83: #{bert_encoder_forward.1} parent=5 // pred_region
        %s477 = ssub.s32 %s25, 1
        %p478 = scmp.lt.s32.totalorder %s30, 1
        %s479 = scalar_select %p478, %s30, 1
        %s480 = smul.addr %s479, 8
        %s481 = scalar_lea.vmem %s0, %s480
        %p482 = pneg %p51
        %p483 = pneg %p48
        %p484 = scmp.lt.s32.totalorder %s30, 1
        %s485 = scalar_select %p484, %s30, 1
        %s486 = scalar_lea.vmem %s1, %s485
        %p487 = pneg %p77
        %p488 = pneg %p74
        %p489 = pneg %p98
        %p490 = pneg %p95
        %p491 = pneg %p119
        %p492 = pneg %p116
        %p493 = pneg %p140
        %p494 = pneg %p137
        %p495 = pneg %p161
        %p496 = pneg %p158
        %p497 = pneg %p182
        %p498 = pneg %p179
        %p499 = pneg %p203
        %p500 = pneg %p200
        %p501 = pneg %p224
        %p502 = pneg %p221
        %p503 = pneg %p245
        %p504 = pneg %p242
        %p505 = pneg %p266
        %p506 = pneg %p263
        %p507 = pneg %p287
        %p508 = pneg %p284
        %p509 = pneg %p308
        %p510 = pneg %p305
        %p511 = pneg %p329
        %p512 = pneg %p326
        %p513 = pneg %p350
        %p514 = pneg %p347
        %p515 = pneg %p371
        %p516 = pneg %p368
        %p517 = pneg %p397
        %p518 = pneg %p394
        %s519 = sand.u32 %s384, 1
        %s520 = scalar_lea.sflag [#allocation3], %s519
        %s521 = sand.u32 %s384, 1
        %s522 = smul.addr %s521, 8
        %s523 = scalar_lea.vmem [#allocation2], %s522
        %p524 = scmp.lt.s32.totalorder %s30, 1
        %s525 = scalar_select %p524, %s30, 1
        %s526 = smul.addr %s525, 8
        %s527 = scalar_lea.vmem %s0, %s526
        %p528 = scmp.lt.s32.totalorder %s30, 1
        %s529 = scalar_select %p528, %s30, 1
        %s530 = scalar_lea.vmem %s1, %s529
        %v532 = vld [vmem:[%s530] sm:$0x1]
        %v533 = vsub.f32 1.0, %v532
        %v534 = vmul.f32 %v533, -10000.0
        %v535 = vld [vmem:[%s527] sm:$0xff]
        %v536 = vld [vmem:[%s2] sm:$0x1]
        %v537 = vld [vmem:[%s3] sm:$0x1]
        %vm538 = vcmask 261120
        %v539 = vsel %vm538, %v535, 0.0
        %540 = vadd.xlane.f32.xlu0 %v539
        %v541 = vpop.xlane.xlu0 %540
        %v542 = vrcp.pop 32.0
        %v543 = vmul.f32 %v541, %v542
        %v544 = vsub.f32 %v535, %v543
        %v545 = vmul.f32 %v544, %v544
        %v546 = vsel %vm538, %v545, 0.0
        %547 = vadd.xlane.f32.xlu0 %v546
        %v548 = vpop.xlane.xlu0 %547
        %v549 = vmul.f32 %v548, %v542
        %v550 = vadd.f32 %v549, 1e-12
        %v551 = vrsqrt.pop %v550
        %v552 = vmul.f32 %v544, %v551
        %v554 = vlaneseq
        %v555 = vshrl.u32 %v554, 7
        %v556 = vsub.s32 0, %v555
        %v557 = vrot.slane %v536, %v556
        %v559 = vmul.f32 %v552, %v557
        %v561 = vlaneseq
        %v562 = vshrl.u32 %v561, 7
        %v563 = vsub.s32 0, %v562
        %v564 = vrot.slane %v537, %v563
        %v566 = vadd.f32 %v559, %v564
        %v567 = vpack.c.bf16 %v566, %v566
        %v568 = vld [vmem:[%s4] sm:$0xf]
        %v569 = vld [vmem:[%s4 + $0x4] sm:$0xf]
        %v570 = vld [vmem:[%s4 + $0x8] sm:$0xf]
        %v571 = vld [vmem:[%s4 + $0xc] sm:$0xf]
        %v572 = vld [vmem:[%s4 + $0x10] sm:$0xf]
        %v573 = vld [vmem:[%s4 + $0x14] sm:$0xf]
        %v574 = vld [vmem:[%s4 + $0x18] sm:$0xf]
        %v575 = vld [vmem:[%s4 + $0x1c] sm:$0xf]
        %v576 = vld [vmem:[%s4 + $0x20] sm:$0xf]
        %v577 = vld [vmem:[%s4 + $0x24] sm:$0xf]
        %v578 = vld [vmem:[%s4 + $0x28] sm:$0xf]
        %v579 = vld [vmem:[%s4 + $0x2c] sm:$0xf]
        %v580 = vld [vmem:[%s4 + $0x30] sm:$0xf]
        %v581 = vld [vmem:[%s4 + $0x34] sm:$0xf]
        %v582 = vld [vmem:[%s4 + $0x38] sm:$0xf]
        %v583 = vld [vmem:[%s4 + $0x3c] sm:$0xf]
        %v584 = vld [vmem:[%s4 + $0x40] sm:$0xf]
        %v585 = vld [vmem:[%s4 + $0x44] sm:$0xf]
        %v586 = vld [vmem:[%s4 + $0x48] sm:$0xf]
        %v587 = vld [vmem:[%s4 + $0x4c] sm:$0xf]
        %v588 = vld [vmem:[%s4 + $0x50] sm:$0xf]
        %v589 = vld [vmem:[%s4 + $0x54] sm:$0xf]
        %v590 = vld [vmem:[%s4 + $0x58] sm:$0xf]
        %v591 = vld [vmem:[%s4 + $0x5c] sm:$0xf]
        %v592 = vld [vmem:[%s4 + $0x60] sm:$0xf]
        %v593 = vld [vmem:[%s4 + $0x64] sm:$0xf]
        %v594 = vld [vmem:[%s4 + $0x68] sm:$0xf]
        %v595 = vld [vmem:[%s4 + $0x6c] sm:$0xf]
        %v596 = vld [vmem:[%s4 + $0x70] sm:$0xf]
        %v597 = vld [vmem:[%s4 + $0x74] sm:$0xf]
        %v598 = vld [vmem:[%s4 + $0x78] sm:$0xf]
        %v599 = vld [vmem:[%s4 + $0x7c] sm:$0xf]
        %v600 = vld [vmem:[%s4 + $0x80] sm:$0xf]
        %v601 = vld [vmem:[%s4 + $0x84] sm:$0xf]
        %v602 = vld [vmem:[%s4 + $0x88] sm:$0xf]
        %v603 = vld [vmem:[%s4 + $0x8c] sm:$0xf]
        %v604 = vld [vmem:[%s4 + $0x90] sm:$0xf]
        %v605 = vld [vmem:[%s4 + $0x94] sm:$0xf]
        %v606 = vld [vmem:[%s4 + $0x98] sm:$0xf]
        %v607 = vld [vmem:[%s4 + $0x9c] sm:$0xf]
        %v608 = vld [vmem:[%s4 + $0xa0] sm:$0xf]
        %v609 = vld [vmem:[%s4 + $0xa4] sm:$0xf]
        %v610 = vld [vmem:[%s4 + $0xa8] sm:$0xf]
        %v611 = vld [vmem:[%s4 + $0xac] sm:$0xf]
        %v612 = vld [vmem:[%s4 + $0xb0] sm:$0xf]
        %v613 = vld [vmem:[%s4 + $0xb4] sm:$0xf]
        %v614 = vld [vmem:[%s4 + $0xb8] sm:$0xf]
        %v615 = vld [vmem:[%s4 + $0xbc] sm:$0xf]
        %v616 = vld [vmem:[%s5] sm:$0x1]
        %v617 = vld [vmem:[%s5 + $0x1] sm:$0x1]
        %v618 = vld [vmem:[%s5 + $0x2] sm:$0x1]
        %v619 = vld [vmem:[%s5 + $0x3] sm:$0x1]
        %v620 = vld [vmem:[%s5 + $0x4] sm:$0x1]
        %v621 = vld [vmem:[%s5 + $0x5] sm:$0x1]
        %v622 = vld [vmem:[%s5 + $0x6] sm:$0x1]
        %v623 = vld [vmem:[%s5 + $0x7] sm:$0x1]
        %v624 = vld [vmem:[%s5 + $0x8] sm:$0x1]
        %v625 = vld [vmem:[%s5 + $0x9] sm:$0x1]
        %v626 = vld [vmem:[%s5 + $0xa] sm:$0x1]
        %v627 = vld [vmem:[%s5 + $0xb] sm:$0x1]
        %v640 = vlaneseq
        %v641 = vshrl.u32 %v640, 7
        %v642 = vsub.s32 0, %v641
        %v643 = vrot.slane %v616, %v642
        %v644 = vlaneseq
        %v645 = vshrl.u32 %v644, 7
        %v646 = vsub.s32 0, %v645
        %v647 = vrot.slane %v617, %v646
        %v648 = vlaneseq
        %v649 = vshrl.u32 %v648, 7
        %v650 = vsub.s32 0, %v649
        %v651 = vrot.slane %v618, %v650
        %v652 = vlaneseq
        %v653 = vshrl.u32 %v652, 7
        %v654 = vsub.s32 0, %v653
        %v655 = vrot.slane %v619, %v654
        %v656 = vlaneseq
        %v657 = vshrl.u32 %v656, 7
        %v658 = vsub.s32 0, %v657
        %v659 = vrot.slane %v620, %v658
        %v660 = vlaneseq
        %v661 = vshrl.u32 %v660, 7
        %v662 = vsub.s32 0, %v661
        %v663 = vrot.slane %v621, %v662
        %v664 = vlaneseq
        %v665 = vshrl.u32 %v664, 7
        %v666 = vsub.s32 0, %v665
        %v667 = vrot.slane %v622, %v666
        %v668 = vlaneseq
        %v669 = vshrl.u32 %v668, 7
        %v670 = vsub.s32 0, %v669
        %v671 = vrot.slane %v623, %v670
        %v672 = vlaneseq
        %v673 = vshrl.u32 %v672, 7
        %v674 = vsub.s32 0, %v673
        %v675 = vrot.slane %v624, %v674
        %v676 = vlaneseq
        %v677 = vshrl.u32 %v676, 7
        %v678 = vsub.s32 0, %v677
        %v679 = vrot.slane %v625, %v678
        %v680 = vlaneseq
        %v681 = vshrl.u32 %v680, 7
        %v682 = vsub.s32 0, %v681
        %v683 = vrot.slane %v626, %v682
        %v684 = vlaneseq
        %v685 = vshrl.u32 %v684, 7
        %v686 = vsub.s32 0, %v685
        %v687 = vrot.slane %v627, %v686
        %v704 = vunpack.c.l.b16 %v568
        %v705 = vunpack.c.l.b16 %v569
        %v706 = vunpack.c.l.b16 %v570
        %v707 = vunpack.c.l.b16 %v571
        %v708 = vpack.c.b16 %v705, %v704
        %v709 = vpack.c.b16 %v707, %v706
        %v713 = vsel %vm538, %v567, 0
        %715 = vmatprep.subr.bf16.mxu0 0
        %716 = vmatpush1.bf16.msra.mxu0 0
        %717 = vmatprep.subr.bf16.mxu0 0
        %718 = vmatpush1.bf16.msra.mxu0 0
        %719 = vmatprep.subr.bf16.mxu0 0
        %720 = vmatpush1.bf16.msra.mxu0 0
        %721 = vmatprep.subr.bf16.mxu0 0
        %722 = vmatpush1.bf16.msra.mxu0 0
        %723 = vmatprep.subr.bf16.mxu0 0
        %724 = vmatpush1.bf16.msra.mxu0 0
        %725 = vmatprep.subr.bf16.mxu0 0
        %726 = vmatpush1.bf16.msra.mxu0 0
        %727 = vmatprep.subr.bf16.mxu0 0
        %728 = vmatpush1.bf16.msra.mxu0 %v709
        %729 = vmatprep.subr.bf16.mxu0 0
        %730 = vmatpush1.bf16.msra.mxu0 %v708
        %731 = vmatprep.subr.bf16.mxu0 0
        %732 = vmatpush2.bf16.msra.mxu0 0
        %733 = vmatprep.subr.bf16.mxu0 0
        %734 = vmatpush2.bf16.msra.mxu0 0
        %735 = vmatprep.subr.bf16.mxu0 0
        %736 = vmatpush2.bf16.msra.mxu0 0
        %737 = vmatprep.subr.bf16.mxu0 0
        %738 = vmatpush2.bf16.msra.mxu0 0
        %739 = vmatprep.subr.bf16.mxu0 0
        %740 = vmatpush2.bf16.msra.mxu0 0
        %741 = vmatprep.subr.bf16.mxu0 0
        %742 = vmatpush2.bf16.msra.mxu0 0
        %743 = vmatprep.subr.bf16.mxu0 0
        %744 = vmatpush2.bf16.msra.mxu0 0
        %745 = vmatprep.subr.bf16.mxu0 0
        %746 = vmatpush2.bf16.msra.mxu0 0
        %747 = vmatprep.mubr.bf16.mxu0 0
        %748 = vmatmul.mubr.bf16.gmra.mxu0 %v713
        %v749 = vpop.f32.mrf.mxu0
        %v750 = vadd.f32 %v643, %v749
        %v751 = vpop.f32.mrf.mxu0
        %v752 = vpop.f32.mrf.mxu0
        %v753 = vpop.f32.mrf.mxu0
        %754 = vdwg.mxu0
        %v759 = vunpack.c.l.b16 %v572
        %v760 = vunpack.c.l.b16 %v573
        %v761 = vunpack.c.l.b16 %v574
        %v762 = vunpack.c.l.b16 %v575
        %v763 = vpack.c.b16 %v760, %v759
        %v764 = vpack.c.b16 %v762, %v761
        %767 = vmatprep.subr.bf16.mxu0 0
        %768 = vmatpush1.bf16.msra.mxu0 0
        %769 = vmatprep.subr.bf16.mxu0 0
        %770 = vmatpush1.bf16.msra.mxu0 0
        %771 = vmatprep.subr.bf16.mxu0 0
        %772 = vmatpush1.bf16.msra.mxu0 0
        %773 = vmatprep.subr.bf16.mxu0 0
        %774 = vmatpush1.bf16.msra.mxu0 0
        %775 = vmatprep.subr.bf16.mxu0 0
        %776 = vmatpush1.bf16.msra.mxu0 0
        %777 = vmatprep.subr.bf16.mxu0 0
        %778 = vmatpush1.bf16.msra.mxu0 0
        %779 = vmatprep.subr.bf16.mxu0 0
        %780 = vmatpush1.bf16.msra.mxu0 %v764
        %781 = vmatprep.subr.bf16.mxu0 0
        %782 = vmatpush1.bf16.msra.mxu0 %v763
        %783 = vmatprep.subr.bf16.mxu0 0
        %784 = vmatpush2.bf16.msra.mxu0 0
        %785 = vmatprep.subr.bf16.mxu0 0
        %786 = vmatpush2.bf16.msra.mxu0 0
        %787 = vmatprep.subr.bf16.mxu0 0
        %788 = vmatpush2.bf16.msra.mxu0 0
        %789 = vmatprep.subr.bf16.mxu0 0
        %790 = vmatpush2.bf16.msra.mxu0 0
        %791 = vmatprep.subr.bf16.mxu0 0
        %792 = vmatpush2.bf16.msra.mxu0 0
        %793 = vmatprep.subr.bf16.mxu0 0
        %794 = vmatpush2.bf16.msra.mxu0 0
        %795 = vmatprep.subr.bf16.mxu0 0
        %796 = vmatpush2.bf16.msra.mxu0 0
        %797 = vmatprep.subr.bf16.mxu0 0
        %798 = vmatpush2.bf16.msra.mxu0 0
        %799 = vmatprep.mubr.bf16.mxu0 0
        %800 = vmatmul.mubr.bf16.gmra.mxu0 %v713
        %v801 = vpop.f32.mrf.mxu0
        %v802 = vadd.f32 %v647, %v801
        %v803 = vpop.f32.mrf.mxu0
        %v804 = vpop.f32.mrf.mxu0
        %v805 = vpop.f32.mrf.mxu0
        %806 = vdwg.mxu0
        %v811 = vunpack.c.l.b16 %v576
        %v812 = vunpack.c.l.b16 %v577
        %v813 = vunpack.c.l.b16 %v578
        %v814 = vunpack.c.l.b16 %v579
        %v815 = vpack.c.b16 %v812, %v811
        %v816 = vpack.c.b16 %v814, %v813
        %819 = vmatprep.subr.bf16.mxu0 0
        %820 = vmatpush1.bf16.msra.mxu0 0
        %821 = vmatprep.subr.bf16.mxu0 0
        %822 = vmatpush1.bf16.msra.mxu0 0
        %823 = vmatprep.subr.bf16.mxu0 0
        %824 = vmatpush1.bf16.msra.mxu0 0
        %825 = vmatprep.subr.bf16.mxu0 0
        %826 = vmatpush1.bf16.msra.mxu0 0
        %827 = vmatprep.subr.bf16.mxu0 0
        %828 = vmatpush1.bf16.msra.mxu0 0
        %829 = vmatprep.subr.bf16.mxu0 0
        %830 = vmatpush1.bf16.msra.mxu0 0
        %831 = vmatprep.subr.bf16.mxu0 0
        %832 = vmatpush1.bf16.msra.mxu0 %v816
        %833 = vmatprep.subr.bf16.mxu0 0
        %834 = vmatpush1.bf16.msra.mxu0 %v815
        %835 = vmatprep.subr.bf16.mxu0 0
        %836 = vmatpush2.bf16.msra.mxu0 0
        %837 = vmatprep.subr.bf16.mxu0 0
        %838 = vmatpush2.bf16.msra.mxu0 0
        %839 = vmatprep.subr.bf16.mxu0 0
        %840 = vmatpush2.bf16.msra.mxu0 0
        %841 = vmatprep.subr.bf16.mxu0 0
        %842 = vmatpush2.bf16.msra.mxu0 0
        %843 = vmatprep.subr.bf16.mxu0 0
        %844 = vmatpush2.bf16.msra.mxu0 0
        %845 = vmatprep.subr.bf16.mxu0 0
        %846 = vmatpush2.bf16.msra.mxu0 0
        %847 = vmatprep.subr.bf16.mxu0 0
        %848 = vmatpush2.bf16.msra.mxu0 0
        %849 = vmatprep.subr.bf16.mxu0 0
        %850 = vmatpush2.bf16.msra.mxu0 0
        %851 = vmatprep.mubr.bf16.mxu0 0
        %852 = vmatmul.mubr.bf16.gmra.mxu0 %v713
        %v853 = vpop.f32.mrf.mxu0
        %v854 = vadd.f32 %v651, %v853
        %v855 = vpop.f32.mrf.mxu0
        %v856 = vpop.f32.mrf.mxu0
        %v857 = vpop.f32.mrf.mxu0
        %858 = vdwg.mxu0
        %v863 = vunpack.c.l.b16 %v580
        %v864 = vunpack.c.l.b16 %v581
        %v865 = vunpack.c.l.b16 %v582
        %v866 = vunpack.c.l.b16 %v583
        %v867 = vpack.c.b16 %v864, %v863
        %v868 = vpack.c.b16 %v866, %v865
        %871 = vmatprep.subr.bf16.mxu0 0
        %872 = vmatpush1.bf16.msra.mxu0 0
        %873 = vmatprep.subr.bf16.mxu0 0
        %874 = vmatpush1.bf16.msra.mxu0 0
        %875 = vmatprep.subr.bf16.mxu0 0
        %876 = vmatpush1.bf16.msra.mxu0 0
        %877 = vmatprep.subr.bf16.mxu0 0
        %878 = vmatpush1.bf16.msra.mxu0 0
        %879 = vmatprep.subr.bf16.mxu0 0
        %880 = vmatpush1.bf16.msra.mxu0 0
        %881 = vmatprep.subr.bf16.mxu0 0
        %882 = vmatpush1.bf16.msra.mxu0 0
        %883 = vmatprep.subr.bf16.mxu0 0
        %884 = vmatpush1.bf16.msra.mxu0 %v868
        %885 = vmatprep.subr.bf16.mxu0 0
        %886 = vmatpush1.bf16.msra.mxu0 %v867
        %887 = vmatprep.subr.bf16.mxu0 0
        %888 = vmatpush2.bf16.msra.mxu0 0
        %889 = vmatprep.subr.bf16.mxu0 0
        %890 = vmatpush2.bf16.msra.mxu0 0
        %891 = vmatprep.subr.bf16.mxu0 0
        %892 = vmatpush2.bf16.msra.mxu0 0
        %893 = vmatprep.subr.bf16.mxu0 0
        %894 = vmatpush2.bf16.msra.mxu0 0
        %895 = vmatprep.subr.bf16.mxu0 0
        %896 = vmatpush2.bf16.msra.mxu0 0
        %897 = vmatprep.subr.bf16.mxu0 0
        %898 = vmatpush2.bf16.msra.mxu0 0
        %899 = vmatprep.subr.bf16.mxu0 0
        %900 = vmatpush2.bf16.msra.mxu0 0
        %901 = vmatprep.subr.bf16.mxu0 0
        %902 = vmatpush2.bf16.msra.mxu0 0
        %903 = vmatprep.mubr.bf16.mxu0 0
        %904 = vmatmul.mubr.bf16.gmra.mxu0 %v713
        %v905 = vpop.f32.mrf.mxu0
        %v906 = vadd.f32 %v655, %v905
        %v907 = vpop.f32.mrf.mxu0
        %v908 = vpop.f32.mrf.mxu0
        %v909 = vpop.f32.mrf.mxu0
        %910 = vdwg.mxu0
        %v915 = vunpack.c.l.b16 %v584
        %v916 = vunpack.c.l.b16 %v585
        %v917 = vunpack.c.l.b16 %v586
        %v918 = vunpack.c.l.b16 %v587
        %v919 = vpack.c.b16 %v916, %v915
        %v920 = vpack.c.b16 %v918, %v917
        %923 = vmatprep.subr.bf16.mxu0 0
        %924 = vmatpush1.bf16.msra.mxu0 0
        %925 = vmatprep.subr.bf16.mxu0 0
        %926 = vmatpush1.bf16.msra.mxu0 0
        %927 = vmatprep.subr.bf16.mxu0 0
        %928 = vmatpush1.bf16.msra.mxu0 0
        %929 = vmatprep.subr.bf16.mxu0 0
        %930 = vmatpush1.bf16.msra.mxu0 0
        %931 = vmatprep.subr.bf16.mxu0 0
        %932 = vmatpush1.bf16.msra.mxu0 0
        %933 = vmatprep.subr.bf16.mxu0 0
        %934 = vmatpush1.bf16.msra.mxu0 0
        %935 = vmatprep.subr.bf16.mxu0 0
        %936 = vmatpush1.bf16.msra.mxu0 %v920
        %937 = vmatprep.subr.bf16.mxu0 0
        %938 = vmatpush1.bf16.msra.mxu0 %v919
        %939 = vmatprep.subr.bf16.mxu0 0
        %940 = vmatpush2.bf16.msra.mxu0 0
        %941 = vmatprep.subr.bf16.mxu0 0
        %942 = vmatpush2.bf16.msra.mxu0 0
        %943 = vmatprep.subr.bf16.mxu0 0
        %944 = vmatpush2.bf16.msra.mxu0 0
        %945 = vmatprep.subr.bf16.mxu0 0
        %946 = vmatpush2.bf16.msra.mxu0 0
        %947 = vmatprep.subr.bf16.mxu0 0
        %948 = vmatpush2.bf16.msra.mxu0 0
        %949 = vmatprep.subr.bf16.mxu0 0
        %950 = vmatpush2.bf16.msra.mxu0 0
        %951 = vmatprep.subr.bf16.mxu0 0
        %952 = vmatpush2.bf16.msra.mxu0 0
        %953 = vmatprep.subr.bf16.mxu0 0
        %954 = vmatpush2.bf16.msra.mxu0 0
        %955 = vmatprep.mubr.bf16.mxu0 0
        %956 = vmatmul.mubr.bf16.gmra.mxu0 %v713
        %v957 = vpop.f32.mrf.mxu0
        %v958 = vadd.f32 %v659, %v957
        %v959 = vpop.f32.mrf.mxu0
        %v960 = vpop.f32.mrf.mxu0
        %v961 = vpop.f32.mrf.mxu0
        %962 = vdwg.mxu0
        %v967 = vunpack.c.l.b16 %v588
        %v968 = vunpack.c.l.b16 %v589
        %v969 = vunpack.c.l.b16 %v590
        %v970 = vunpack.c.l.b16 %v591
        %v971 = vpack.c.b16 %v968, %v967
        %v972 = vpack.c.b16 %v970, %v969
        %975 = vmatprep.subr.bf16.mxu0 0
        %976 = vmatpush1.bf16.msra.mxu0 0
        %977 = vmatprep.subr.bf16.mxu0 0
        %978 = vmatpush1.bf16.msra.mxu0 0
        %979 = vmatprep.subr.bf16.mxu0 0
        %980 = vmatpush1.bf16.msra.mxu0 0
        %981 = vmatprep.subr.bf16.mxu0 0
        %982 = vmatpush1.bf16.msra.mxu0 0
        %983 = vmatprep.subr.bf16.mxu0 0
        %984 = vmatpush1.bf16.msra.mxu0 0
        %985 = vmatprep.subr.bf16.mxu0 0
        %986 = vmatpush1.bf16.msra.mxu0 0
        %987 = vmatprep.subr.bf16.mxu0 0
        %988 = vmatpush1.bf16.msra.mxu0 %v972
        %989 = vmatprep.subr.bf16.mxu0 0
        %990 = vmatpush1.bf16.msra.mxu0 %v971
        %991 = vmatprep.subr.bf16.mxu0 0
        %992 = vmatpush2.bf16.msra.mxu0 0
        %993 = vmatprep.subr.bf16.mxu0 0
        %994 = vmatpush2.bf16.msra.mxu0 0
        %995 = vmatprep.subr.bf16.mxu0 0
        %996 = vmatpush2.bf16.msra.mxu0 0
        %997 = vmatprep.subr.bf16.mxu0 0
        %998 = vmatpush2.bf16.msra.mxu0 0
        %999 = vmatprep.subr.bf16.mxu0 0
        %1000 = vmatpush2.bf16.msra.mxu0 0
        %1001 = vmatprep.subr.bf16.mxu0 0
        %1002 = vmatpush2.bf16.msra.mxu0 0
        %1003 = vmatprep.subr.bf16.mxu0 0
        %1004 = vmatpush2.bf16.msra.mxu0 0
        %1005 = vmatprep.subr.bf16.mxu0 0
        %1006 = vmatpush2.bf16.msra.mxu0 0
        %1007 = vmatprep.mubr.bf16.mxu0 0
        %1008 = vmatmul.mubr.bf16.gmra.mxu0 %v713
        %v1009 = vpop.f32.mrf.mxu0
        %v1010 = vadd.f32 %v663, %v1009
        %v1011 = vpop.f32.mrf.mxu0
        %v1012 = vpop.f32.mrf.mxu0
        %v1013 = vpop.f32.mrf.mxu0
        %1014 = vdwg.mxu0
        %v1019 = vunpack.c.l.b16 %v592
        %v1020 = vunpack.c.l.b16 %v593
        %v1021 = vunpack.c.l.b16 %v594
        %v1022 = vunpack.c.l.b16 %v595
        %v1023 = vpack.c.b16 %v1020, %v1019
        %v1024 = vpack.c.b16 %v1022, %v1021
        %1027 = vmatprep.subr.bf16.mxu0 0
        %1028 = vmatpush1.bf16.msra.mxu0 0
        %1029 = vmatprep.subr.bf16.mxu0 0
        %1030 = vmatpush1.bf16.msra.mxu0 0
        %1031 = vmatprep.subr.bf16.mxu0 0
        %1032 = vmatpush1.bf16.msra.mxu0 0
        %1033 = vmatprep.subr.bf16.mxu0 0
        %1034 = vmatpush1.bf16.msra.mxu0 0
        %1035 = vmatprep.subr.bf16.mxu0 0
        %1036 = vmatpush1.bf16.msra.mxu0 0
        %1037 = vmatprep.subr.bf16.mxu0 0
        %1038 = vmatpush1.bf16.msra.mxu0 0
        %1039 = vmatprep.subr.bf16.mxu0 0
        %1040 = vmatpush1.bf16.msra.mxu0 %v1024
        %1041 = vmatprep.subr.bf16.mxu0 0
        %1042 = vmatpush1.bf16.msra.mxu0 %v1023
        %1043 = vmatprep.subr.bf16.mxu0 0
        %1044 = vmatpush2.bf16.msra.mxu0 0
        %1045 = vmatprep.subr.bf16.mxu0 0
        %1046 = vmatpush2.bf16.msra.mxu0 0
        %1047 = vmatprep.subr.bf16.mxu0 0
        %1048 = vmatpush2.bf16.msra.mxu0 0
        %1049 = vmatprep.subr.bf16.mxu0 0
        %1050 = vmatpush2.bf16.msra.mxu0 0
        %1051 = vmatprep.subr.bf16.mxu0 0
        %1052 = vmatpush2.bf16.msra.mxu0 0
        %1053 = vmatprep.subr.bf16.mxu0 0
        %1054 = vmatpush2.bf16.msra.mxu0 0
        %1055 = vmatprep.subr.bf16.mxu0 0
        %1056 = vmatpush2.bf16.msra.mxu0 0
        %1057 = vmatprep.subr.bf16.mxu0 0
        %1058 = vmatpush2.bf16.msra.mxu0 0
        %1059 = vmatprep.mubr.bf16.mxu0 0
        %1060 = vmatmul.mubr.bf16.gmra.mxu0 %v713
        %v1061 = vpop.f32.mrf.mxu0
        %v1062 = vadd.f32 %v667, %v1061
        %v1063 = vpop.f32.mrf.mxu0
        %v1064 = vpop.f32.mrf.mxu0
        %v1065 = vpop.f32.mrf.mxu0
        %1066 = vdwg.mxu0
        %v1071 = vunpack.c.l.b16 %v596
        %v1072 = vunpack.c.l.b16 %v597
        %v1073 = vunpack.c.l.b16 %v598
        %v1074 = vunpack.c.l.b16 %v599
        %v1075 = vpack.c.b16 %v1072, %v1071
        %v1076 = vpack.c.b16 %v1074, %v1073
        %1079 = vmatprep.subr.bf16.mxu0 0
        %1080 = vmatpush1.bf16.msra.mxu0 0
        %1081 = vmatprep.subr.bf16.mxu0 0
        %1082 = vmatpush1.bf16.msra.mxu0 0
        %1083 = vmatprep.subr.bf16.mxu0 0
        %1084 = vmatpush1.bf16.msra.mxu0 0
        %1085 = vmatprep.subr.bf16.mxu0 0
        %1086 = vmatpush1.bf16.msra.mxu0 0
        %1087 = vmatprep.subr.bf16.mxu0 0
        %1088 = vmatpush1.bf16.msra.mxu0 0
        %1089 = vmatprep.subr.bf16.mxu0 0
        %1090 = vmatpush1.bf16.msra.mxu0 0
        %1091 = vmatprep.subr.bf16.mxu0 0
        %1092 = vmatpush1.bf16.msra.mxu0 %v1076
        %1093 = vmatprep.subr.bf16.mxu0 0
        %1094 = vmatpush1.bf16.msra.mxu0 %v1075
        %1095 = vmatprep.subr.bf16.mxu0 0
        %1096 = vmatpush2.bf16.msra.mxu0 0
        %1097 = vmatprep.subr.bf16.mxu0 0
        %1098 = vmatpush2.bf16.msra.mxu0 0
        %1099 = vmatprep.subr.bf16.mxu0 0
        %1100 = vmatpush2.bf16.msra.mxu0 0
        %1101 = vmatprep.subr.bf16.mxu0 0
        %1102 = vmatpush2.bf16.msra.mxu0 0
        %1103 = vmatprep.subr.bf16.mxu0 0
        %1104 = vmatpush2.bf16.msra.mxu0 0
        %1105 = vmatprep.subr.bf16.mxu0 0
        %1106 = vmatpush2.bf16.msra.mxu0 0
        %1107 = vmatprep.subr.bf16.mxu0 0
        %1108 = vmatpush2.bf16.msra.mxu0 0
        %1109 = vmatprep.subr.bf16.mxu0 0
        %1110 = vmatpush2.bf16.msra.mxu0 0
        %1111 = vmatprep.mubr.bf16.mxu0 0
        %1112 = vmatmul.mubr.bf16.gmra.mxu0 %v713
        %v1113 = vpop.f32.mrf.mxu0
        %v1114 = vadd.f32 %v671, %v1113
        %v1115 = vpop.f32.mrf.mxu0
        %v1116 = vpop.f32.mrf.mxu0
        %v1117 = vpop.f32.mrf.mxu0
        %1118 = vdwg.mxu0
        %v1123 = vunpack.c.l.b16 %v600
        %v1124 = vunpack.c.l.b16 %v601
        %v1125 = vunpack.c.l.b16 %v602
        %v1126 = vunpack.c.l.b16 %v603
        %v1127 = vpack.c.b16 %v1124, %v1123
        %v1128 = vpack.c.b16 %v1126, %v1125
        %1131 = vmatprep.subr.bf16.mxu0 0
        %1132 = vmatpush1.bf16.msra.mxu0 0
        %1133 = vmatprep.subr.bf16.mxu0 0
        %1134 = vmatpush1.bf16.msra.mxu0 0
        %1135 = vmatprep.subr.bf16.mxu0 0
        %1136 = vmatpush1.bf16.msra.mxu0 0
        %1137 = vmatprep.subr.bf16.mxu0 0
        %1138 = vmatpush1.bf16.msra.mxu0 0
        %1139 = vmatprep.subr.bf16.mxu0 0
        %1140 = vmatpush1.bf16.msra.mxu0 0
        %1141 = vmatprep.subr.bf16.mxu0 0
        %1142 = vmatpush1.bf16.msra.mxu0 0
        %1143 = vmatprep.subr.bf16.mxu0 0
        %1144 = vmatpush1.bf16.msra.mxu0 %v1128
        %1145 = vmatprep.subr.bf16.mxu0 0
        %1146 = vmatpush1.bf16.msra.mxu0 %v1127
        %1147 = vmatprep.subr.bf16.mxu0 0
        %1148 = vmatpush2.bf16.msra.mxu0 0
        %1149 = vmatprep.subr.bf16.mxu0 0
        %1150 = vmatpush2.bf16.msra.mxu0 0
        %1151 = vmatprep.subr.bf16.mxu0 0
        %1152 = vmatpush2.bf16.msra.mxu0 0
        %1153 = vmatprep.subr.bf16.mxu0 0
        %1154 = vmatpush2.bf16.msra.mxu0 0
        %1155 = vmatprep.subr.bf16.mxu0 0
        %1156 = vmatpush2.bf16.msra.mxu0 0
        %1157 = vmatprep.subr.bf16.mxu0 0
        %1158 = vmatpush2.bf16.msra.mxu0 0
        %1159 = vmatprep.subr.bf16.mxu0 0
        %1160 = vmatpush2.bf16.msra.mxu0 0
        %1161 = vmatprep.subr.bf16.mxu0 0
        %1162 = vmatpush2.bf16.msra.mxu0 0
        %1163 = vmatprep.mubr.bf16.mxu0 0
        %1164 = vmatmul.mubr.bf16.gmra.mxu0 %v713
        %v1165 = vpop.f32.mrf.mxu0
        %v1166 = vadd.f32 %v675, %v1165
        %v1167 = vpop.f32.mrf.mxu0
        %v1168 = vpop.f32.mrf.mxu0
        %v1169 = vpop.f32.mrf.mxu0
        %1170 = vdwg.mxu0
        %v1175 = vunpack.c.l.b16 %v604
        %v1176 = vunpack.c.l.b16 %v605
        %v1177 = vunpack.c.l.b16 %v606
        %v1178 = vunpack.c.l.b16 %v607
        %v1179 = vpack.c.b16 %v1176, %v1175
        %v1180 = vpack.c.b16 %v1178, %v1177
        %1183 = vmatprep.subr.bf16.mxu0 0
        %1184 = vmatpush1.bf16.msra.mxu0 0
        %1185 = vmatprep.subr.bf16.mxu0 0
        %1186 = vmatpush1.bf16.msra.mxu0 0
        %1187 = vmatprep.subr.bf16.mxu0 0
        %1188 = vmatpush1.bf16.msra.mxu0 0
        %1189 = vmatprep.subr.bf16.mxu0 0
        %1190 = vmatpush1.bf16.msra.mxu0 0
        %1191 = vmatprep.subr.bf16.mxu0 0
        %1192 = vmatpush1.bf16.msra.mxu0 0
        %1193 = vmatprep.subr.bf16.mxu0 0
        %1194 = vmatpush1.bf16.msra.mxu0 0
        %1195 = vmatprep.subr.bf16.mxu0 0
        %1196 = vmatpush1.bf16.msra.mxu0 %v1180
        %1197 = vmatprep.subr.bf16.mxu0 0
        %1198 = vmatpush1.bf16.msra.mxu0 %v1179
        %1199 = vmatprep.subr.bf16.mxu0 0
        %1200 = vmatpush2.bf16.msra.mxu0 0
        %1201 = vmatprep.subr.bf16.mxu0 0
        %1202 = vmatpush2.bf16.msra.mxu0 0
        %1203 = vmatprep.subr.bf16.mxu0 0
        %1204 = vmatpush2.bf16.msra.mxu0 0
        %1205 = vmatprep.subr.bf16.mxu0 0
        %1206 = vmatpush2.bf16.msra.mxu0 0
        %1207 = vmatprep.subr.bf16.mxu0 0
        %1208 = vmatpush2.bf16.msra.mxu0 0
        %1209 = vmatprep.subr.bf16.mxu0 0
        %1210 = vmatpush2.bf16.msra.mxu0 0
        %1211 = vmatprep.subr.bf16.mxu0 0
        %1212 = vmatpush2.bf16.msra.mxu0 0
        %1213 = vmatprep.subr.bf16.mxu0 0
        %1214 = vmatpush2.bf16.msra.mxu0 0
        %1215 = vmatprep.mubr.bf16.mxu0 0
        %1216 = vmatmul.mubr.bf16.gmra.mxu0 %v713
        %v1217 = vpop.f32.mrf.mxu0
        %v1218 = vadd.f32 %v679, %v1217
        %v1219 = vpop.f32.mrf.mxu0
        %v1220 = vpop.f32.mrf.mxu0
        %v1221 = vpop.f32.mrf.mxu0
        %1222 = vdwg.mxu0
        %v1227 = vunpack.c.l.b16 %v608
        %v1228 = vunpack.c.l.b16 %v609
        %v1229 = vunpack.c.l.b16 %v610
        %v1230 = vunpack.c.l.b16 %v611
        %v1231 = vpack.c.b16 %v1228, %v1227
        %v1232 = vpack.c.b16 %v1230, %v1229
        %1235 = vmatprep.subr.bf16.mxu0 0
        %1236 = vmatpush1.bf16.msra.mxu0 0
        %1237 = vmatprep.subr.bf16.mxu0 0
        %1238 = vmatpush1.bf16.msra.mxu0 0
        %1239 = vmatprep.subr.bf16.mxu0 0
        %1240 = vmatpush1.bf16.msra.mxu0 0
        %1241 = vmatprep.subr.bf16.mxu0 0
        %1242 = vmatpush1.bf16.msra.mxu0 0
        %1243 = vmatprep.subr.bf16.mxu0 0
        %1244 = vmatpush1.bf16.msra.mxu0 0
        %1245 = vmatprep.subr.bf16.mxu0 0
        %1246 = vmatpush1.bf16.msra.mxu0 0
        %1247 = vmatprep.subr.bf16.mxu0 0
        %1248 = vmatpush1.bf16.msra.mxu0 %v1232
        %1249 = vmatprep.subr.bf16.mxu0 0
        %1250 = vmatpush1.bf16.msra.mxu0 %v1231
        %1251 = vmatprep.subr.bf16.mxu0 0
        %1252 = vmatpush2.bf16.msra.mxu0 0
        %1253 = vmatprep.subr.bf16.mxu0 0
        %1254 = vmatpush2.bf16.msra.mxu0 0
        %1255 = vmatprep.subr.bf16.mxu0 0
        %1256 = vmatpush2.bf16.msra.mxu0 0
        %1257 = vmatprep.subr.bf16.mxu0 0
        %1258 = vmatpush2.bf16.msra.mxu0 0
        %1259 = vmatprep.subr.bf16.mxu0 0
        %1260 = vmatpush2.bf16.msra.mxu0 0
        %1261 = vmatprep.subr.bf16.mxu0 0
        %1262 = vmatpush2.bf16.msra.mxu0 0
        %1263 = vmatprep.subr.bf16.mxu0 0
        %1264 = vmatpush2.bf16.msra.mxu0 0
        %1265 = vmatprep.subr.bf16.mxu0 0
        %1266 = vmatpush2.bf16.msra.mxu0 0
        %1267 = vmatprep.mubr.bf16.mxu0 0
        %1268 = vmatmul.mubr.bf16.gmra.mxu0 %v713
        %v1269 = vpop.f32.mrf.mxu0
        %v1270 = vadd.f32 %v683, %v1269
        %v1271 = vpop.f32.mrf.mxu0
        %v1272 = vpop.f32.mrf.mxu0
        %v1273 = vpop.f32.mrf.mxu0
        %1274 = vdwg.mxu0
        %v1279 = vunpack.c.l.b16 %v612
        %v1280 = vunpack.c.l.b16 %v613
        %v1281 = vunpack.c.l.b16 %v614
        %v1282 = vunpack.c.l.b16 %v615
        %v1283 = vpack.c.b16 %v1280, %v1279
        %v1284 = vpack.c.b16 %v1282, %v1281
        %1287 = vmatprep.subr.bf16.mxu0 0
        %1288 = vmatpush1.bf16.msra.mxu0 0
        %1289 = vmatprep.subr.bf16.mxu0 0
        %1290 = vmatpush1.bf16.msra.mxu0 0
        %1291 = vmatprep.subr.bf16.mxu0 0
        %1292 = vmatpush1.bf16.msra.mxu0 0
        %1293 = vmatprep.subr.bf16.mxu0 0
        %1294 = vmatpush1.bf16.msra.mxu0 0
        %1295 = vmatprep.subr.bf16.mxu0 0
        %1296 = vmatpush1.bf16.msra.mxu0 0
        %1297 = vmatprep.subr.bf16.mxu0 0
        %1298 = vmatpush1.bf16.msra.mxu0 0
        %1299 = vmatprep.subr.bf16.mxu0 0
        %1300 = vmatpush1.bf16.msra.mxu0 %v1284
        %1301 = vmatprep.subr.bf16.mxu0 0
        %1302 = vmatpush1.bf16.msra.mxu0 %v1283
        %1303 = vmatprep.subr.bf16.mxu0 0
        %1304 = vmatpush2.bf16.msra.mxu0 0
        %1305 = vmatprep.subr.bf16.mxu0 0
        %1306 = vmatpush2.bf16.msra.mxu0 0
        %1307 = vmatprep.subr.bf16.mxu0 0
        %1308 = vmatpush2.bf16.msra.mxu0 0
        %1309 = vmatprep.subr.bf16.mxu0 0
        %1310 = vmatpush2.bf16.msra.mxu0 0
        %1311 = vmatprep.subr.bf16.mxu0 0
        %1312 = vmatpush2.bf16.msra.mxu0 0
        %1313 = vmatprep.subr.bf16.mxu0 0
        %1314 = vmatpush2.bf16.msra.mxu0 0
        %1315 = vmatprep.subr.bf16.mxu0 0
        %1316 = vmatpush2.bf16.msra.mxu0 0
        %1317 = vmatprep.subr.bf16.mxu0 0
        %1318 = vmatpush2.bf16.msra.mxu0 0
        %1319 = vmatprep.mubr.bf16.mxu0 0
        %1320 = vmatmul.mubr.bf16.gmra.mxu0 %v713
        %v1321 = vpop.f32.mrf.mxu0
        %v1322 = vadd.f32 %v687, %v1321
        %v1323 = vpop.f32.mrf.mxu0
        %v1324 = vpop.f32.mrf.mxu0
        %v1325 = vpop.f32.mrf.mxu0
        %1326 = vdwg.mxu0
        %v1327 = vpack.c.bf16 %v750, %v750
        %v1328 = vpack.c.bf16 %v802, %v802
        %v1329 = vpack.c.bf16 %v854, %v854
        %v1330 = vpack.c.bf16 %v906, %v906
        %v1331 = vpack.c.bf16 %v958, %v958
        %v1332 = vpack.c.bf16 %v1010, %v1010
        %v1333 = vpack.c.bf16 %v1062, %v1062
        %v1334 = vpack.c.bf16 %v1114, %v1114
        %v1336 = vlaneseq
        %v1337 = vshrl.u32 %v1336, 7
        %v1338 = vsub.s32 0, %v1337
        %v1339 = vrot.slane %v534, %v1338
        %vm1341 = vcmask 64512
        %v1343 = vsel %vm1341, %v1327, 0
        %v1346 = vsel %vm1341, %v1331, 0
        %1348 = vmatprep.subr.bf16.mxu0 0
        %1349 = vmatpush1.bf16.xpose.msra.mxu0 0
        %1350 = vmatprep.subr.bf16.mxu0 0
        %1351 = vmatpush1.bf16.xpose.msra.mxu0 0
        %1352 = vmatprep.subr.bf16.mxu0 0
        %1353 = vmatpush1.bf16.xpose.msra.mxu0 0
        %1354 = vmatprep.subr.bf16.mxu0 0
        %1355 = vmatpush1.bf16.xpose.msra.mxu0 0
        %1356 = vmatprep.subr.bf16.mxu0 0
        %1357 = vmatpush1.bf16.xpose.msra.mxu0 0
        %1358 = vmatprep.subr.bf16.mxu0 0
        %1359 = vmatpush1.bf16.xpose.msra.mxu0 0
        %1360 = vmatprep.subr.bf16.mxu0 0
        %1361 = vmatpush1.bf16.xpose.msra.mxu0 0
        %1362 = vmatprep.subr.bf16.mxu0 0
        %1363 = vmatpush1.bf16.xpose.msra.mxu0 %v1346
        %1364 = vmatprep.subr.bf16.mxu0 0
        %1365 = vmatpush2.bf16.xpose.msra.mxu0 0
        %1366 = vmatprep.subr.bf16.mxu0 0
        %1367 = vmatpush2.bf16.xpose.msra.mxu0 0
        %1368 = vmatprep.subr.bf16.mxu0 0
        %1369 = vmatpush2.bf16.xpose.msra.mxu0 0
        %1370 = vmatprep.subr.bf16.mxu0 0
        %1371 = vmatpush2.bf16.xpose.msra.mxu0 0
        %1372 = vmatprep.subr.bf16.mxu0 0
        %1373 = vmatpush2.bf16.xpose.msra.mxu0 0
        %1374 = vmatprep.subr.bf16.mxu0 0
        %1375 = vmatpush2.bf16.xpose.msra.mxu0 0
        %1376 = vmatprep.subr.bf16.mxu0 0
        %1377 = vmatpush2.bf16.xpose.msra.mxu0 0
        %1378 = vmatprep.subr.bf16.mxu0 0
        %1379 = vmatpush2.bf16.xpose.msra.mxu0 0
        %1380 = vmatprep.mubr.bf16.mxu0 0
        %1381 = vmatmul.mubr.bf16.gmra.mxu0 %v1343
        %v1382 = vpop.f32.mrf.mxu0
        %v1383 = vadd.f32 %v1339, %v1382
        %v1384 = vpop.f32.mrf.mxu0
        %v1385 = vpop.f32.mrf.mxu0
        %v1386 = vpop.f32.mrf.mxu0
        %1387 = vdwg.mxu0
        %v1389 = vsel %vm1341, %v1328, 0
        %v1392 = vsel %vm1341, %v1332, 0
        %1394 = vmatprep.subr.bf16.mxu0 0
        %1395 = vmatpush1.bf16.xpose.msra.mxu0 0
        %1396 = vmatprep.subr.bf16.mxu0 0
        %1397 = vmatpush1.bf16.xpose.msra.mxu0 0
        %1398 = vmatprep.subr.bf16.mxu0 0
        %1399 = vmatpush1.bf16.xpose.msra.mxu0 0
        %1400 = vmatprep.subr.bf16.mxu0 0
        %1401 = vmatpush1.bf16.xpose.msra.mxu0 0
        %1402 = vmatprep.subr.bf16.mxu0 0
        %1403 = vmatpush1.bf16.xpose.msra.mxu0 0
        %1404 = vmatprep.subr.bf16.mxu0 0
        %1405 = vmatpush1.bf16.xpose.msra.mxu0 0
        %1406 = vmatprep.subr.bf16.mxu0 0
        %1407 = vmatpush1.bf16.xpose.msra.mxu0 0
        %1408 = vmatprep.subr.bf16.mxu0 0
        %1409 = vmatpush1.bf16.xpose.msra.mxu0 %v1392
        %1410 = vmatprep.subr.bf16.mxu0 0
        %1411 = vmatpush2.bf16.xpose.msra.mxu0 0
        %1412 = vmatprep.subr.bf16.mxu0 0
        %1413 = vmatpush2.bf16.xpose.msra.mxu0 0
        %1414 = vmatprep.subr.bf16.mxu0 0
        %1415 = vmatpush2.bf16.xpose.msra.mxu0 0
        %1416 = vmatprep.subr.bf16.mxu0 0
        %1417 = vmatpush2.bf16.xpose.msra.mxu0 0
        %1418 = vmatprep.subr.bf16.mxu0 0
        %1419 = vmatpush2.bf16.xpose.msra.mxu0 0
        %1420 = vmatprep.subr.bf16.mxu0 0
        %1421 = vmatpush2.bf16.xpose.msra.mxu0 0
        %1422 = vmatprep.subr.bf16.mxu0 0
        %1423 = vmatpush2.bf16.xpose.msra.mxu0 0
        %1424 = vmatprep.subr.bf16.mxu0 0
        %1425 = vmatpush2.bf16.xpose.msra.mxu0 0
        %1426 = vmatprep.mubr.bf16.mxu0 0
        %1427 = vmatmul.mubr.bf16.gmra.mxu0 %v1389
        %v1428 = vpop.f32.mrf.mxu0
        %v1429 = vadd.f32 %v1339, %v1428
        %v1430 = vpop.f32.mrf.mxu0
        %v1431 = vpop.f32.mrf.mxu0
        %v1432 = vpop.f32.mrf.mxu0
        %1433 = vdwg.mxu0
        %v1435 = vsel %vm1341, %v1329, 0
        %v1438 = vsel %vm1341, %v1333, 0
        %1440 = vmatprep.subr.bf16.mxu0 0
        %1441 = vmatpush1.bf16.xpose.msra.mxu0 0
        %1442 = vmatprep.subr.bf16.mxu0 0
        %1443 = vmatpush1.bf16.xpose.msra.mxu0 0
        %1444 = vmatprep.subr.bf16.mxu0 0
        %1445 = vmatpush1.bf16.xpose.msra.mxu0 0
        %1446 = vmatprep.subr.bf16.mxu0 0
        %1447 = vmatpush1.bf16.xpose.msra.mxu0 0
        %1448 = vmatprep.subr.bf16.mxu0 0
        %1449 = vmatpush1.bf16.xpose.msra.mxu0 0
        %1450 = vmatprep.subr.bf16.mxu0 0
        %1451 = vmatpush1.bf16.xpose.msra.mxu0 0
        %1452 = vmatprep.subr.bf16.mxu0 0
        %1453 = vmatpush1.bf16.xpose.msra.mxu0 0
        %1454 = vmatprep.subr.bf16.mxu0 0
        %1455 = vmatpush1.bf16.xpose.msra.mxu0 %v1438
        %1456 = vmatprep.subr.bf16.mxu0 0
        %1457 = vmatpush2.bf16.xpose.msra.mxu0 0
        %1458 = vmatprep.subr.bf16.mxu0 0
        %1459 = vmatpush2.bf16.xpose.msra.mxu0 0
        %1460 = vmatprep.subr.bf16.mxu0 0
        %1461 = vmatpush2.bf16.xpose.msra.mxu0 0
        %1462 = vmatprep.subr.bf16.mxu0 0
        %1463 = vmatpush2.bf16.xpose.msra.mxu0 0
        %1464 = vmatprep.subr.bf16.mxu0 0
        %1465 = vmatpush2.bf16.xpose.msra.mxu0 0
        %1466 = vmatprep.subr.bf16.mxu0 0
        %1467 = vmatpush2.bf16.xpose.msra.mxu0 0
        %1468 = vmatprep.subr.bf16.mxu0 0
        %1469 = vmatpush2.bf16.xpose.msra.mxu0 0
        %1470 = vmatprep.subr.bf16.mxu0 0
        %1471 = vmatpush2.bf16.xpose.msra.mxu0 0
        %1472 = vmatprep.mubr.bf16.mxu0 0
        %1473 = vmatmul.mubr.bf16.gmra.mxu0 %v1435
        %v1474 = vpop.f32.mrf.mxu0
        %v1475 = vadd.f32 %v1339, %v1474
        %v1476 = vpop.f32.mrf.mxu0
        %v1477 = vpop.f32.mrf.mxu0
        %v1478 = vpop.f32.mrf.mxu0
        %1479 = vdwg.mxu0
        %v1481 = vsel %vm1341, %v1330, 0
        %v1484 = vsel %vm1341, %v1334, 0
        %1486 = vmatprep.subr.bf16.mxu0 0
        %1487 = vmatpush1.bf16.xpose.msra.mxu0 0
        %1488 = vmatprep.subr.bf16.mxu0 0
        %1489 = vmatpush1.bf16.xpose.msra.mxu0 0
        %1490 = vmatprep.subr.bf16.mxu0 0
        %1491 = vmatpush1.bf16.xpose.msra.mxu0 0
        %1492 = vmatprep.subr.bf16.mxu0 0
        %1493 = vmatpush1.bf16.xpose.msra.mxu0 0
        %1494 = vmatprep.subr.bf16.mxu0 0
        %1495 = vmatpush1.bf16.xpose.msra.mxu0 0
        %1496 = vmatprep.subr.bf16.mxu0 0
        %1497 = vmatpush1.bf16.xpose.msra.mxu0 0
        %1498 = vmatprep.subr.bf16.mxu0 0
        %1499 = vmatpush1.bf16.xpose.msra.mxu0 0
        %1500 = vmatprep.subr.bf16.mxu0 0
        %1501 = vmatpush1.bf16.xpose.msra.mxu0 %v1484
        %1502 = vmatprep.subr.bf16.mxu0 0
        %1503 = vmatpush2.bf16.xpose.msra.mxu0 0
        %1504 = vmatprep.subr.bf16.mxu0 0
        %1505 = vmatpush2.bf16.xpose.msra.mxu0 0
        %1506 = vmatprep.subr.bf16.mxu0 0
        %1507 = vmatpush2.bf16.xpose.msra.mxu0 0
        %1508 = vmatprep.subr.bf16.mxu0 0
        %1509 = vmatpush2.bf16.xpose.msra.mxu0 0
        %1510 = vmatprep.subr.bf16.mxu0 0
        %1511 = vmatpush2.bf16.xpose.msra.mxu0 0
        %1512 = vmatprep.subr.bf16.mxu0 0
        %1513 = vmatpush2.bf16.xpose.msra.mxu0 0
        %1514 = vmatprep.subr.bf16.mxu0 0
        %1515 = vmatpush2.bf16.xpose.msra.mxu0 0
        %1516 = vmatprep.subr.bf16.mxu0 0
        %1517 = vmatpush2.bf16.xpose.msra.mxu0 0
        %1518 = vmatprep.mubr.bf16.mxu0 0
        %1519 = vmatmul.mubr.bf16.gmra.mxu0 %v1481
        %v1520 = vpop.f32.mrf.mxu0
        %v1521 = vadd.f32 %v1339, %v1520
        %v1522 = vpop.f32.mrf.mxu0
        %v1523 = vpop.f32.mrf.mxu0
        %v1524 = vpop.f32.mrf.mxu0
        %1525 = vdwg.mxu0
        %v1526 = vsel %vm1341, %v1383, -inf
        %1527 = vmax.xlane.f32.xlu0 %v1526
        %v1528 = vpop.xlane.xlu0 %1527
        %v1529 = vsel %vm1341, %v1429, -inf
        %1530 = vmax.xlane.f32.xlu0 %v1529
        %v1531 = vpop.xlane.xlu0 %1530
        %v1532 = vsel %vm1341, %v1475, -inf
        %1533 = vmax.xlane.f32.xlu0 %v1532
        %v1534 = vpop.xlane.xlu0 %1533
        %v1535 = vsel %vm1341, %v1521, -inf
        %1536 = vmax.xlane.f32.xlu0 %v1535
        %v1537 = vpop.xlane.xlu0 %1536
        %v1538 = vsub.f32 %v1383, %v1528
        %v1539 = vsub.f32 %v1429, %v1531
        %v1540 = vsub.f32 %v1475, %v1534
        %v1541 = vsub.f32 %v1521, %v1537
        %v1542 = vmul.f32 %v1538, 1.442695
        %v1543 = vpow.pop %v1542
        %v1544 = vmul.f32 %v1539, 1.442695
        %v1545 = vpow.pop %v1544
        %v1546 = vmul.f32 %v1540, 1.442695
        %v1547 = vpow.pop %v1546
        %v1548 = vmul.f32 %v1541, 1.442695
        %v1549 = vpow.pop %v1548
        %v1550 = vsel %vm1341, %v1543, 0.0
        %1551 = vadd.xlane.f32.xlu0 %v1550
        %v1552 = vpop.xlane.xlu0 %1551
        %v1553 = vsel %vm1341, %v1545, 0.0
        %1554 = vadd.xlane.f32.xlu0 %v1553
        %v1555 = vpop.xlane.xlu0 %1554
        %v1556 = vsel %vm1341, %v1547, 0.0
        %1557 = vadd.xlane.f32.xlu0 %v1556
        %v1558 = vpop.xlane.xlu0 %1557
        %v1559 = vsel %vm1341, %v1549, 0.0
        %1560 = vadd.xlane.f32.xlu0 %v1559
        %v1561 = vpop.xlane.xlu0 %1560
        %v1562 = vrcp.pop %v1552
        %v1563 = vrcp.pop %v1555
        %v1564 = vrcp.pop %v1558
        %v1565 = vrcp.pop %v1561
        %v1566 = vmul.f32 %v1543, %v1562
        %v1567 = vmul.f32 %v1545, %v1563
        %v1568 = vmul.f32 %v1547, %v1564
        %v1569 = vmul.f32 %v1549, %v1565
        %v1570 = vpack.c.bf16 %v1566, %v1566
        %v1571 = vpack.c.bf16 %v1567, %v1567
        %v1572 = vpack.c.bf16 %v1568, %v1568
        %v1573 = vpack.c.bf16 %v1569, %v1569
        %v1574 = vpack.c.bf16 %v1166, %v1166
        %v1575 = vpack.c.bf16 %v1218, %v1218
        %v1576 = vpack.c.bf16 %v1270, %v1270
        %v1577 = vpack.c.bf16 %v1322, %v1322
        %v1579 = vsel %vm1341, %v1570, 0
        %vm1581 = vcmask 1043456
        %v1583 = vsel %vm1581, %v1574, 0
        %1585 = vmatprep.subr.bf16.mxu0 0
        %1586 = vmatpush1.bf16.msra.mxu0 0
        %1587 = vmatprep.subr.bf16.mxu0 0
        %1588 = vmatpush1.bf16.msra.mxu0 0
        %1589 = vmatprep.subr.bf16.mxu0 0
        %1590 = vmatpush1.bf16.msra.mxu0 0
        %1591 = vmatprep.subr.bf16.mxu0 0
        %1592 = vmatpush1.bf16.msra.mxu0 0
        %1593 = vmatprep.subr.bf16.mxu0 0
        %1594 = vmatpush1.bf16.msra.mxu0 0
        %1595 = vmatprep.subr.bf16.mxu0 0
        %1596 = vmatpush1.bf16.msra.mxu0 0
        %1597 = vmatprep.subr.bf16.mxu0 0
        %1598 = vmatpush1.bf16.msra.mxu0 0
        %1599 = vmatprep.subr.bf16.mxu0 0
        %1600 = vmatpush1.bf16.msra.mxu0 %v1583
        %1601 = vmatprep.subr.bf16.mxu0 0
        %1602 = vmatpush2.bf16.msra.mxu0 0
        %1603 = vmatprep.subr.bf16.mxu0 0
        %1604 = vmatpush2.bf16.msra.mxu0 0
        %1605 = vmatprep.subr.bf16.mxu0 0
        %1606 = vmatpush2.bf16.msra.mxu0 0
        %1607 = vmatprep.subr.bf16.mxu0 0
        %1608 = vmatpush2.bf16.msra.mxu0 0
        %1609 = vmatprep.subr.bf16.mxu0 0
        %1610 = vmatpush2.bf16.msra.mxu0 0
        %1611 = vmatprep.subr.bf16.mxu0 0
        %1612 = vmatpush2.bf16.msra.mxu0 0
        %1613 = vmatprep.subr.bf16.mxu0 0
        %1614 = vmatpush2.bf16.msra.mxu0 0
        %1615 = vmatprep.subr.bf16.mxu0 0
        %1616 = vmatpush2.bf16.msra.mxu0 0
        %1617 = vmatprep.mubr.bf16.mxu0 0
        %1618 = vmatmul.mubr.bf16.gmra.mxu0 %v1579
        %v1619 = vpop.f32.mrf.mxu0
        %v1620 = vadd.f32 0.0, %v1619
        %v1621 = vpop.f32.mrf.mxu0
        %v1622 = vpop.f32.mrf.mxu0
        %v1623 = vpop.f32.mrf.mxu0
        %1624 = vdwg.mxu0
        %v1626 = vsel %vm1341, %v1571, 0
        %v1629 = vsel %vm1581, %v1575, 0
        %1631 = vmatprep.subr.bf16.mxu0 0
        %1632 = vmatpush1.bf16.msra.mxu0 0
        %1633 = vmatprep.subr.bf16.mxu0 0
        %1634 = vmatpush1.bf16.msra.mxu0 0
        %1635 = vmatprep.subr.bf16.mxu0 0
        %1636 = vmatpush1.bf16.msra.mxu0 0
        %1637 = vmatprep.subr.bf16.mxu0 0
        %1638 = vmatpush1.bf16.msra.mxu0 0
        %1639 = vmatprep.subr.bf16.mxu0 0
        %1640 = vmatpush1.bf16.msra.mxu0 0
        %1641 = vmatprep.subr.bf16.mxu0 0
        %1642 = vmatpush1.bf16.msra.mxu0 0
        %1643 = vmatprep.subr.bf16.mxu0 0
        %1644 = vmatpush1.bf16.msra.mxu0 0
        %1645 = vmatprep.subr.bf16.mxu0 0
        %1646 = vmatpush1.bf16.msra.mxu0 %v1629
        %1647 = vmatprep.subr.bf16.mxu0 0
        %1648 = vmatpush2.bf16.msra.mxu0 0
        %1649 = vmatprep.subr.bf16.mxu0 0
        %1650 = vmatpush2.bf16.msra.mxu0 0
        %1651 = vmatprep.subr.bf16.mxu0 0
        %1652 = vmatpush2.bf16.msra.mxu0 0
        %1653 = vmatprep.subr.bf16.mxu0 0
        %1654 = vmatpush2.bf16.msra.mxu0 0
        %1655 = vmatprep.subr.bf16.mxu0 0
        %1656 = vmatpush2.bf16.msra.mxu0 0
        %1657 = vmatprep.subr.bf16.mxu0 0
        %1658 = vmatpush2.bf16.msra.mxu0 0
        %1659 = vmatprep.subr.bf16.mxu0 0
        %1660 = vmatpush2.bf16.msra.mxu0 0
        %1661 = vmatprep.subr.bf16.mxu0 0
        %1662 = vmatpush2.bf16.msra.mxu0 0
        %1663 = vmatprep.mubr.bf16.mxu0 0
        %1664 = vmatmul.mubr.bf16.gmra.mxu0 %v1626
        %v1665 = vpop.f32.mrf.mxu0
        %v1666 = vadd.f32 0.0, %v1665
        %v1667 = vpop.f32.mrf.mxu0
        %v1668 = vpop.f32.mrf.mxu0
        %v1669 = vpop.f32.mrf.mxu0
        %1670 = vdwg.mxu0
        %v1672 = vsel %vm1341, %v1572, 0
        %v1675 = vsel %vm1581, %v1576, 0
        %1677 = vmatprep.subr.bf16.mxu0 0
        %1678 = vmatpush1.bf16.msra.mxu0 0
        %1679 = vmatprep.subr.bf16.mxu0 0
        %1680 = vmatpush1.bf16.msra.mxu0 0
        %1681 = vmatprep.subr.bf16.mxu0 0
        %1682 = vmatpush1.bf16.msra.mxu0 0
        %1683 = vmatprep.subr.bf16.mxu0 0
        %1684 = vmatpush1.bf16.msra.mxu0 0
        %1685 = vmatprep.subr.bf16.mxu0 0
        %1686 = vmatpush1.bf16.msra.mxu0 0
        %1687 = vmatprep.subr.bf16.mxu0 0
        %1688 = vmatpush1.bf16.msra.mxu0 0
        %1689 = vmatprep.subr.bf16.mxu0 0
        %1690 = vmatpush1.bf16.msra.mxu0 0
        %1691 = vmatprep.subr.bf16.mxu0 0
        %1692 = vmatpush1.bf16.msra.mxu0 %v1675
        %1693 = vmatprep.subr.bf16.mxu0 0
        %1694 = vmatpush2.bf16.msra.mxu0 0
        %1695 = vmatprep.subr.bf16.mxu0 0
        %1696 = vmatpush2.bf16.msra.mxu0 0
        %1697 = vmatprep.subr.bf16.mxu0 0
        %1698 = vmatpush2.bf16.msra.mxu0 0
        %1699 = vmatprep.subr.bf16.mxu0 0
        %1700 = vmatpush2.bf16.msra.mxu0 0
        %1701 = vmatprep.subr.bf16.mxu0 0
        %1702 = vmatpush2.bf16.msra.mxu0 0
        %1703 = vmatprep.subr.bf16.mxu0 0
        %1704 = vmatpush2.bf16.msra.mxu0 0
        %1705 = vmatprep.subr.bf16.mxu0 0
        %1706 = vmatpush2.bf16.msra.mxu0 0
        %1707 = vmatprep.subr.bf16.mxu0 0
        %1708 = vmatpush2.bf16.msra.mxu0 0
        %1709 = vmatprep.mubr.bf16.mxu0 0
        %1710 = vmatmul.mubr.bf16.gmra.mxu0 %v1672
        %v1711 = vpop.f32.mrf.mxu0
        %v1712 = vadd.f32 0.0, %v1711
        %v1713 = vpop.f32.mrf.mxu0
        %v1714 = vpop.f32.mrf.mxu0
        %v1715 = vpop.f32.mrf.mxu0
        %1716 = vdwg.mxu0
        %v1718 = vsel %vm1341, %v1573, 0
        %v1721 = vsel %vm1581, %v1577, 0
        %1723 = vmatprep.subr.bf16.mxu0 0
        %1724 = vmatpush1.bf16.msra.mxu0 0
        %1725 = vmatprep.subr.bf16.mxu0 0
        %1726 = vmatpush1.bf16.msra.mxu0 0
        %1727 = vmatprep.subr.bf16.mxu0 0
        %1728 = vmatpush1.bf16.msra.mxu0 0
        %1729 = vmatprep.subr.bf16.mxu0 0
        %1730 = vmatpush1.bf16.msra.mxu0 0
        %1731 = vmatprep.subr.bf16.mxu0 0
        %1732 = vmatpush1.bf16.msra.mxu0 0
        %1733 = vmatprep.subr.bf16.mxu0 0
        %1734 = vmatpush1.bf16.msra.mxu0 0
        %1735 = vmatprep.subr.bf16.mxu0 0
        %1736 = vmatpush1.bf16.msra.mxu0 0
        %1737 = vmatprep.subr.bf16.mxu0 0
        %1738 = vmatpush1.bf16.msra.mxu0 %v1721
        %1739 = vmatprep.subr.bf16.mxu0 0
        %1740 = vmatpush2.bf16.msra.mxu0 0
        %1741 = vmatprep.subr.bf16.mxu0 0
        %1742 = vmatpush2.bf16.msra.mxu0 0
        %1743 = vmatprep.subr.bf16.mxu0 0
        %1744 = vmatpush2.bf16.msra.mxu0 0
        %1745 = vmatprep.subr.bf16.mxu0 0
        %1746 = vmatpush2.bf16.msra.mxu0 0
        %1747 = vmatprep.subr.bf16.mxu0 0
        %1748 = vmatpush2.bf16.msra.mxu0 0
        %1749 = vmatprep.subr.bf16.mxu0 0
        %1750 = vmatpush2.bf16.msra.mxu0 0
        %1751 = vmatprep.subr.bf16.mxu0 0
        %1752 = vmatpush2.bf16.msra.mxu0 0
        %1753 = vmatprep.subr.bf16.mxu0 0
        %1754 = vmatpush2.bf16.msra.mxu0 0
        %1755 = vmatprep.mubr.bf16.mxu0 0
        %1756 = vmatmul.mubr.bf16.gmra.mxu0 %v1718
        %v1757 = vpop.f32.mrf.mxu0
        %v1758 = vadd.f32 0.0, %v1757
        %v1759 = vpop.f32.mrf.mxu0
        %v1760 = vpop.f32.mrf.mxu0
        %v1761 = vpop.f32.mrf.mxu0
        %1762 = vdwg.mxu0
        %v1763 = vpack.c.bf16 %v1620, %v1620
        %v1764 = vpack.c.bf16 %v1666, %v1666
        %v1765 = vpack.c.bf16 %v1712, %v1712
        %v1766 = vpack.c.bf16 %v1758, %v1758
        %v1767 = vld [vmem:[%s6] sm:$0xf]
        %v1768 = vld [vmem:[%s6 + $0x4] sm:$0xf]
        %v1769 = vld [vmem:[%s6 + $0x8] sm:$0xf]
        %v1770 = vld [vmem:[%s6 + $0xc] sm:$0xf]
        %v1772 = vsel %vm1341, %v1763, 0
        %v1775 = vsel %vm1581, %v1767, 0
        %1777 = vmatprep.subr.bf16.mxu0 0
        %1778 = vmatpush1.bf16.msra.mxu0 0
        %1779 = vmatprep.subr.bf16.mxu0 0
        %1780 = vmatpush1.bf16.msra.mxu0 0
        %1781 = vmatprep.subr.bf16.mxu0 0
        %1782 = vmatpush1.bf16.msra.mxu0 0
        %1783 = vmatprep.subr.bf16.mxu0 0
        %1784 = vmatpush1.bf16.msra.mxu0 0
        %1785 = vmatprep.subr.bf16.mxu0 0
        %1786 = vmatpush1.bf16.msra.mxu0 0
        %1787 = vmatprep.subr.bf16.mxu0 0
        %1788 = vmatpush1.bf16.msra.mxu0 0
        %1789 = vmatprep.subr.bf16.mxu0 0
        %1790 = vmatpush1.bf16.msra.mxu0 0
        %1791 = vmatprep.subr.bf16.mxu0 0
        %1792 = vmatpush1.bf16.msra.mxu0 %v1775
        %1793 = vmatprep.subr.bf16.mxu0 0
        %1794 = vmatpush2.bf16.msra.mxu0 0
        %1795 = vmatprep.subr.bf16.mxu0 0
        %1796 = vmatpush2.bf16.msra.mxu0 0
        %1797 = vmatprep.subr.bf16.mxu0 0
        %1798 = vmatpush2.bf16.msra.mxu0 0
        %1799 = vmatprep.subr.bf16.mxu0 0
        %1800 = vmatpush2.bf16.msra.mxu0 0
        %1801 = vmatprep.subr.bf16.mxu0 0
        %1802 = vmatpush2.bf16.msra.mxu0 0
        %1803 = vmatprep.subr.bf16.mxu0 0
        %1804 = vmatpush2.bf16.msra.mxu0 0
        %1805 = vmatprep.subr.bf16.mxu0 0
        %1806 = vmatpush2.bf16.msra.mxu0 0
        %1807 = vmatprep.subr.bf16.mxu0 0
        %1808 = vmatpush2.bf16.msra.mxu0 0
        %1809 = vmatprep.mubr.bf16.mxu0 0
        %1810 = vmatmul.mubr.bf16.gmra.mxu0 %v1772
        %v1811 = vpop.f32.mrf.mxu0
        %v1812 = vadd.f32 0.0, %v1811
        %v1813 = vpop.f32.mrf.mxu0
        %v1814 = vpop.f32.mrf.mxu0
        %v1815 = vpop.f32.mrf.mxu0
        %1816 = vdwg.mxu0
        %v1818 = vsel %vm1341, %v1764, 0
        %v1821 = vsel %vm1581, %v1768, 0
        %1823 = vmatprep.subr.bf16.mxu0 0
        %1824 = vmatpush1.bf16.msra.mxu0 0
        %1825 = vmatprep.subr.bf16.mxu0 0
        %1826 = vmatpush1.bf16.msra.mxu0 0
        %1827 = vmatprep.subr.bf16.mxu0 0
        %1828 = vmatpush1.bf16.msra.mxu0 0
        %1829 = vmatprep.subr.bf16.mxu0 0
        %1830 = vmatpush1.bf16.msra.mxu0 0
        %1831 = vmatprep.subr.bf16.mxu0 0
        %1832 = vmatpush1.bf16.msra.mxu0 0
        %1833 = vmatprep.subr.bf16.mxu0 0
        %1834 = vmatpush1.bf16.msra.mxu0 0
        %1835 = vmatprep.subr.bf16.mxu0 0
        %1836 = vmatpush1.bf16.msra.mxu0 0
        %1837 = vmatprep.subr.bf16.mxu0 0
        %1838 = vmatpush1.bf16.msra.mxu0 %v1821
        %1839 = vmatprep.subr.bf16.mxu0 0
        %1840 = vmatpush2.bf16.msra.mxu0 0
        %1841 = vmatprep.subr.bf16.mxu0 0
        %1842 = vmatpush2.bf16.msra.mxu0 0
        %1843 = vmatprep.subr.bf16.mxu0 0
        %1844 = vmatpush2.bf16.msra.mxu0 0
        %1845 = vmatprep.subr.bf16.mxu0 0
        %1846 = vmatpush2.bf16.msra.mxu0 0
        %1847 = vmatprep.subr.bf16.mxu0 0
        %1848 = vmatpush2.bf16.msra.mxu0 0
        %1849 = vmatprep.subr.bf16.mxu0 0
        %1850 = vmatpush2.bf16.msra.mxu0 0
        %1851 = vmatprep.subr.bf16.mxu0 0
        %1852 = vmatpush2.bf16.msra.mxu0 0
        %1853 = vmatprep.subr.bf16.mxu0 0
        %1854 = vmatpush2.bf16.msra.mxu0 0
        %1855 = vmatprep.mubr.bf16.mxu0 0
        %1856 = vmatmul.mubr.bf16.gmra.mxu0 %v1818
        %v1857 = vpop.f32.mrf.mxu0
        %v1858 = vadd.f32 0.0, %v1857
        %v1859 = vpop.f32.mrf.mxu0
        %v1860 = vpop.f32.mrf.mxu0
        %v1861 = vpop.f32.mrf.mxu0
        %1862 = vdwg.mxu0
        %v1864 = vsel %vm1341, %v1765, 0
        %v1867 = vsel %vm1581, %v1769, 0
        %1869 = vmatprep.subr.bf16.mxu0 0
        %1870 = vmatpush1.bf16.msra.mxu0 0
        %1871 = vmatprep.subr.bf16.mxu0 0
        %1872 = vmatpush1.bf16.msra.mxu0 0
        %1873 = vmatprep.subr.bf16.mxu0 0
        %1874 = vmatpush1.bf16.msra.mxu0 0
        %1875 = vmatprep.subr.bf16.mxu0 0
        %1876 = vmatpush1.bf16.msra.mxu0 0
        %1877 = vmatprep.subr.bf16.mxu0 0
        %1878 = vmatpush1.bf16.msra.mxu0 0
        %1879 = vmatprep.subr.bf16.mxu0 0
        %1880 = vmatpush1.bf16.msra.mxu0 0
        %1881 = vmatprep.subr.bf16.mxu0 0
        %1882 = vmatpush1.bf16.msra.mxu0 0
        %1883 = vmatprep.subr.bf16.mxu0 0
        %1884 = vmatpush1.bf16.msra.mxu0 %v1867
        %1885 = vmatprep.subr.bf16.mxu0 0
        %1886 = vmatpush2.bf16.msra.mxu0 0
        %1887 = vmatprep.subr.bf16.mxu0 0
        %1888 = vmatpush2.bf16.msra.mxu0 0
        %1889 = vmatprep.subr.bf16.mxu0 0
        %1890 = vmatpush2.bf16.msra.mxu0 0
        %1891 = vmatprep.subr.bf16.mxu0 0
        %1892 = vmatpush2.bf16.msra.mxu0 0
        %1893 = vmatprep.subr.bf16.mxu0 0
        %1894 = vmatpush2.bf16.msra.mxu0 0
        %1895 = vmatprep.subr.bf16.mxu0 0
        %1896 = vmatpush2.bf16.msra.mxu0 0
        %1897 = vmatprep.subr.bf16.mxu0 0
        %1898 = vmatpush2.bf16.msra.mxu0 0
        %1899 = vmatprep.subr.bf16.mxu0 0
        %1900 = vmatpush2.bf16.msra.mxu0 0
        %1901 = vmatprep.mubr.bf16.mxu0 0
        %1902 = vmatmul.mubr.bf16.gmra.mxu0 %v1864
        %v1903 = vpop.f32.mrf.mxu0
        %v1904 = vadd.f32 0.0, %v1903
        %v1905 = vpop.f32.mrf.mxu0
        %v1906 = vpop.f32.mrf.mxu0
        %v1907 = vpop.f32.mrf.mxu0
        %1908 = vdwg.mxu0
        %v1910 = vsel %vm1341, %v1766, 0
        %v1913 = vsel %vm1581, %v1770, 0
        %1915 = vmatprep.subr.bf16.mxu0 0
        %1916 = vmatpush1.bf16.msra.mxu0 0
        %1917 = vmatprep.subr.bf16.mxu0 0
        %1918 = vmatpush1.bf16.msra.mxu0 0
        %1919 = vmatprep.subr.bf16.mxu0 0
        %1920 = vmatpush1.bf16.msra.mxu0 0
        %1921 = vmatprep.subr.bf16.mxu0 0
        %1922 = vmatpush1.bf16.msra.mxu0 0
        %1923 = vmatprep.subr.bf16.mxu0 0
        %1924 = vmatpush1.bf16.msra.mxu0 0
        %1925 = vmatprep.subr.bf16.mxu0 0
        %1926 = vmatpush1.bf16.msra.mxu0 0
        %1927 = vmatprep.subr.bf16.mxu0 0
        %1928 = vmatpush1.bf16.msra.mxu0 0
        %1929 = vmatprep.subr.bf16.mxu0 0
        %1930 = vmatpush1.bf16.msra.mxu0 %v1913
        %1931 = vmatprep.subr.bf16.mxu0 0
        %1932 = vmatpush2.bf16.msra.mxu0 0
        %1933 = vmatprep.subr.bf16.mxu0 0
        %1934 = vmatpush2.bf16.msra.mxu0 0
        %1935 = vmatprep.subr.bf16.mxu0 0
        %1936 = vmatpush2.bf16.msra.mxu0 0
        %1937 = vmatprep.subr.bf16.mxu0 0
        %1938 = vmatpush2.bf16.msra.mxu0 0
        %1939 = vmatprep.subr.bf16.mxu0 0
        %1940 = vmatpush2.bf16.msra.mxu0 0
        %1941 = vmatprep.subr.bf16.mxu0 0
        %1942 = vmatpush2.bf16.msra.mxu0 0
        %1943 = vmatprep.subr.bf16.mxu0 0
        %1944 = vmatpush2.bf16.msra.mxu0 0
        %1945 = vmatprep.subr.bf16.mxu0 0
        %1946 = vmatpush2.bf16.msra.mxu0 0
        %1947 = vmatprep.mubr.bf16.mxu0 0
        %1948 = vmatmul.mubr.bf16.gmra.mxu0 %v1910
        %v1949 = vpop.f32.mrf.mxu0
        %v1950 = vadd.f32 0.0, %v1949
        %v1951 = vpop.f32.mrf.mxu0
        %v1952 = vpop.f32.mrf.mxu0
        %v1953 = vpop.f32.mrf.mxu0
        %1954 = vdwg.mxu0
        %v1955 = vsel %vm538, %v1812, 0.0
        %v1956 = vsel %vm538, %v1858, 0.0
        %v1957 = vadd.f32 %v1955, %v1956
        %v1958 = vsel %vm538, %v1904, 0.0
        %v1959 = vadd.f32 %v1957, %v1958
        %v1960 = vsel %vm538, %v1950, 0.0
        %v1961 = vadd.f32 %v1959, %v1960
        %v1962 = vld [vmem:[%s7] sm:$0x1]
        %v1964 = vlaneseq
        %v1965 = vshrl.u32 %v1964, 7
        %v1966 = vsub.s32 0, %v1965
        %v1967 = vrot.slane %v1962, %v1966
        %v1969 = vadd.f32 %v1961, %v1967
        %v1970 = vadd.f32 %v1969, %v566
        %v1971 = vld [vmem:[%s8] sm:$0x1]
        %v1972 = vld [vmem:[%s9] sm:$0x1]
        %v1973 = vsel %vm538, %v1970, 0.0
        %1974 = vadd.xlane.f32.xlu0 %v1973
        %v1975 = vpop.xlane.xlu0 %1974
        %v1976 = vmul.f32 %v1975, %v542
        %v1977 = vsub.f32 %v1970, %v1976
        %v1978 = vmul.f32 %v1977, %v1977
        %v1979 = vsel %vm538, %v1978, 0.0
        %1980 = vadd.xlane.f32.xlu0 %v1979
        %v1981 = vpop.xlane.xlu0 %1980
        %v1982 = vmul.f32 %v1981, %v542
        %v1983 = vadd.f32 %v1982, 1e-12
        %v1984 = vrsqrt.pop %v1983
        %v1985 = vmul.f32 %v1977, %v1984
        %v1987 = vlaneseq
        %v1988 = vshrl.u32 %v1987, 7
        %v1989 = vsub.s32 0, %v1988
        %v1990 = vrot.slane %v1971, %v1989
        %v1992 = vmul.f32 %v1985, %v1990
        %v1994 = vlaneseq
        %v1995 = vshrl.u32 %v1994, 7
        %v1996 = vsub.s32 0, %v1995
        %v1997 = vrot.slane %v1972, %v1996
        %v1999 = vadd.f32 %v1992, %v1997
        %v2000 = vpack.c.bf16 %v1999, %v1999
        %v2001 = vld [vmem:[%s10] sm:$0xf]
        %v2002 = vld [vmem:[%s10 + $0x4] sm:$0xf]
        %v2003 = vld [vmem:[%s10 + $0x8] sm:$0xf]
        %v2004 = vld [vmem:[%s10 + $0xc] sm:$0xf]
        %v2005 = vld [vmem:[%s11] sm:$0x1]
        %v2007 = vlaneseq
        %v2008 = vshrl.u32 %v2007, 7
        %v2009 = vsub.s32 0, %v2008
        %v2010 = vrot.slane %v2005, %v2009
        %v2016 = vunpack.c.l.b16 %v2001
        %v2017 = vunpack.c.l.b16 %v2002
        %v2018 = vunpack.c.l.b16 %v2003
        %v2019 = vunpack.c.l.b16 %v2004
        %v2020 = vpack.c.b16 %v2017, %v2016
        %v2021 = vpack.c.b16 %v2019, %v2018
        %v2025 = vsel %vm538, %v2000, 0
        %2027 = vmatprep.subr.bf16.mxu0 0
        %2028 = vmatpush1.bf16.msra.mxu0 0
        %2029 = vmatprep.subr.bf16.mxu0 0
        %2030 = vmatpush1.bf16.msra.mxu0 0
        %2031 = vmatprep.subr.bf16.mxu0 0
        %2032 = vmatpush1.bf16.msra.mxu0 0
        %2033 = vmatprep.subr.bf16.mxu0 0
        %2034 = vmatpush1.bf16.msra.mxu0 0
        %2035 = vmatprep.subr.bf16.mxu0 0
        %2036 = vmatpush1.bf16.msra.mxu0 0
        %2037 = vmatprep.subr.bf16.mxu0 0
        %2038 = vmatpush1.bf16.msra.mxu0 0
        %2039 = vmatprep.subr.bf16.mxu0 0
        %2040 = vmatpush1.bf16.msra.mxu0 %v2021
        %2041 = vmatprep.subr.bf16.mxu0 0
        %2042 = vmatpush1.bf16.msra.mxu0 %v2020
        %2043 = vmatprep.subr.bf16.mxu0 0
        %2044 = vmatpush2.bf16.msra.mxu0 0
        %2045 = vmatprep.subr.bf16.mxu0 0
        %2046 = vmatpush2.bf16.msra.mxu0 0
        %2047 = vmatprep.subr.bf16.mxu0 0
        %2048 = vmatpush2.bf16.msra.mxu0 0
        %2049 = vmatprep.subr.bf16.mxu0 0
        %2050 = vmatpush2.bf16.msra.mxu0 0
        %2051 = vmatprep.subr.bf16.mxu0 0
        %2052 = vmatpush2.bf16.msra.mxu0 0
        %2053 = vmatprep.subr.bf16.mxu0 0
        %2054 = vmatpush2.bf16.msra.mxu0 0
        %2055 = vmatprep.subr.bf16.mxu0 0
        %2056 = vmatpush2.bf16.msra.mxu0 0
        %2057 = vmatprep.subr.bf16.mxu0 0
        %2058 = vmatpush2.bf16.msra.mxu0 0
        %2059 = vmatprep.mubr.bf16.mxu0 0
        %2060 = vmatmul.mubr.bf16.gmra.mxu0 %v2025
        %v2061 = vpop.f32.mrf.mxu0
        %v2062 = vadd.f32 %v2010, %v2061
        %v2063 = vpop.f32.mrf.mxu0
        %v2064 = vpop.f32.mrf.mxu0
        %v2065 = vpop.f32.mrf.mxu0
        %2066 = vdwg.mxu0
        %v2067 = vmul.f32 %v2062, 0.5
        %v2068 = vmul.f32 %v2062, 0.044715
        %v2069 = vmul.f32 %v2068, %v2062
        %v2070 = vmul.f32 %v2069, %v2062
        %v2071 = vadd.f32 %v2062, %v2070
        %v2072 = vmul.f32 %v2071, 0.7978846
        %v2073 = vtanh.pop %v2072
        %v2074 = vadd.f32 %v2073, 1.0
        %v2075 = vmul.f32 %v2067, %v2074
        %v2076 = vpack.c.bf16 %v2075, %v2075
        %v2077 = vld [vmem:[%s12] sm:$0xf]
        %v2078 = vld [vmem:[%s12 + $0x4] sm:$0xf]
        %v2079 = vld [vmem:[%s12 + $0x8] sm:$0xf]
        %v2080 = vld [vmem:[%s12 + $0xc] sm:$0xf]
        %v2081 = vld [vmem:[%s12 + $0x10] sm:$0xf]
        %v2082 = vld [vmem:[%s12 + $0x14] sm:$0xf]
        %v2083 = vld [vmem:[%s12 + $0x18] sm:$0xf]
        %v2084 = vld [vmem:[%s12 + $0x1c] sm:$0xf]
        %v2085 = vld [vmem:[%s13] sm:$0x1]
        %v2087 = vlaneseq
        %v2088 = vshrl.u32 %v2087, 7
        %v2089 = vsub.s32 0, %v2088
        %v2090 = vrot.slane %v2085, %v2089
        %v2100 = vunpack.c.l.b16 %v2077
        %v2101 = vunpack.c.l.b16 %v2078
        %v2102 = vunpack.c.l.b16 %v2079
        %v2103 = vunpack.c.l.b16 %v2080
        %v2104 = vunpack.c.l.b16 %v2081
        %v2105 = vunpack.c.l.b16 %v2082
        %v2106 = vunpack.c.l.b16 %v2083
        %v2107 = vunpack.c.l.b16 %v2084
        %v2108 = vpack.c.b16 %v2101, %v2100
        %v2109 = vpack.c.b16 %v2103, %v2102
        %v2110 = vpack.c.b16 %v2105, %v2104
        %v2111 = vpack.c.b16 %v2107, %v2106
        %vm2116 = vcmask 523264
        %v2118 = vsel %vm2116, %v2076, 0
        %2120 = vmatprep.subr.bf16.mxu0 0
        %2121 = vmatpush1.bf16.msra.mxu0 0
        %2122 = vmatprep.subr.bf16.mxu0 0
        %2123 = vmatpush1.bf16.msra.mxu0 0
        %2124 = vmatprep.subr.bf16.mxu0 0
        %2125 = vmatpush1.bf16.msra.mxu0 0
        %2126 = vmatprep.subr.bf16.mxu0 0
        %2127 = vmatpush1.bf16.msra.mxu0 0
        %2128 = vmatprep.subr.bf16.mxu0 0
        %2129 = vmatpush1.bf16.msra.mxu0 %v2111
        %2130 = vmatprep.subr.bf16.mxu0 0
        %2131 = vmatpush1.bf16.msra.mxu0 %v2110
        %2132 = vmatprep.subr.bf16.mxu0 0
        %2133 = vmatpush1.bf16.msra.mxu0 %v2109
        %2134 = vmatprep.subr.bf16.mxu0 0
        %2135 = vmatpush1.bf16.msra.mxu0 %v2108
        %2136 = vmatprep.subr.bf16.mxu0 0
        %2137 = vmatpush2.bf16.msra.mxu0 0
        %2138 = vmatprep.subr.bf16.mxu0 0
        %2139 = vmatpush2.bf16.msra.mxu0 0
        %2140 = vmatprep.subr.bf16.mxu0 0
        %2141 = vmatpush2.bf16.msra.mxu0 0
        %2142 = vmatprep.subr.bf16.mxu0 0
        %2143 = vmatpush2.bf16.msra.mxu0 0
        %2144 = vmatprep.subr.bf16.mxu0 0
        %2145 = vmatpush2.bf16.msra.mxu0 0
        %2146 = vmatprep.subr.bf16.mxu0 0
        %2147 = vmatpush2.bf16.msra.mxu0 0
        %2148 = vmatprep.subr.bf16.mxu0 0
        %2149 = vmatpush2.bf16.msra.mxu0 0
        %2150 = vmatprep.subr.bf16.mxu0 0
        %2151 = vmatpush2.bf16.msra.mxu0 0
        %2152 = vmatprep.mubr.bf16.mxu0 0
        %2153 = vmatmul.mubr.bf16.gmra.mxu0 %v2118
        %v2154 = vpop.f32.mrf.mxu0
        %v2155 = vadd.f32 %v2090, %v2154
        %v2156 = vpop.f32.mrf.mxu0
        %v2157 = vpop.f32.mrf.mxu0
        %v2158 = vpop.f32.mrf.mxu0
        %2159 = vdwg.mxu0
        %v2160 = vadd.f32 %v2155, %v1999
        %v2161 = vld [vmem:[%s14] sm:$0x1]
        %v2162 = vld [vmem:[%s15] sm:$0x1]
        %v2163 = vsel %vm538, %v2160, 0.0
        %2164 = vadd.xlane.f32.xlu0 %v2163
        %v2165 = vpop.xlane.xlu0 %2164
        %v2166 = vmul.f32 %v2165, %v542
        %v2167 = vsub.f32 %v2160, %v2166
        %v2168 = vmul.f32 %v2167, %v2167
        %v2169 = vsel %vm538, %v2168, 0.0
        %2170 = vadd.xlane.f32.xlu0 %v2169
        %v2171 = vpop.xlane.xlu0 %2170
        %v2172 = vmul.f32 %v2171, %v542
        %v2173 = vadd.f32 %v2172, 1e-12
        %v2174 = vrsqrt.pop %v2173
        %v2175 = vmul.f32 %v2167, %v2174
        %v2177 = vlaneseq
        %v2178 = vshrl.u32 %v2177, 7
        %v2179 = vsub.s32 0, %v2178
        %v2180 = vrot.slane %v2161, %v2179
        %v2182 = vmul.f32 %v2175, %v2180
        %v2184 = vlaneseq
        %v2185 = vshrl.u32 %v2184, 7
        %v2186 = vsub.s32 0, %v2185
        %v2187 = vrot.slane %v2162, %v2186
        %v2189 = vadd.f32 %v2182, %v2187
        %v2190 = vpack.c.bf16 %v2189, %v2189
        %s2191 = scalar_lea.vmem %s4, 192
        %v2192 = vld [vmem:[%s2191] sm:$0xf]
        %v2193 = vld [vmem:[%s2191 + $0x4] sm:$0xf]
        %v2194 = vld [vmem:[%s2191 + $0x8] sm:$0xf]
        %v2195 = vld [vmem:[%s2191 + $0xc] sm:$0xf]
        %v2196 = vld [vmem:[%s2191 + $0x10] sm:$0xf]
        %v2197 = vld [vmem:[%s2191 + $0x14] sm:$0xf]
        %v2198 = vld [vmem:[%s2191 + $0x18] sm:$0xf]
        %v2199 = vld [vmem:[%s2191 + $0x1c] sm:$0xf]
        %v2200 = vld [vmem:[%s2191 + $0x20] sm:$0xf]
        %v2201 = vld [vmem:[%s2191 + $0x24] sm:$0xf]
        %v2202 = vld [vmem:[%s2191 + $0x28] sm:$0xf]
        %v2203 = vld [vmem:[%s2191 + $0x2c] sm:$0xf]
        %v2204 = vld [vmem:[%s2191 + $0x30] sm:$0xf]
        %v2205 = vld [vmem:[%s2191 + $0x34] sm:$0xf]
        %v2206 = vld [vmem:[%s2191 + $0x38] sm:$0xf]
        %v2207 = vld [vmem:[%s2191 + $0x3c] sm:$0xf]
        %v2208 = vld [vmem:[%s2191 + $0x40] sm:$0xf]
        %v2209 = vld [vmem:[%s2191 + $0x44] sm:$0xf]
        %v2210 = vld [vmem:[%s2191 + $0x48] sm:$0xf]
        %v2211 = vld [vmem:[%s2191 + $0x4c] sm:$0xf]
        %v2212 = vld [vmem:[%s2191 + $0x50] sm:$0xf]
        %v2213 = vld [vmem:[%s2191 + $0x54] sm:$0xf]
        %v2214 = vld [vmem:[%s2191 + $0x58] sm:$0xf]
        %v2215 = vld [vmem:[%s2191 + $0x5c] sm:$0xf]
        %v2216 = vld [vmem:[%s2191 + $0x60] sm:$0xf]
        %v2217 = vld [vmem:[%s2191 + $0x64] sm:$0xf]
        %v2218 = vld [vmem:[%s2191 + $0x68] sm:$0xf]
        %v2219 = vld [vmem:[%s2191 + $0x6c] sm:$0xf]
        %v2220 = vld [vmem:[%s2191 + $0x70] sm:$0xf]
        %v2221 = vld [vmem:[%s2191 + $0x74] sm:$0xf]
        %v2222 = vld [vmem:[%s2191 + $0x78] sm:$0xf]
        %v2223 = vld [vmem:[%s2191 + $0x7c] sm:$0xf]
        %v2224 = vld [vmem:[%s2191 + $0x80] sm:$0xf]
        %v2225 = vld [vmem:[%s2191 + $0x84] sm:$0xf]
        %v2226 = vld [vmem:[%s2191 + $0x88] sm:$0xf]
        %v2227 = vld [vmem:[%s2191 + $0x8c] sm:$0xf]
        %v2228 = vld [vmem:[%s2191 + $0x90] sm:$0xf]
        %v2229 = vld [vmem:[%s2191 + $0x94] sm:$0xf]
        %v2230 = vld [vmem:[%s2191 + $0x98] sm:$0xf]
        %v2231 = vld [vmem:[%s2191 + $0x9c] sm:$0xf]
        %v2232 = vld [vmem:[%s2191 + $0xa0] sm:$0xf]
        %v2233 = vld [vmem:[%s2191 + $0xa4] sm:$0xf]
        %v2234 = vld [vmem:[%s2191 + $0xa8] sm:$0xf]
        %v2235 = vld [vmem:[%s2191 + $0xac] sm:$0xf]
        %v2236 = vld [vmem:[%s2191 + $0xb0] sm:$0xf]
        %v2237 = vld [vmem:[%s2191 + $0xb4] sm:$0xf]
        %v2238 = vld [vmem:[%s2191 + $0xb8] sm:$0xf]
        %v2239 = vld [vmem:[%s2191 + $0xbc] sm:$0xf]
        %s2240 = scalar_lea.vmem %s5, 12
        %v2241 = vld [vmem:[%s2240] sm:$0x1]
        %v2242 = vld [vmem:[%s2240 + $0x1] sm:$0x1]
        %v2243 = vld [vmem:[%s2240 + $0x2] sm:$0x1]
        %v2244 = vld [vmem:[%s2240 + $0x3] sm:$0x1]
        %v2245 = vld [vmem:[%s2240 + $0x4] sm:$0x1]
        %v2246 = vld [vmem:[%s2240 + $0x5] sm:$0x1]
        %v2247 = vld [vmem:[%s2240 + $0x6] sm:$0x1]
        %v2248 = vld [vmem:[%s2240 + $0x7] sm:$0x1]
        %v2249 = vld [vmem:[%s2240 + $0x8] sm:$0x1]
        %v2250 = vld [vmem:[%s2240 + $0x9] sm:$0x1]
        %v2251 = vld [vmem:[%s2240 + $0xa] sm:$0x1]
        %v2252 = vld [vmem:[%s2240 + $0xb] sm:$0x1]
        %v2265 = vlaneseq
        %v2266 = vshrl.u32 %v2265, 7
        %v2267 = vsub.s32 0, %v2266
        %v2268 = vrot.slane %v2241, %v2267
        %v2269 = vlaneseq
        %v2270 = vshrl.u32 %v2269, 7
        %v2271 = vsub.s32 0, %v2270
        %v2272 = vrot.slane %v2242, %v2271
        %v2273 = vlaneseq
        %v2274 = vshrl.u32 %v2273, 7
        %v2275 = vsub.s32 0, %v2274
        %v2276 = vrot.slane %v2243, %v2275
        %v2277 = vlaneseq
        %v2278 = vshrl.u32 %v2277, 7
        %v2279 = vsub.s32 0, %v2278
        %v2280 = vrot.slane %v2244, %v2279
        %v2281 = vlaneseq
        %v2282 = vshrl.u32 %v2281, 7
        %v2283 = vsub.s32 0, %v2282
        %v2284 = vrot.slane %v2245, %v2283
        %v2285 = vlaneseq
        %v2286 = vshrl.u32 %v2285, 7
        %v2287 = vsub.s32 0, %v2286
        %v2288 = vrot.slane %v2246, %v2287
        %v2289 = vlaneseq
        %v2290 = vshrl.u32 %v2289, 7
        %v2291 = vsub.s32 0, %v2290
        %v2292 = vrot.slane %v2247, %v2291
        %v2293 = vlaneseq
        %v2294 = vshrl.u32 %v2293, 7
        %v2295 = vsub.s32 0, %v2294
        %v2296 = vrot.slane %v2248, %v2295
        %v2297 = vlaneseq
        %v2298 = vshrl.u32 %v2297, 7
        %v2299 = vsub.s32 0, %v2298
        %v2300 = vrot.slane %v2249, %v2299
        %v2301 = vlaneseq
        %v2302 = vshrl.u32 %v2301, 7
        %v2303 = vsub.s32 0, %v2302
        %v2304 = vrot.slane %v2250, %v2303
        %v2305 = vlaneseq
        %v2306 = vshrl.u32 %v2305, 7
        %v2307 = vsub.s32 0, %v2306
        %v2308 = vrot.slane %v2251, %v2307
        %v2309 = vlaneseq
        %v2310 = vshrl.u32 %v2309, 7
        %v2311 = vsub.s32 0, %v2310
        %v2312 = vrot.slane %v2252, %v2311
        %v2329 = vunpack.c.l.b16 %v2192
        %v2330 = vunpack.c.l.b16 %v2193
        %v2331 = vunpack.c.l.b16 %v2194
        %v2332 = vunpack.c.l.b16 %v2195
        %v2333 = vpack.c.b16 %v2330, %v2329
        %v2334 = vpack.c.b16 %v2332, %v2331
        %v2338 = vsel %vm538, %v2190, 0
        %2340 = vmatprep.subr.bf16.mxu0 0
        %2341 = vmatpush1.bf16.msra.mxu0 0
        %2342 = vmatprep.subr.bf16.mxu0 0
        %2343 = vmatpush1.bf16.msra.mxu0 0
        %2344 = vmatprep.subr.bf16.mxu0 0
        %2345 = vmatpush1.bf16.msra.mxu0 0
        %2346 = vmatprep.subr.bf16.mxu0 0
        %2347 = vmatpush1.bf16.msra.mxu0 0
        %2348 = vmatprep.subr.bf16.mxu0 0
        %2349 = vmatpush1.bf16.msra.mxu0 0
        %2350 = vmatprep.subr.bf16.mxu0 0
        %2351 = vmatpush1.bf16.msra.mxu0 0
        %2352 = vmatprep.subr.bf16.mxu0 0
        %2353 = vmatpush1.bf16.msra.mxu0 %v2334
        %2354 = vmatprep.subr.bf16.mxu0 0
        %2355 = vmatpush1.bf16.msra.mxu0 %v2333
        %2356 = vmatprep.subr.bf16.mxu0 0
        %2357 = vmatpush2.bf16.msra.mxu0 0
        %2358 = vmatprep.subr.bf16.mxu0 0
        %2359 = vmatpush2.bf16.msra.mxu0 0
        %2360 = vmatprep.subr.bf16.mxu0 0
        %2361 = vmatpush2.bf16.msra.mxu0 0
        %2362 = vmatprep.subr.bf16.mxu0 0
        %2363 = vmatpush2.bf16.msra.mxu0 0
        %2364 = vmatprep.subr.bf16.mxu0 0
        %2365 = vmatpush2.bf16.msra.mxu0 0
        %2366 = vmatprep.subr.bf16.mxu0 0
        %2367 = vmatpush2.bf16.msra.mxu0 0
        %2368 = vmatprep.subr.bf16.mxu0 0
        %2369 = vmatpush2.bf16.msra.mxu0 0
        %2370 = vmatprep.subr.bf16.mxu0 0
        %2371 = vmatpush2.bf16.msra.mxu0 0
        %2372 = vmatprep.mubr.bf16.mxu0 0
        %2373 = vmatmul.mubr.bf16.gmra.mxu0 %v2338
        %v2374 = vpop.f32.mrf.mxu0
        %v2375 = vadd.f32 %v2268, %v2374
        %v2376 = vpop.f32.mrf.mxu0
        %v2377 = vpop.f32.mrf.mxu0
        %v2378 = vpop.f32.mrf.mxu0
        %2379 = vdwg.mxu0
        %v2384 = vunpack.c.l.b16 %v2196
        %v2385 = vunpack.c.l.b16 %v2197
        %v2386 = vunpack.c.l.b16 %v2198
        %v2387 = vunpack.c.l.b16 %v2199
        %v2388 = vpack.c.b16 %v2385, %v2384
        %v2389 = vpack.c.b16 %v2387, %v2386
        %2392 = vmatprep.subr.bf16.mxu0 0
        %2393 = vmatpush1.bf16.msra.mxu0 0
        %2394 = vmatprep.subr.bf16.mxu0 0
        %2395 = vmatpush1.bf16.msra.mxu0 0
        %2396 = vmatprep.subr.bf16.mxu0 0
        %2397 = vmatpush1.bf16.msra.mxu0 0
        %2398 = vmatprep.subr.bf16.mxu0 0
        %2399 = vmatpush1.bf16.msra.mxu0 0
        %2400 = vmatprep.subr.bf16.mxu0 0
        %2401 = vmatpush1.bf16.msra.mxu0 0
        %2402 = vmatprep.subr.bf16.mxu0 0
        %2403 = vmatpush1.bf16.msra.mxu0 0
        %2404 = vmatprep.subr.bf16.mxu0 0
        %2405 = vmatpush1.bf16.msra.mxu0 %v2389
        %2406 = vmatprep.subr.bf16.mxu0 0
        %2407 = vmatpush1.bf16.msra.mxu0 %v2388
        %2408 = vmatprep.subr.bf16.mxu0 0
        %2409 = vmatpush2.bf16.msra.mxu0 0
        %2410 = vmatprep.subr.bf16.mxu0 0
        %2411 = vmatpush2.bf16.msra.mxu0 0
        %2412 = vmatprep.subr.bf16.mxu0 0
        %2413 = vmatpush2.bf16.msra.mxu0 0
        %2414 = vmatprep.subr.bf16.mxu0 0
        %2415 = vmatpush2.bf16.msra.mxu0 0
        %2416 = vmatprep.subr.bf16.mxu0 0
        %2417 = vmatpush2.bf16.msra.mxu0 0
        %2418 = vmatprep.subr.bf16.mxu0 0
        %2419 = vmatpush2.bf16.msra.mxu0 0
        %2420 = vmatprep.subr.bf16.mxu0 0
        %2421 = vmatpush2.bf16.msra.mxu0 0
        %2422 = vmatprep.subr.bf16.mxu0 0
        %2423 = vmatpush2.bf16.msra.mxu0 0
        %2424 = vmatprep.mubr.bf16.mxu0 0
        %2425 = vmatmul.mubr.bf16.gmra.mxu0 %v2338
        %v2426 = vpop.f32.mrf.mxu0
        %v2427 = vadd.f32 %v2272, %v2426
        %v2428 = vpop.f32.mrf.mxu0
        %v2429 = vpop.f32.mrf.mxu0
        %v2430 = vpop.f32.mrf.mxu0
        %2431 = vdwg.mxu0
        %v2436 = vunpack.c.l.b16 %v2200
        %v2437 = vunpack.c.l.b16 %v2201
        %v2438 = vunpack.c.l.b16 %v2202
        %v2439 = vunpack.c.l.b16 %v2203
        %v2440 = vpack.c.b16 %v2437, %v2436
        %v2441 = vpack.c.b16 %v2439, %v2438
        %2444 = vmatprep.subr.bf16.mxu0 0
        %2445 = vmatpush1.bf16.msra.mxu0 0
        %2446 = vmatprep.subr.bf16.mxu0 0
        %2447 = vmatpush1.bf16.msra.mxu0 0
        %2448 = vmatprep.subr.bf16.mxu0 0
        %2449 = vmatpush1.bf16.msra.mxu0 0
        %2450 = vmatprep.subr.bf16.mxu0 0
        %2451 = vmatpush1.bf16.msra.mxu0 0
        %2452 = vmatprep.subr.bf16.mxu0 0
        %2453 = vmatpush1.bf16.msra.mxu0 0
        %2454 = vmatprep.subr.bf16.mxu0 0
        %2455 = vmatpush1.bf16.msra.mxu0 0
        %2456 = vmatprep.subr.bf16.mxu0 0
        %2457 = vmatpush1.bf16.msra.mxu0 %v2441
        %2458 = vmatprep.subr.bf16.mxu0 0
        %2459 = vmatpush1.bf16.msra.mxu0 %v2440
        %2460 = vmatprep.subr.bf16.mxu0 0
        %2461 = vmatpush2.bf16.msra.mxu0 0
        %2462 = vmatprep.subr.bf16.mxu0 0
        %2463 = vmatpush2.bf16.msra.mxu0 0
        %2464 = vmatprep.subr.bf16.mxu0 0
        %2465 = vmatpush2.bf16.msra.mxu0 0
        %2466 = vmatprep.subr.bf16.mxu0 0
        %2467 = vmatpush2.bf16.msra.mxu0 0
        %2468 = vmatprep.subr.bf16.mxu0 0
        %2469 = vmatpush2.bf16.msra.mxu0 0
        %2470 = vmatprep.subr.bf16.mxu0 0
        %2471 = vmatpush2.bf16.msra.mxu0 0
        %2472 = vmatprep.subr.bf16.mxu0 0
        %2473 = vmatpush2.bf16.msra.mxu0 0
        %2474 = vmatprep.subr.bf16.mxu0 0
        %2475 = vmatpush2.bf16.msra.mxu0 0
        %2476 = vmatprep.mubr.bf16.mxu0 0
        %2477 = vmatmul.mubr.bf16.gmra.mxu0 %v2338
        %v2478 = vpop.f32.mrf.mxu0
        %v2479 = vadd.f32 %v2276, %v2478
        %v2480 = vpop.f32.mrf.mxu0
        %v2481 = vpop.f32.mrf.mxu0
        %v2482 = vpop.f32.mrf.mxu0
        %2483 = vdwg.mxu0
        %v2488 = vunpack.c.l.b16 %v2204
        %v2489 = vunpack.c.l.b16 %v2205
        %v2490 = vunpack.c.l.b16 %v2206
        %v2491 = vunpack.c.l.b16 %v2207
        %v2492 = vpack.c.b16 %v2489, %v2488
        %v2493 = vpack.c.b16 %v2491, %v2490
        %2496 = vmatprep.subr.bf16.mxu0 0
        %2497 = vmatpush1.bf16.msra.mxu0 0
        %2498 = vmatprep.subr.bf16.mxu0 0
        %2499 = vmatpush1.bf16.msra.mxu0 0
        %2500 = vmatprep.subr.bf16.mxu0 0
        %2501 = vmatpush1.bf16.msra.mxu0 0
        %2502 = vmatprep.subr.bf16.mxu0 0
        %2503 = vmatpush1.bf16.msra.mxu0 0
        %2504 = vmatprep.subr.bf16.mxu0 0
        %2505 = vmatpush1.bf16.msra.mxu0 0
        %2506 = vmatprep.subr.bf16.mxu0 0
        %2507 = vmatpush1.bf16.msra.mxu0 0
        %2508 = vmatprep.subr.bf16.mxu0 0
        %2509 = vmatpush1.bf16.msra.mxu0 %v2493
        %2510 = vmatprep.subr.bf16.mxu0 0
        %2511 = vmatpush1.bf16.msra.mxu0 %v2492
        %2512 = vmatprep.subr.bf16.mxu0 0
        %2513 = vmatpush2.bf16.msra.mxu0 0
        %2514 = vmatprep.subr.bf16.mxu0 0
        %2515 = vmatpush2.bf16.msra.mxu0 0
        %2516 = vmatprep.subr.bf16.mxu0 0
        %2517 = vmatpush2.bf16.msra.mxu0 0
        %2518 = vmatprep.subr.bf16.mxu0 0
        %2519 = vmatpush2.bf16.msra.mxu0 0
        %2520 = vmatprep.subr.bf16.mxu0 0
        %2521 = vmatpush2.bf16.msra.mxu0 0
        %2522 = vmatprep.subr.bf16.mxu0 0
        %2523 = vmatpush2.bf16.msra.mxu0 0
        %2524 = vmatprep.subr.bf16.mxu0 0
        %2525 = vmatpush2.bf16.msra.mxu0 0
        %2526 = vmatprep.subr.bf16.mxu0 0
        %2527 = vmatpush2.bf16.msra.mxu0 0
        %2528 = vmatprep.mubr.bf16.mxu0 0
        %2529 = vmatmul.mubr.bf16.gmra.mxu0 %v2338
        %v2530 = vpop.f32.mrf.mxu0
        %v2531 = vadd.f32 %v2280, %v2530
        %v2532 = vpop.f32.mrf.mxu0
        %v2533 = vpop.f32.mrf.mxu0
        %v2534 = vpop.f32.mrf.mxu0
        %2535 = vdwg.mxu0
        %v2540 = vunpack.c.l.b16 %v2208
        %v2541 = vunpack.c.l.b16 %v2209
        %v2542 = vunpack.c.l.b16 %v2210
        %v2543 = vunpack.c.l.b16 %v2211
        %v2544 = vpack.c.b16 %v2541, %v2540
        %v2545 = vpack.c.b16 %v2543, %v2542
        %2548 = vmatprep.subr.bf16.mxu0 0
        %2549 = vmatpush1.bf16.msra.mxu0 0
        %2550 = vmatprep.subr.bf16.mxu0 0
        %2551 = vmatpush1.bf16.msra.mxu0 0
        %2552 = vmatprep.subr.bf16.mxu0 0
        %2553 = vmatpush1.bf16.msra.mxu0 0
        %2554 = vmatprep.subr.bf16.mxu0 0
        %2555 = vmatpush1.bf16.msra.mxu0 0
        %2556 = vmatprep.subr.bf16.mxu0 0
        %2557 = vmatpush1.bf16.msra.mxu0 0
        %2558 = vmatprep.subr.bf16.mxu0 0
        %2559 = vmatpush1.bf16.msra.mxu0 0
        %2560 = vmatprep.subr.bf16.mxu0 0
        %2561 = vmatpush1.bf16.msra.mxu0 %v2545
        %2562 = vmatprep.subr.bf16.mxu0 0
        %2563 = vmatpush1.bf16.msra.mxu0 %v2544
        %2564 = vmatprep.subr.bf16.mxu0 0
        %2565 = vmatpush2.bf16.msra.mxu0 0
        %2566 = vmatprep.subr.bf16.mxu0 0
        %2567 = vmatpush2.bf16.msra.mxu0 0
        %2568 = vmatprep.subr.bf16.mxu0 0
        %2569 = vmatpush2.bf16.msra.mxu0 0
        %2570 = vmatprep.subr.bf16.mxu0 0
        %2571 = vmatpush2.bf16.msra.mxu0 0
        %2572 = vmatprep.subr.bf16.mxu0 0
        %2573 = vmatpush2.bf16.msra.mxu0 0
        %2574 = vmatprep.subr.bf16.mxu0 0
        %2575 = vmatpush2.bf16.msra.mxu0 0
        %2576 = vmatprep.subr.bf16.mxu0 0
        %2577 = vmatpush2.bf16.msra.mxu0 0
        %2578 = vmatprep.subr.bf16.mxu0 0
        %2579 = vmatpush2.bf16.msra.mxu0 0
        %2580 = vmatprep.mubr.bf16.mxu0 0
        %2581 = vmatmul.mubr.bf16.gmra.mxu0 %v2338
        %v2582 = vpop.f32.mrf.mxu0
        %v2583 = vadd.f32 %v2284, %v2582
        %v2584 = vpop.f32.mrf.mxu0
        %v2585 = vpop.f32.mrf.mxu0
        %v2586 = vpop.f32.mrf.mxu0
        %2587 = vdwg.mxu0
        %v2592 = vunpack.c.l.b16 %v2212
        %v2593 = vunpack.c.l.b16 %v2213
        %v2594 = vunpack.c.l.b16 %v2214
        %v2595 = vunpack.c.l.b16 %v2215
        %v2596 = vpack.c.b16 %v2593, %v2592
        %v2597 = vpack.c.b16 %v2595, %v2594
        %2600 = vmatprep.subr.bf16.mxu0 0
        %2601 = vmatpush1.bf16.msra.mxu0 0
        %2602 = vmatprep.subr.bf16.mxu0 0
        %2603 = vmatpush1.bf16.msra.mxu0 0
        %2604 = vmatprep.subr.bf16.mxu0 0
        %2605 = vmatpush1.bf16.msra.mxu0 0
        %2606 = vmatprep.subr.bf16.mxu0 0
        %2607 = vmatpush1.bf16.msra.mxu0 0
        %2608 = vmatprep.subr.bf16.mxu0 0
        %2609 = vmatpush1.bf16.msra.mxu0 0
        %2610 = vmatprep.subr.bf16.mxu0 0
        %2611 = vmatpush1.bf16.msra.mxu0 0
        %2612 = vmatprep.subr.bf16.mxu0 0
        %2613 = vmatpush1.bf16.msra.mxu0 %v2597
        %2614 = vmatprep.subr.bf16.mxu0 0
        %2615 = vmatpush1.bf16.msra.mxu0 %v2596
        %2616 = vmatprep.subr.bf16.mxu0 0
        %2617 = vmatpush2.bf16.msra.mxu0 0
        %2618 = vmatprep.subr.bf16.mxu0 0
        %2619 = vmatpush2.bf16.msra.mxu0 0
        %2620 = vmatprep.subr.bf16.mxu0 0
        %2621 = vmatpush2.bf16.msra.mxu0 0
        %2622 = vmatprep.subr.bf16.mxu0 0
        %2623 = vmatpush2.bf16.msra.mxu0 0
        %2624 = vmatprep.subr.bf16.mxu0 0
        %2625 = vmatpush2.bf16.msra.mxu0 0
        %2626 = vmatprep.subr.bf16.mxu0 0
        %2627 = vmatpush2.bf16.msra.mxu0 0
        %2628 = vmatprep.subr.bf16.mxu0 0
        %2629 = vmatpush2.bf16.msra.mxu0 0
        %2630 = vmatprep.subr.bf16.mxu0 0
        %2631 = vmatpush2.bf16.msra.mxu0 0
        %2632 = vmatprep.mubr.bf16.mxu0 0
        %2633 = vmatmul.mubr.bf16.gmra.mxu0 %v2338
        %v2634 = vpop.f32.mrf.mxu0
        %v2635 = vadd.f32 %v2288, %v2634
        %v2636 = vpop.f32.mrf.mxu0
        %v2637 = vpop.f32.mrf.mxu0
        %v2638 = vpop.f32.mrf.mxu0
        %2639 = vdwg.mxu0
        %v2644 = vunpack.c.l.b16 %v2216
        %v2645 = vunpack.c.l.b16 %v2217
        %v2646 = vunpack.c.l.b16 %v2218
        %v2647 = vunpack.c.l.b16 %v2219
        %v2648 = vpack.c.b16 %v2645, %v2644
        %v2649 = vpack.c.b16 %v2647, %v2646
        %2652 = vmatprep.subr.bf16.mxu0 0
        %2653 = vmatpush1.bf16.msra.mxu0 0
        %2654 = vmatprep.subr.bf16.mxu0 0
        %2655 = vmatpush1.bf16.msra.mxu0 0
        %2656 = vmatprep.subr.bf16.mxu0 0
        %2657 = vmatpush1.bf16.msra.mxu0 0
        %2658 = vmatprep.subr.bf16.mxu0 0
        %2659 = vmatpush1.bf16.msra.mxu0 0
        %2660 = vmatprep.subr.bf16.mxu0 0
        %2661 = vmatpush1.bf16.msra.mxu0 0
        %2662 = vmatprep.subr.bf16.mxu0 0
        %2663 = vmatpush1.bf16.msra.mxu0 0
        %2664 = vmatprep.subr.bf16.mxu0 0
        %2665 = vmatpush1.bf16.msra.mxu0 %v2649
        %2666 = vmatprep.subr.bf16.mxu0 0
        %2667 = vmatpush1.bf16.msra.mxu0 %v2648
        %2668 = vmatprep.subr.bf16.mxu0 0
        %2669 = vmatpush2.bf16.msra.mxu0 0
        %2670 = vmatprep.subr.bf16.mxu0 0
        %2671 = vmatpush2.bf16.msra.mxu0 0
        %2672 = vmatprep.subr.bf16.mxu0 0
        %2673 = vmatpush2.bf16.msra.mxu0 0
        %2674 = vmatprep.subr.bf16.mxu0 0
        %2675 = vmatpush2.bf16.msra.mxu0 0
        %2676 = vmatprep.subr.bf16.mxu0 0
        %2677 = vmatpush2.bf16.msra.mxu0 0
        %2678 = vmatprep.subr.bf16.mxu0 0
        %2679 = vmatpush2.bf16.msra.mxu0 0
        %2680 = vmatprep.subr.bf16.mxu0 0
        %2681 = vmatpush2.bf16.msra.mxu0 0
        %2682 = vmatprep.subr.bf16.mxu0 0
        %2683 = vmatpush2.bf16.msra.mxu0 0
        %2684 = vmatprep.mubr.bf16.mxu0 0
        %2685 = vmatmul.mubr.bf16.gmra.mxu0 %v2338
        %v2686 = vpop.f32.mrf.mxu0
        %v2687 = vadd.f32 %v2292, %v2686
        %v2688 = vpop.f32.mrf.mxu0
        %v2689 = vpop.f32.mrf.mxu0
        %v2690 = vpop.f32.mrf.mxu0
        %2691 = vdwg.mxu0
        %v2696 = vunpack.c.l.b16 %v2220
        %v2697 = vunpack.c.l.b16 %v2221
        %v2698 = vunpack.c.l.b16 %v2222
        %v2699 = vunpack.c.l.b16 %v2223
        %v2700 = vpack.c.b16 %v2697, %v2696
        %v2701 = vpack.c.b16 %v2699, %v2698
        %2704 = vmatprep.subr.bf16.mxu0 0
        %2705 = vmatpush1.bf16.msra.mxu0 0
        %2706 = vmatprep.subr.bf16.mxu0 0
        %2707 = vmatpush1.bf16.msra.mxu0 0
        %2708 = vmatprep.subr.bf16.mxu0 0
        %2709 = vmatpush1.bf16.msra.mxu0 0
        %2710 = vmatprep.subr.bf16.mxu0 0
        %2711 = vmatpush1.bf16.msra.mxu0 0
        %2712 = vmatprep.subr.bf16.mxu0 0
        %2713 = vmatpush1.bf16.msra.mxu0 0
        %2714 = vmatprep.subr.bf16.mxu0 0
        %2715 = vmatpush1.bf16.msra.mxu0 0
        %2716 = vmatprep.subr.bf16.mxu0 0
        %2717 = vmatpush1.bf16.msra.mxu0 %v2701
        %2718 = vmatprep.subr.bf16.mxu0 0
        %2719 = vmatpush1.bf16.msra.mxu0 %v2700
        %2720 = vmatprep.subr.bf16.mxu0 0
        %2721 = vmatpush2.bf16.msra.mxu0 0
        %2722 = vmatprep.subr.bf16.mxu0 0
        %2723 = vmatpush2.bf16.msra.mxu0 0
        %2724 = vmatprep.subr.bf16.mxu0 0
        %2725 = vmatpush2.bf16.msra.mxu0 0
        %2726 = vmatprep.subr.bf16.mxu0 0
        %2727 = vmatpush2.bf16.msra.mxu0 0
        %2728 = vmatprep.subr.bf16.mxu0 0
        %2729 = vmatpush2.bf16.msra.mxu0 0
        %2730 = vmatprep.subr.bf16.mxu0 0
        %2731 = vmatpush2.bf16.msra.mxu0 0
        %2732 = vmatprep.subr.bf16.mxu0 0
        %2733 = vmatpush2.bf16.msra.mxu0 0
        %2734 = vmatprep.subr.bf16.mxu0 0
        %2735 = vmatpush2.bf16.msra.mxu0 0
        %2736 = vmatprep.mubr.bf16.mxu0 0
        %2737 = vmatmul.mubr.bf16.gmra.mxu0 %v2338
        %v2738 = vpop.f32.mrf.mxu0
        %v2739 = vadd.f32 %v2296, %v2738
        %v2740 = vpop.f32.mrf.mxu0
        %v2741 = vpop.f32.mrf.mxu0
        %v2742 = vpop.f32.mrf.mxu0
        %2743 = vdwg.mxu0
        %v2748 = vunpack.c.l.b16 %v2224
        %v2749 = vunpack.c.l.b16 %v2225
        %v2750 = vunpack.c.l.b16 %v2226
        %v2751 = vunpack.c.l.b16 %v2227
        %v2752 = vpack.c.b16 %v2749, %v2748
        %v2753 = vpack.c.b16 %v2751, %v2750
        %2756 = vmatprep.subr.bf16.mxu0 0
        %2757 = vmatpush1.bf16.msra.mxu0 0
        %2758 = vmatprep.subr.bf16.mxu0 0
        %2759 = vmatpush1.bf16.msra.mxu0 0
        %2760 = vmatprep.subr.bf16.mxu0 0
        %2761 = vmatpush1.bf16.msra.mxu0 0
        %2762 = vmatprep.subr.bf16.mxu0 0
        %2763 = vmatpush1.bf16.msra.mxu0 0
        %2764 = vmatprep.subr.bf16.mxu0 0
        %2765 = vmatpush1.bf16.msra.mxu0 0
        %2766 = vmatprep.subr.bf16.mxu0 0
        %2767 = vmatpush1.bf16.msra.mxu0 0
        %2768 = vmatprep.subr.bf16.mxu0 0
        %2769 = vmatpush1.bf16.msra.mxu0 %v2753
        %2770 = vmatprep.subr.bf16.mxu0 0
        %2771 = vmatpush1.bf16.msra.mxu0 %v2752
        %2772 = vmatprep.subr.bf16.mxu0 0
        %2773 = vmatpush2.bf16.msra.mxu0 0
        %2774 = vmatprep.subr.bf16.mxu0 0
        %2775 = vmatpush2.bf16.msra.mxu0 0
        %2776 = vmatprep.subr.bf16.mxu0 0
        %2777 = vmatpush2.bf16.msra.mxu0 0
        %2778 = vmatprep.subr.bf16.mxu0 0
        %2779 = vmatpush2.bf16.msra.mxu0 0
        %2780 = vmatprep.subr.bf16.mxu0 0
        %2781 = vmatpush2.bf16.msra.mxu0 0
        %2782 = vmatprep.subr.bf16.mxu0 0
        %2783 = vmatpush2.bf16.msra.mxu0 0
        %2784 = vmatprep.subr.bf16.mxu0 0
        %2785 = vmatpush2.bf16.msra.mxu0 0
        %2786 = vmatprep.subr.bf16.mxu0 0
        %2787 = vmatpush2.bf16.msra.mxu0 0
        %2788 = vmatprep.mubr.bf16.mxu0 0
        %2789 = vmatmul.mubr.bf16.gmra.mxu0 %v2338
        %v2790 = vpop.f32.mrf.mxu0
        %v2791 = vadd.f32 %v2300, %v2790
        %v2792 = vpop.f32.mrf.mxu0
        %v2793 = vpop.f32.mrf.mxu0
        %v2794 = vpop.f32.mrf.mxu0
        %2795 = vdwg.mxu0
        %v2800 = vunpack.c.l.b16 %v2228
        %v2801 = vunpack.c.l.b16 %v2229
        %v2802 = vunpack.c.l.b16 %v2230
        %v2803 = vunpack.c.l.b16 %v2231
        %v2804 = vpack.c.b16 %v2801, %v2800
        %v2805 = vpack.c.b16 %v2803, %v2802
        %2808 = vmatprep.subr.bf16.mxu0 0
        %2809 = vmatpush1.bf16.msra.mxu0 0
        %2810 = vmatprep.subr.bf16.mxu0 0
        %2811 = vmatpush1.bf16.msra.mxu0 0
        %2812 = vmatprep.subr.bf16.mxu0 0
        %2813 = vmatpush1.bf16.msra.mxu0 0
        %2814 = vmatprep.subr.bf16.mxu0 0
        %2815 = vmatpush1.bf16.msra.mxu0 0
        %2816 = vmatprep.subr.bf16.mxu0 0
        %2817 = vmatpush1.bf16.msra.mxu0 0
        %2818 = vmatprep.subr.bf16.mxu0 0
        %2819 = vmatpush1.bf16.msra.mxu0 0
        %2820 = vmatprep.subr.bf16.mxu0 0
        %2821 = vmatpush1.bf16.msra.mxu0 %v2805
        %2822 = vmatprep.subr.bf16.mxu0 0
        %2823 = vmatpush1.bf16.msra.mxu0 %v2804
        %2824 = vmatprep.subr.bf16.mxu0 0
        %2825 = vmatpush2.bf16.msra.mxu0 0
        %2826 = vmatprep.subr.bf16.mxu0 0
        %2827 = vmatpush2.bf16.msra.mxu0 0
        %2828 = vmatprep.subr.bf16.mxu0 0
        %2829 = vmatpush2.bf16.msra.mxu0 0
        %2830 = vmatprep.subr.bf16.mxu0 0
        %2831 = vmatpush2.bf16.msra.mxu0 0
        %2832 = vmatprep.subr.bf16.mxu0 0
        %2833 = vmatpush2.bf16.msra.mxu0 0
        %2834 = vmatprep.subr.bf16.mxu0 0
        %2835 = vmatpush2.bf16.msra.mxu0 0
        %2836 = vmatprep.subr.bf16.mxu0 0
        %2837 = vmatpush2.bf16.msra.mxu0 0
        %2838 = vmatprep.subr.bf16.mxu0 0
        %2839 = vmatpush2.bf16.msra.mxu0 0
        %2840 = vmatprep.mubr.bf16.mxu0 0
        %2841 = vmatmul.mubr.bf16.gmra.mxu0 %v2338
        %v2842 = vpop.f32.mrf.mxu0
        %v2843 = vadd.f32 %v2304, %v2842
        %v2844 = vpop.f32.mrf.mxu0
        %v2845 = vpop.f32.mrf.mxu0
        %v2846 = vpop.f32.mrf.mxu0
        %2847 = vdwg.mxu0
        %v2852 = vunpack.c.l.b16 %v2232
        %v2853 = vunpack.c.l.b16 %v2233
        %v2854 = vunpack.c.l.b16 %v2234
        %v2855 = vunpack.c.l.b16 %v2235
        %v2856 = vpack.c.b16 %v2853, %v2852
        %v2857 = vpack.c.b16 %v2855, %v2854
        %2860 = vmatprep.subr.bf16.mxu0 0
        %2861 = vmatpush1.bf16.msra.mxu0 0
        %2862 = vmatprep.subr.bf16.mxu0 0
        %2863 = vmatpush1.bf16.msra.mxu0 0
        %2864 = vmatprep.subr.bf16.mxu0 0
        %2865 = vmatpush1.bf16.msra.mxu0 0
        %2866 = vmatprep.subr.bf16.mxu0 0
        %2867 = vmatpush1.bf16.msra.mxu0 0
        %2868 = vmatprep.subr.bf16.mxu0 0
        %2869 = vmatpush1.bf16.msra.mxu0 0
        %2870 = vmatprep.subr.bf16.mxu0 0
        %2871 = vmatpush1.bf16.msra.mxu0 0
        %2872 = vmatprep.subr.bf16.mxu0 0
        %2873 = vmatpush1.bf16.msra.mxu0 %v2857
        %2874 = vmatprep.subr.bf16.mxu0 0
        %2875 = vmatpush1.bf16.msra.mxu0 %v2856
        %2876 = vmatprep.subr.bf16.mxu0 0
        %2877 = vmatpush2.bf16.msra.mxu0 0
        %2878 = vmatprep.subr.bf16.mxu0 0
        %2879 = vmatpush2.bf16.msra.mxu0 0
        %2880 = vmatprep.subr.bf16.mxu0 0
        %2881 = vmatpush2.bf16.msra.mxu0 0
        %2882 = vmatprep.subr.bf16.mxu0 0
        %2883 = vmatpush2.bf16.msra.mxu0 0
        %2884 = vmatprep.subr.bf16.mxu0 0
        %2885 = vmatpush2.bf16.msra.mxu0 0
        %2886 = vmatprep.subr.bf16.mxu0 0
        %2887 = vmatpush2.bf16.msra.mxu0 0
        %2888 = vmatprep.subr.bf16.mxu0 0
        %2889 = vmatpush2.bf16.msra.mxu0 0
        %2890 = vmatprep.subr.bf16.mxu0 0
        %2891 = vmatpush2.bf16.msra.mxu0 0
        %2892 = vmatprep.mubr.bf16.mxu0 0
        %2893 = vmatmul.mubr.bf16.gmra.mxu0 %v2338
        %v2894 = vpop.f32.mrf.mxu0
        %v2895 = vadd.f32 %v2308, %v2894
        %v2896 = vpop.f32.mrf.mxu0
        %v2897 = vpop.f32.mrf.mxu0
        %v2898 = vpop.f32.mrf.mxu0
        %2899 = vdwg.mxu0
        %v2904 = vunpack.c.l.b16 %v2236
        %v2905 = vunpack.c.l.b16 %v2237
        %v2906 = vunpack.c.l.b16 %v2238
        %v2907 = vunpack.c.l.b16 %v2239
        %v2908 = vpack.c.b16 %v2905, %v2904
        %v2909 = vpack.c.b16 %v2907, %v2906
        %2912 = vmatprep.subr.bf16.mxu0 0
        %2913 = vmatpush1.bf16.msra.mxu0 0
        %2914 = vmatprep.subr.bf16.mxu0 0
        %2915 = vmatpush1.bf16.msra.mxu0 0
        %2916 = vmatprep.subr.bf16.mxu0 0
        %2917 = vmatpush1.bf16.msra.mxu0 0
        %2918 = vmatprep.subr.bf16.mxu0 0
        %2919 = vmatpush1.bf16.msra.mxu0 0
        %2920 = vmatprep.subr.bf16.mxu0 0
        %2921 = vmatpush1.bf16.msra.mxu0 0
        %2922 = vmatprep.subr.bf16.mxu0 0
        %2923 = vmatpush1.bf16.msra.mxu0 0
        %2924 = vmatprep.subr.bf16.mxu0 0
        %2925 = vmatpush1.bf16.msra.mxu0 %v2909
        %2926 = vmatprep.subr.bf16.mxu0 0
        %2927 = vmatpush1.bf16.msra.mxu0 %v2908
        %2928 = vmatprep.subr.bf16.mxu0 0
        %2929 = vmatpush2.bf16.msra.mxu0 0
        %2930 = vmatprep.subr.bf16.mxu0 0
        %2931 = vmatpush2.bf16.msra.mxu0 0
        %2932 = vmatprep.subr.bf16.mxu0 0
        %2933 = vmatpush2.bf16.msra.mxu0 0
        %2934 = vmatprep.subr.bf16.mxu0 0
        %2935 = vmatpush2.bf16.msra.mxu0 0
        %2936 = vmatprep.subr.bf16.mxu0 0
        %2937 = vmatpush2.bf16.msra.mxu0 0
        %2938 = vmatprep.subr.bf16.mxu0 0
        %2939 = vmatpush2.bf16.msra.mxu0 0
        %2940 = vmatprep.subr.bf16.mxu0 0
        %2941 = vmatpush2.bf16.msra.mxu0 0
        %2942 = vmatprep.subr.bf16.mxu0 0
        %2943 = vmatpush2.bf16.msra.mxu0 0
        %2944 = vmatprep.mubr.bf16.mxu0 0
        %2945 = vmatmul.mubr.bf16.gmra.mxu0 %v2338
        %v2946 = vpop.f32.mrf.mxu0
        %v2947 = vadd.f32 %v2312, %v2946
        %v2948 = vpop.f32.mrf.mxu0
        %v2949 = vpop.f32.mrf.mxu0
        %v2950 = vpop.f32.mrf.mxu0
        %2951 = vdwg.mxu0
        %v2952 = vpack.c.bf16 %v2375, %v2375
        %v2953 = vpack.c.bf16 %v2427, %v2427
        %v2954 = vpack.c.bf16 %v2479, %v2479
        %v2955 = vpack.c.bf16 %v2531, %v2531
        %v2956 = vpack.c.bf16 %v2583, %v2583
        %v2957 = vpack.c.bf16 %v2635, %v2635
        %v2958 = vpack.c.bf16 %v2687, %v2687
        %v2959 = vpack.c.bf16 %v2739, %v2739
        %v2961 = vsel %vm1341, %v2952, 0
        %v2964 = vsel %vm1341, %v2956, 0
        %2966 = vmatprep.subr.bf16.mxu0 0
        %2967 = vmatpush1.bf16.xpose.msra.mxu0 0
        %2968 = vmatprep.subr.bf16.mxu0 0
        %2969 = vmatpush1.bf16.xpose.msra.mxu0 0
        %2970 = vmatprep.subr.bf16.mxu0 0
        %2971 = vmatpush1.bf16.xpose.msra.mxu0 0
        %2972 = vmatprep.subr.bf16.mxu0 0
        %2973 = vmatpush1.bf16.xpose.msra.mxu0 0
        %2974 = vmatprep.subr.bf16.mxu0 0
        %2975 = vmatpush1.bf16.xpose.msra.mxu0 0
        %2976 = vmatprep.subr.bf16.mxu0 0
        %2977 = vmatpush1.bf16.xpose.msra.mxu0 0
        %2978 = vmatprep.subr.bf16.mxu0 0
        %2979 = vmatpush1.bf16.xpose.msra.mxu0 0
        %2980 = vmatprep.subr.bf16.mxu0 0
        %2981 = vmatpush1.bf16.xpose.msra.mxu0 %v2964
        %2982 = vmatprep.subr.bf16.mxu0 0
        %2983 = vmatpush2.bf16.xpose.msra.mxu0 0
        %2984 = vmatprep.subr.bf16.mxu0 0
        %2985 = vmatpush2.bf16.xpose.msra.mxu0 0
        %2986 = vmatprep.subr.bf16.mxu0 0
        %2987 = vmatpush2.bf16.xpose.msra.mxu0 0
        %2988 = vmatprep.subr.bf16.mxu0 0
        %2989 = vmatpush2.bf16.xpose.msra.mxu0 0
        %2990 = vmatprep.subr.bf16.mxu0 0
        %2991 = vmatpush2.bf16.xpose.msra.mxu0 0
        %2992 = vmatprep.subr.bf16.mxu0 0
        %2993 = vmatpush2.bf16.xpose.msra.mxu0 0
        %2994 = vmatprep.subr.bf16.mxu0 0
        %2995 = vmatpush2.bf16.xpose.msra.mxu0 0
        %2996 = vmatprep.subr.bf16.mxu0 0
        %2997 = vmatpush2.bf16.xpose.msra.mxu0 0
        %2998 = vmatprep.mubr.bf16.mxu0 0
        %2999 = vmatmul.mubr.bf16.gmra.mxu0 %v2961
        %v3000 = vpop.f32.mrf.mxu0
        %v3001 = vadd.f32 %v1339, %v3000
        %v3002 = vpop.f32.mrf.mxu0
        %v3003 = vpop.f32.mrf.mxu0
        %v3004 = vpop.f32.mrf.mxu0
        %3005 = vdwg.mxu0
        %v3007 = vsel %vm1341, %v2953, 0
        %v3010 = vsel %vm1341, %v2957, 0
        %3012 = vmatprep.subr.bf16.mxu0 0
        %3013 = vmatpush1.bf16.xpose.msra.mxu0 0
        %3014 = vmatprep.subr.bf16.mxu0 0
        %3015 = vmatpush1.bf16.xpose.msra.mxu0 0
        %3016 = vmatprep.subr.bf16.mxu0 0
        %3017 = vmatpush1.bf16.xpose.msra.mxu0 0
        %3018 = vmatprep.subr.bf16.mxu0 0
        %3019 = vmatpush1.bf16.xpose.msra.mxu0 0
        %3020 = vmatprep.subr.bf16.mxu0 0
        %3021 = vmatpush1.bf16.xpose.msra.mxu0 0
        %3022 = vmatprep.subr.bf16.mxu0 0
        %3023 = vmatpush1.bf16.xpose.msra.mxu0 0
        %3024 = vmatprep.subr.bf16.mxu0 0
        %3025 = vmatpush1.bf16.xpose.msra.mxu0 0
        %3026 = vmatprep.subr.bf16.mxu0 0
        %3027 = vmatpush1.bf16.xpose.msra.mxu0 %v3010
        %3028 = vmatprep.subr.bf16.mxu0 0
        %3029 = vmatpush2.bf16.xpose.msra.mxu0 0
        %3030 = vmatprep.subr.bf16.mxu0 0
        %3031 = vmatpush2.bf16.xpose.msra.mxu0 0
        %3032 = vmatprep.subr.bf16.mxu0 0
        %3033 = vmatpush2.bf16.xpose.msra.mxu0 0
        %3034 = vmatprep.subr.bf16.mxu0 0
        %3035 = vmatpush2.bf16.xpose.msra.mxu0 0
        %3036 = vmatprep.subr.bf16.mxu0 0
        %3037 = vmatpush2.bf16.xpose.msra.mxu0 0
        %3038 = vmatprep.subr.bf16.mxu0 0
        %3039 = vmatpush2.bf16.xpose.msra.mxu0 0
        %3040 = vmatprep.subr.bf16.mxu0 0
        %3041 = vmatpush2.bf16.xpose.msra.mxu0 0
        %3042 = vmatprep.subr.bf16.mxu0 0
        %3043 = vmatpush2.bf16.xpose.msra.mxu0 0
        %3044 = vmatprep.mubr.bf16.mxu0 0
        %3045 = vmatmul.mubr.bf16.gmra.mxu0 %v3007
        %v3046 = vpop.f32.mrf.mxu0
        %v3047 = vadd.f32 %v1339, %v3046
        %v3048 = vpop.f32.mrf.mxu0
        %v3049 = vpop.f32.mrf.mxu0
        %v3050 = vpop.f32.mrf.mxu0
        %3051 = vdwg.mxu0
        %v3053 = vsel %vm1341, %v2954, 0
        %v3056 = vsel %vm1341, %v2958, 0
        %3058 = vmatprep.subr.bf16.mxu0 0
        %3059 = vmatpush1.bf16.xpose.msra.mxu0 0
        %3060 = vmatprep.subr.bf16.mxu0 0
        %3061 = vmatpush1.bf16.xpose.msra.mxu0 0
        %3062 = vmatprep.subr.bf16.mxu0 0
        %3063 = vmatpush1.bf16.xpose.msra.mxu0 0
        %3064 = vmatprep.subr.bf16.mxu0 0
        %3065 = vmatpush1.bf16.xpose.msra.mxu0 0
        %3066 = vmatprep.subr.bf16.mxu0 0
        %3067 = vmatpush1.bf16.xpose.msra.mxu0 0
        %3068 = vmatprep.subr.bf16.mxu0 0
        %3069 = vmatpush1.bf16.xpose.msra.mxu0 0
        %3070 = vmatprep.subr.bf16.mxu0 0
        %3071 = vmatpush1.bf16.xpose.msra.mxu0 0
        %3072 = vmatprep.subr.bf16.mxu0 0
        %3073 = vmatpush1.bf16.xpose.msra.mxu0 %v3056
        %3074 = vmatprep.subr.bf16.mxu0 0
        %3075 = vmatpush2.bf16.xpose.msra.mxu0 0
        %3076 = vmatprep.subr.bf16.mxu0 0
        %3077 = vmatpush2.bf16.xpose.msra.mxu0 0
        %3078 = vmatprep.subr.bf16.mxu0 0
        %3079 = vmatpush2.bf16.xpose.msra.mxu0 0
        %3080 = vmatprep.subr.bf16.mxu0 0
        %3081 = vmatpush2.bf16.xpose.msra.mxu0 0
        %3082 = vmatprep.subr.bf16.mxu0 0
        %3083 = vmatpush2.bf16.xpose.msra.mxu0 0
        %3084 = vmatprep.subr.bf16.mxu0 0
        %3085 = vmatpush2.bf16.xpose.msra.mxu0 0
        %3086 = vmatprep.subr.bf16.mxu0 0
        %3087 = vmatpush2.bf16.xpose.msra.mxu0 0
        %3088 = vmatprep.subr.bf16.mxu0 0
        %3089 = vmatpush2.bf16.xpose.msra.mxu0 0
        %3090 = vmatprep.mubr.bf16.mxu0 0
        %3091 = vmatmul.mubr.bf16.gmra.mxu0 %v3053
        %v3092 = vpop.f32.mrf.mxu0
        %v3093 = vadd.f32 %v1339, %v3092
        %v3094 = vpop.f32.mrf.mxu0
        %v3095 = vpop.f32.mrf.mxu0
        %v3096 = vpop.f32.mrf.mxu0
        %3097 = vdwg.mxu0
        %v3099 = vsel %vm1341, %v2955, 0
        %v3102 = vsel %vm1341, %v2959, 0
        %3104 = vmatprep.subr.bf16.mxu0 0
        %3105 = vmatpush1.bf16.xpose.msra.mxu0 0
        %3106 = vmatprep.subr.bf16.mxu0 0
        %3107 = vmatpush1.bf16.xpose.msra.mxu0 0
        %3108 = vmatprep.subr.bf16.mxu0 0
        %3109 = vmatpush1.bf16.xpose.msra.mxu0 0
        %3110 = vmatprep.subr.bf16.mxu0 0
        %3111 = vmatpush1.bf16.xpose.msra.mxu0 0
        %3112 = vmatprep.subr.bf16.mxu0 0
        %3113 = vmatpush1.bf16.xpose.msra.mxu0 0
        %3114 = vmatprep.subr.bf16.mxu0 0
        %3115 = vmatpush1.bf16.xpose.msra.mxu0 0
        %3116 = vmatprep.subr.bf16.mxu0 0
        %3117 = vmatpush1.bf16.xpose.msra.mxu0 0
        %3118 = vmatprep.subr.bf16.mxu0 0
        %3119 = vmatpush1.bf16.xpose.msra.mxu0 %v3102
        %3120 = vmatprep.subr.bf16.mxu0 0
        %3121 = vmatpush2.bf16.xpose.msra.mxu0 0
        %3122 = vmatprep.subr.bf16.mxu0 0
        %3123 = vmatpush2.bf16.xpose.msra.mxu0 0
        %3124 = vmatprep.subr.bf16.mxu0 0
        %3125 = vmatpush2.bf16.xpose.msra.mxu0 0
        %3126 = vmatprep.subr.bf16.mxu0 0
        %3127 = vmatpush2.bf16.xpose.msra.mxu0 0
        %3128 = vmatprep.subr.bf16.mxu0 0
        %3129 = vmatpush2.bf16.xpose.msra.mxu0 0
        %3130 = vmatprep.subr.bf16.mxu0 0
        %3131 = vmatpush2.bf16.xpose.msra.mxu0 0
        %3132 = vmatprep.subr.bf16.mxu0 0
        %3133 = vmatpush2.bf16.xpose.msra.mxu0 0
        %3134 = vmatprep.subr.bf16.mxu0 0
        %3135 = vmatpush2.bf16.xpose.msra.mxu0 0
        %3136 = vmatprep.mubr.bf16.mxu0 0
        %3137 = vmatmul.mubr.bf16.gmra.mxu0 %v3099
        %v3138 = vpop.f32.mrf.mxu0
        %v3139 = vadd.f32 %v1339, %v3138
        %v3140 = vpop.f32.mrf.mxu0
        %v3141 = vpop.f32.mrf.mxu0
        %v3142 = vpop.f32.mrf.mxu0
        %3143 = vdwg.mxu0
        %v3144 = vsel %vm1341, %v3001, -inf
        %3145 = vmax.xlane.f32.xlu0 %v3144
        %v3146 = vpop.xlane.xlu0 %3145
        %v3147 = vsel %vm1341, %v3047, -inf
        %3148 = vmax.xlane.f32.xlu0 %v3147
        %v3149 = vpop.xlane.xlu0 %3148
        %v3150 = vsel %vm1341, %v3093, -inf
        %3151 = vmax.xlane.f32.xlu0 %v3150
        %v3152 = vpop.xlane.xlu0 %3151
        %v3153 = vsel %vm1341, %v3139, -inf
        %3154 = vmax.xlane.f32.xlu0 %v3153
        %v3155 = vpop.xlane.xlu0 %3154
        %v3156 = vsub.f32 %v3001, %v3146
        %v3157 = vsub.f32 %v3047, %v3149
        %v3158 = vsub.f32 %v3093, %v3152
        %v3159 = vsub.f32 %v3139, %v3155
        %v3160 = vmul.f32 %v3156, 1.442695
        %v3161 = vpow.pop %v3160
        %v3162 = vmul.f32 %v3157, 1.442695
        %v3163 = vpow.pop %v3162
        %v3164 = vmul.f32 %v3158, 1.442695
        %v3165 = vpow.pop %v3164
        %v3166 = vmul.f32 %v3159, 1.442695
        %v3167 = vpow.pop %v3166
        %v3168 = vsel %vm1341, %v3161, 0.0
        %3169 = vadd.xlane.f32.xlu0 %v3168
        %v3170 = vpop.xlane.xlu0 %3169
        %v3171 = vsel %vm1341, %v3163, 0.0
        %3172 = vadd.xlane.f32.xlu0 %v3171
        %v3173 = vpop.xlane.xlu0 %3172
        %v3174 = vsel %vm1341, %v3165, 0.0
        %3175 = vadd.xlane.f32.xlu0 %v3174
        %v3176 = vpop.xlane.xlu0 %3175
        %v3177 = vsel %vm1341, %v3167, 0.0
        %3178 = vadd.xlane.f32.xlu0 %v3177
        %v3179 = vpop.xlane.xlu0 %3178
        %v3180 = vrcp.pop %v3170
        %v3181 = vrcp.pop %v3173
        %v3182 = vrcp.pop %v3176
        %v3183 = vrcp.pop %v3179
        %v3184 = vmul.f32 %v3161, %v3180
        %v3185 = vmul.f32 %v3163, %v3181
        %v3186 = vmul.f32 %v3165, %v3182
        %v3187 = vmul.f32 %v3167, %v3183
        %v3188 = vpack.c.bf16 %v3184, %v3184
        %v3189 = vpack.c.bf16 %v3185, %v3185
        %v3190 = vpack.c.bf16 %v3186, %v3186
        %v3191 = vpack.c.bf16 %v3187, %v3187
        %v3192 = vpack.c.bf16 %v2791, %v2791
        %v3193 = vpack.c.bf16 %v2843, %v2843
        %v3194 = vpack.c.bf16 %v2895, %v2895
        %v3195 = vpack.c.bf16 %v2947, %v2947
        %v3197 = vsel %vm1341, %v3188, 0
        %v3200 = vsel %vm1581, %v3192, 0
        %3202 = vmatprep.subr.bf16.mxu0 0
        %3203 = vmatpush1.bf16.msra.mxu0 0
        %3204 = vmatprep.subr.bf16.mxu0 0
        %3205 = vmatpush1.bf16.msra.mxu0 0
        %3206 = vmatprep.subr.bf16.mxu0 0
        %3207 = vmatpush1.bf16.msra.mxu0 0
        %3208 = vmatprep.subr.bf16.mxu0 0
        %3209 = vmatpush1.bf16.msra.mxu0 0
        %3210 = vmatprep.subr.bf16.mxu0 0
        %3211 = vmatpush1.bf16.msra.mxu0 0
        %3212 = vmatprep.subr.bf16.mxu0 0
        %3213 = vmatpush1.bf16.msra.mxu0 0
        %3214 = vmatprep.subr.bf16.mxu0 0
        %3215 = vmatpush1.bf16.msra.mxu0 0
        %3216 = vmatprep.subr.bf16.mxu0 0
        %3217 = vmatpush1.bf16.msra.mxu0 %v3200
        %3218 = vmatprep.subr.bf16.mxu0 0
        %3219 = vmatpush2.bf16.msra.mxu0 0
        %3220 = vmatprep.subr.bf16.mxu0 0
        %3221 = vmatpush2.bf16.msra.mxu0 0
        %3222 = vmatprep.subr.bf16.mxu0 0
        %3223 = vmatpush2.bf16.msra.mxu0 0
        %3224 = vmatprep.subr.bf16.mxu0 0
        %3225 = vmatpush2.bf16.msra.mxu0 0
        %3226 = vmatprep.subr.bf16.mxu0 0
        %3227 = vmatpush2.bf16.msra.mxu0 0
        %3228 = vmatprep.subr.bf16.mxu0 0
        %3229 = vmatpush2.bf16.msra.mxu0 0
        %3230 = vmatprep.subr.bf16.mxu0 0
        %3231 = vmatpush2.bf16.msra.mxu0 0
        %3232 = vmatprep.subr.bf16.mxu0 0
        %3233 = vmatpush2.bf16.msra.mxu0 0
        %3234 = vmatprep.mubr.bf16.mxu0 0
        %3235 = vmatmul.mubr.bf16.gmra.mxu0 %v3197
        %v3236 = vpop.f32.mrf.mxu0
        %v3237 = vadd.f32 0.0, %v3236
        %v3238 = vpop.f32.mrf.mxu0
        %v3239 = vpop.f32.mrf.mxu0
        %v3240 = vpop.f32.mrf.mxu0
        %3241 = vdwg.mxu0
        %v3243 = vsel %vm1341, %v3189, 0
        %v3246 = vsel %vm1581, %v3193, 0
        %3248 = vmatprep.subr.bf16.mxu0 0
        %3249 = vmatpush1.bf16.msra.mxu0 0
        %3250 = vmatprep.subr.bf16.mxu0 0
        %3251 = vmatpush1.bf16.msra.mxu0 0
        %3252 = vmatprep.subr.bf16.mxu0 0
        %3253 = vmatpush1.bf16.msra.mxu0 0
        %3254 = vmatprep.subr.bf16.mxu0 0
        %3255 = vmatpush1.bf16.msra.mxu0 0
        %3256 = vmatprep.subr.bf16.mxu0 0
        %3257 = vmatpush1.bf16.msra.mxu0 0
        %3258 = vmatprep.subr.bf16.mxu0 0
        %3259 = vmatpush1.bf16.msra.mxu0 0
        %3260 = vmatprep.subr.bf16.mxu0 0
        %3261 = vmatpush1.bf16.msra.mxu0 0
        %3262 = vmatprep.subr.bf16.mxu0 0
        %3263 = vmatpush1.bf16.msra.mxu0 %v3246
        %3264 = vmatprep.subr.bf16.mxu0 0
        %3265 = vmatpush2.bf16.msra.mxu0 0
        %3266 = vmatprep.subr.bf16.mxu0 0
        %3267 = vmatpush2.bf16.msra.mxu0 0
        %3268 = vmatprep.subr.bf16.mxu0 0
        %3269 = vmatpush2.bf16.msra.mxu0 0
        %3270 = vmatprep.subr.bf16.mxu0 0
        %3271 = vmatpush2.bf16.msra.mxu0 0
        %3272 = vmatprep.subr.bf16.mxu0 0
        %3273 = vmatpush2.bf16.msra.mxu0 0
        %3274 = vmatprep.subr.bf16.mxu0 0
        %3275 = vmatpush2.bf16.msra.mxu0 0
        %3276 = vmatprep.subr.bf16.mxu0 0
        %3277 = vmatpush2.bf16.msra.mxu0 0
        %3278 = vmatprep.subr.bf16.mxu0 0
        %3279 = vmatpush2.bf16.msra.mxu0 0
        %3280 = vmatprep.mubr.bf16.mxu0 0
        %3281 = vmatmul.mubr.bf16.gmra.mxu0 %v3243
        %v3282 = vpop.f32.mrf.mxu0
        %v3283 = vadd.f32 0.0, %v3282
        %v3284 = vpop.f32.mrf.mxu0
        %v3285 = vpop.f32.mrf.mxu0
        %v3286 = vpop.f32.mrf.mxu0
        %3287 = vdwg.mxu0
        %v3289 = vsel %vm1341, %v3190, 0
        %v3292 = vsel %vm1581, %v3194, 0
        %3294 = vmatprep.subr.bf16.mxu0 0
        %3295 = vmatpush1.bf16.msra.mxu0 0
        %3296 = vmatprep.subr.bf16.mxu0 0
        %3297 = vmatpush1.bf16.msra.mxu0 0
        %3298 = vmatprep.subr.bf16.mxu0 0
        %3299 = vmatpush1.bf16.msra.mxu0 0
        %3300 = vmatprep.subr.bf16.mxu0 0
        %3301 = vmatpush1.bf16.msra.mxu0 0
        %3302 = vmatprep.subr.bf16.mxu0 0
        %3303 = vmatpush1.bf16.msra.mxu0 0
        %3304 = vmatprep.subr.bf16.mxu0 0
        %3305 = vmatpush1.bf16.msra.mxu0 0
        %3306 = vmatprep.subr.bf16.mxu0 0
        %3307 = vmatpush1.bf16.msra.mxu0 0
        %3308 = vmatprep.subr.bf16.mxu0 0
        %3309 = vmatpush1.bf16.msra.mxu0 %v3292
        %3310 = vmatprep.subr.bf16.mxu0 0
        %3311 = vmatpush2.bf16.msra.mxu0 0
        %3312 = vmatprep.subr.bf16.mxu0 0
        %3313 = vmatpush2.bf16.msra.mxu0 0
        %3314 = vmatprep.subr.bf16.mxu0 0
        %3315 = vmatpush2.bf16.msra.mxu0 0
        %3316 = vmatprep.subr.bf16.mxu0 0
        %3317 = vmatpush2.bf16.msra.mxu0 0
        %3318 = vmatprep.subr.bf16.mxu0 0
        %3319 = vmatpush2.bf16.msra.mxu0 0
        %3320 = vmatprep.subr.bf16.mxu0 0
        %3321 = vmatpush2.bf16.msra.mxu0 0
        %3322 = vmatprep.subr.bf16.mxu0 0
        %3323 = vmatpush2.bf16.msra.mxu0 0
        %3324 = vmatprep.subr.bf16.mxu0 0
        %3325 = vmatpush2.bf16.msra.mxu0 0
        %3326 = vmatprep.mubr.bf16.mxu0 0
        %3327 = vmatmul.mubr.bf16.gmra.mxu0 %v3289
        %v3328 = vpop.f32.mrf.mxu0
        %v3329 = vadd.f32 0.0, %v3328
        %v3330 = vpop.f32.mrf.mxu0
        %v3331 = vpop.f32.mrf.mxu0
        %v3332 = vpop.f32.mrf.mxu0
        %3333 = vdwg.mxu0
        %v3335 = vsel %vm1341, %v3191, 0
        %v3338 = vsel %vm1581, %v3195, 0
        %3340 = vmatprep.subr.bf16.mxu0 0
        %3341 = vmatpush1.bf16.msra.mxu0 0
        %3342 = vmatprep.subr.bf16.mxu0 0
        %3343 = vmatpush1.bf16.msra.mxu0 0
        %3344 = vmatprep.subr.bf16.mxu0 0
        %3345 = vmatpush1.bf16.msra.mxu0 0
        %3346 = vmatprep.subr.bf16.mxu0 0
        %3347 = vmatpush1.bf16.msra.mxu0 0
        %3348 = vmatprep.subr.bf16.mxu0 0
        %3349 = vmatpush1.bf16.msra.mxu0 0
        %3350 = vmatprep.subr.bf16.mxu0 0
        %3351 = vmatpush1.bf16.msra.mxu0 0
        %3352 = vmatprep.subr.bf16.mxu0 0
        %3353 = vmatpush1.bf16.msra.mxu0 0
        %3354 = vmatprep.subr.bf16.mxu0 0
        %3355 = vmatpush1.bf16.msra.mxu0 %v3338
        %3356 = vmatprep.subr.bf16.mxu0 0
        %3357 = vmatpush2.bf16.msra.mxu0 0
        %3358 = vmatprep.subr.bf16.mxu0 0
        %3359 = vmatpush2.bf16.msra.mxu0 0
        %3360 = vmatprep.subr.bf16.mxu0 0
        %3361 = vmatpush2.bf16.msra.mxu0 0
        %3362 = vmatprep.subr.bf16.mxu0 0
        %3363 = vmatpush2.bf16.msra.mxu0 0
        %3364 = vmatprep.subr.bf16.mxu0 0
        %3365 = vmatpush2.bf16.msra.mxu0 0
        %3366 = vmatprep.subr.bf16.mxu0 0
        %3367 = vmatpush2.bf16.msra.mxu0 0
        %3368 = vmatprep.subr.bf16.mxu0 0
        %3369 = vmatpush2.bf16.msra.mxu0 0
        %3370 = vmatprep.subr.bf16.mxu0 0
        %3371 = vmatpush2.bf16.msra.mxu0 0
        %3372 = vmatprep.mubr.bf16.mxu0 0
        %3373 = vmatmul.mubr.bf16.gmra.mxu0 %v3335
        %v3374 = vpop.f32.mrf.mxu0
        %v3375 = vadd.f32 0.0, %v3374
        %v3376 = vpop.f32.mrf.mxu0
        %v3377 = vpop.f32.mrf.mxu0
        %v3378 = vpop.f32.mrf.mxu0
        %3379 = vdwg.mxu0
        %v3380 = vpack.c.bf16 %v3237, %v3237
        %v3381 = vpack.c.bf16 %v3283, %v3283
        %v3382 = vpack.c.bf16 %v3329, %v3329
        %v3383 = vpack.c.bf16 %v3375, %v3375
        %s3384 = scalar_lea.vmem %s6, 16
        %v3385 = vld [vmem:[%s3384] sm:$0xf]
        %v3386 = vld [vmem:[%s3384 + $0x4] sm:$0xf]
        %v3387 = vld [vmem:[%s3384 + $0x8] sm:$0xf]
        %v3388 = vld [vmem:[%s3384 + $0xc] sm:$0xf]
        %v3390 = vsel %vm1341, %v3380, 0
        %v3393 = vsel %vm1581, %v3385, 0
        %3395 = vmatprep.subr.bf16.mxu0 0
        %3396 = vmatpush1.bf16.msra.mxu0 0
        %3397 = vmatprep.subr.bf16.mxu0 0
        %3398 = vmatpush1.bf16.msra.mxu0 0
        %3399 = vmatprep.subr.bf16.mxu0 0
        %3400 = vmatpush1.bf16.msra.mxu0 0
        %3401 = vmatprep.subr.bf16.mxu0 0
        %3402 = vmatpush1.bf16.msra.mxu0 0
        %3403 = vmatprep.subr.bf16.mxu0 0
        %3404 = vmatpush1.bf16.msra.mxu0 0
        %3405 = vmatprep.subr.bf16.mxu0 0
        %3406 = vmatpush1.bf16.msra.mxu0 0
        %3407 = vmatprep.subr.bf16.mxu0 0
        %3408 = vmatpush1.bf16.msra.mxu0 0
        %3409 = vmatprep.subr.bf16.mxu0 0
        %3410 = vmatpush1.bf16.msra.mxu0 %v3393
        %3411 = vmatprep.subr.bf16.mxu0 0
        %3412 = vmatpush2.bf16.msra.mxu0 0
        %3413 = vmatprep.subr.bf16.mxu0 0
        %3414 = vmatpush2.bf16.msra.mxu0 0
        %3415 = vmatprep.subr.bf16.mxu0 0
        %3416 = vmatpush2.bf16.msra.mxu0 0
        %3417 = vmatprep.subr.bf16.mxu0 0
        %3418 = vmatpush2.bf16.msra.mxu0 0
        %3419 = vmatprep.subr.bf16.mxu0 0
        %3420 = vmatpush2.bf16.msra.mxu0 0
        %3421 = vmatprep.subr.bf16.mxu0 0
        %3422 = vmatpush2.bf16.msra.mxu0 0
        %3423 = vmatprep.subr.bf16.mxu0 0
        %3424 = vmatpush2.bf16.msra.mxu0 0
        %3425 = vmatprep.subr.bf16.mxu0 0
        %3426 = vmatpush2.bf16.msra.mxu0 0
        %3427 = vmatprep.mubr.bf16.mxu0 0
        %3428 = vmatmul.mubr.bf16.gmra.mxu0 %v3390
        %v3429 = vpop.f32.mrf.mxu0
        %v3430 = vadd.f32 0.0, %v3429
        %v3431 = vpop.f32.mrf.mxu0
        %v3432 = vpop.f32.mrf.mxu0
        %v3433 = vpop.f32.mrf.mxu0
        %3434 = vdwg.mxu0
        %v3436 = vsel %vm1341, %v3381, 0
        %v3439 = vsel %vm1581, %v3386, 0
        %3441 = vmatprep.subr.bf16.mxu0 0
        %3442 = vmatpush1.bf16.msra.mxu0 0
        %3443 = vmatprep.subr.bf16.mxu0 0
        %3444 = vmatpush1.bf16.msra.mxu0 0
        %3445 = vmatprep.subr.bf16.mxu0 0
        %3446 = vmatpush1.bf16.msra.mxu0 0
        %3447 = vmatprep.subr.bf16.mxu0 0
        %3448 = vmatpush1.bf16.msra.mxu0 0
        %3449 = vmatprep.subr.bf16.mxu0 0
        %3450 = vmatpush1.bf16.msra.mxu0 0
        %3451 = vmatprep.subr.bf16.mxu0 0
        %3452 = vmatpush1.bf16.msra.mxu0 0
        %3453 = vmatprep.subr.bf16.mxu0 0
        %3454 = vmatpush1.bf16.msra.mxu0 0
        %3455 = vmatprep.subr.bf16.mxu0 0
        %3456 = vmatpush1.bf16.msra.mxu0 %v3439
        %3457 = vmatprep.subr.bf16.mxu0 0
        %3458 = vmatpush2.bf16.msra.mxu0 0
        %3459 = vmatprep.subr.bf16.mxu0 0
        %3460 = vmatpush2.bf16.msra.mxu0 0
        %3461 = vmatprep.subr.bf16.mxu0 0
        %3462 = vmatpush2.bf16.msra.mxu0 0
        %3463 = vmatprep.subr.bf16.mxu0 0
        %3464 = vmatpush2.bf16.msra.mxu0 0
        %3465 = vmatprep.subr.bf16.mxu0 0
        %3466 = vmatpush2.bf16.msra.mxu0 0
        %3467 = vmatprep.subr.bf16.mxu0 0
        %3468 = vmatpush2.bf16.msra.mxu0 0
        %3469 = vmatprep.subr.bf16.mxu0 0
        %3470 = vmatpush2.bf16.msra.mxu0 0
        %3471 = vmatprep.subr.bf16.mxu0 0
        %3472 = vmatpush2.bf16.msra.mxu0 0
        %3473 = vmatprep.mubr.bf16.mxu0 0
        %3474 = vmatmul.mubr.bf16.gmra.mxu0 %v3436
        %v3475 = vpop.f32.mrf.mxu0
        %v3476 = vadd.f32 0.0, %v3475
        %v3477 = vpop.f32.mrf.mxu0
        %v3478 = vpop.f32.mrf.mxu0
        %v3479 = vpop.f32.mrf.mxu0
        %3480 = vdwg.mxu0
        %v3482 = vsel %vm1341, %v3382, 0
        %v3485 = vsel %vm1581, %v3387, 0
        %3487 = vmatprep.subr.bf16.mxu0 0
        %3488 = vmatpush1.bf16.msra.mxu0 0
        %3489 = vmatprep.subr.bf16.mxu0 0
        %3490 = vmatpush1.bf16.msra.mxu0 0
        %3491 = vmatprep.subr.bf16.mxu0 0
        %3492 = vmatpush1.bf16.msra.mxu0 0
        %3493 = vmatprep.subr.bf16.mxu0 0
        %3494 = vmatpush1.bf16.msra.mxu0 0
        %3495 = vmatprep.subr.bf16.mxu0 0
        %3496 = vmatpush1.bf16.msra.mxu0 0
        %3497 = vmatprep.subr.bf16.mxu0 0
        %3498 = vmatpush1.bf16.msra.mxu0 0
        %3499 = vmatprep.subr.bf16.mxu0 0
        %3500 = vmatpush1.bf16.msra.mxu0 0
        %3501 = vmatprep.subr.bf16.mxu0 0
        %3502 = vmatpush1.bf16.msra.mxu0 %v3485
        %3503 = vmatprep.subr.bf16.mxu0 0
        %3504 = vmatpush2.bf16.msra.mxu0 0
        %3505 = vmatprep.subr.bf16.mxu0 0
        %3506 = vmatpush2.bf16.msra.mxu0 0
        %3507 = vmatprep.subr.bf16.mxu0 0
        %3508 = vmatpush2.bf16.msra.mxu0 0
        %3509 = vmatprep.subr.bf16.mxu0 0
        %3510 = vmatpush2.bf16.msra.mxu0 0
        %3511 = vmatprep.subr.bf16.mxu0 0
        %3512 = vmatpush2.bf16.msra.mxu0 0
        %3513 = vmatprep.subr.bf16.mxu0 0
        %3514 = vmatpush2.bf16.msra.mxu0 0
        %3515 = vmatprep.subr.bf16.mxu0 0
        %3516 = vmatpush2.bf16.msra.mxu0 0
        %3517 = vmatprep.subr.bf16.mxu0 0
        %3518 = vmatpush2.bf16.msra.mxu0 0
        %3519 = vmatprep.mubr.bf16.mxu0 0
        %3520 = vmatmul.mubr.bf16.gmra.mxu0 %v3482
        %v3521 = vpop.f32.mrf.mxu0
        %v3522 = vadd.f32 0.0, %v3521
        %v3523 = vpop.f32.mrf.mxu0
        %v3524 = vpop.f32.mrf.mxu0
        %v3525 = vpop.f32.mrf.mxu0
        %3526 = vdwg.mxu0
        %v3528 = vsel %vm1341, %v3383, 0
        %v3531 = vsel %vm1581, %v3388, 0
        %3533 = vmatprep.subr.bf16.mxu0 0
        %3534 = vmatpush1.bf16.msra.mxu0 0
        %3535 = vmatprep.subr.bf16.mxu0 0
        %3536 = vmatpush1.bf16.msra.mxu0 0
        %3537 = vmatprep.subr.bf16.mxu0 0
        %3538 = vmatpush1.bf16.msra.mxu0 0
        %3539 = vmatprep.subr.bf16.mxu0 0
        %3540 = vmatpush1.bf16.msra.mxu0 0
        %3541 = vmatprep.subr.bf16.mxu0 0
        %3542 = vmatpush1.bf16.msra.mxu0 0
        %3543 = vmatprep.subr.bf16.mxu0 0
        %3544 = vmatpush1.bf16.msra.mxu0 0
        %3545 = vmatprep.subr.bf16.mxu0 0
        %3546 = vmatpush1.bf16.msra.mxu0 0
        %3547 = vmatprep.subr.bf16.mxu0 0
        %3548 = vmatpush1.bf16.msra.mxu0 %v3531
        %3549 = vmatprep.subr.bf16.mxu0 0
        %3550 = vmatpush2.bf16.msra.mxu0 0
        %3551 = vmatprep.subr.bf16.mxu0 0
        %3552 = vmatpush2.bf16.msra.mxu0 0
        %3553 = vmatprep.subr.bf16.mxu0 0
        %3554 = vmatpush2.bf16.msra.mxu0 0
        %3555 = vmatprep.subr.bf16.mxu0 0
        %3556 = vmatpush2.bf16.msra.mxu0 0
        %3557 = vmatprep.subr.bf16.mxu0 0
        %3558 = vmatpush2.bf16.msra.mxu0 0
        %3559 = vmatprep.subr.bf16.mxu0 0
        %3560 = vmatpush2.bf16.msra.mxu0 0
        %3561 = vmatprep.subr.bf16.mxu0 0
        %3562 = vmatpush2.bf16.msra.mxu0 0
        %3563 = vmatprep.subr.bf16.mxu0 0
        %3564 = vmatpush2.bf16.msra.mxu0 0
        %3565 = vmatprep.mubr.bf16.mxu0 0
        %3566 = vmatmul.mubr.bf16.gmra.mxu0 %v3528
        %v3567 = vpop.f32.mrf.mxu0
        %v3568 = vadd.f32 0.0, %v3567
        %v3569 = vpop.f32.mrf.mxu0
        %v3570 = vpop.f32.mrf.mxu0
        %v3571 = vpop.f32.mrf.mxu0
        %3572 = vdwg.mxu0
        %v3573 = vsel %vm538, %v3430, 0.0
        %v3574 = vsel %vm538, %v3476, 0.0
        %v3575 = vadd.f32 %v3573, %v3574
        %v3576 = vsel %vm538, %v3522, 0.0
        %v3577 = vadd.f32 %v3575, %v3576
        %v3578 = vsel %vm538, %v3568, 0.0
        %v3579 = vadd.f32 %v3577, %v3578
        %s3580 = scalar_lea.vmem %s7, 1
        %v3581 = vld [vmem:[%s3580] sm:$0x1]
        %v3583 = vlaneseq
        %v3584 = vshrl.u32 %v3583, 7
        %v3585 = vsub.s32 0, %v3584
        %v3586 = vrot.slane %v3581, %v3585
        %v3588 = vadd.f32 %v3579, %v3586
        %v3589 = vadd.f32 %v3588, %v2189
        %s3590 = scalar_lea.vmem %s8, 1
        %v3591 = vld [vmem:[%s3590] sm:$0x1]
        %s3592 = scalar_lea.vmem %s9, 1
        %v3593 = vld [vmem:[%s3592] sm:$0x1]
        %v3594 = vsel %vm538, %v3589, 0.0
        %3595 = vadd.xlane.f32.xlu0 %v3594
        %v3596 = vpop.xlane.xlu0 %3595
        %v3597 = vmul.f32 %v3596, %v542
        %v3598 = vsub.f32 %v3589, %v3597
        %v3599 = vmul.f32 %v3598, %v3598
        %v3600 = vsel %vm538, %v3599, 0.0
        %3601 = vadd.xlane.f32.xlu0 %v3600
        %v3602 = vpop.xlane.xlu0 %3601
        %v3603 = vmul.f32 %v3602, %v542
        %v3604 = vadd.f32 %v3603, 1e-12
        %v3605 = vrsqrt.pop %v3604
        %v3606 = vmul.f32 %v3598, %v3605
        %v3608 = vlaneseq
        %v3609 = vshrl.u32 %v3608, 7
        %v3610 = vsub.s32 0, %v3609
        %v3611 = vrot.slane %v3591, %v3610
        %v3613 = vmul.f32 %v3606, %v3611
        %v3615 = vlaneseq
        %v3616 = vshrl.u32 %v3615, 7
        %v3617 = vsub.s32 0, %v3616
        %v3618 = vrot.slane %v3593, %v3617
        %v3620 = vadd.f32 %v3613, %v3618
        %v3621 = vpack.c.bf16 %v3620, %v3620
        %s3622 = scalar_lea.vmem %s10, 16
        %v3623 = vld [vmem:[%s3622] sm:$0xf]
        %v3624 = vld [vmem:[%s3622 + $0x4] sm:$0xf]
        %v3625 = vld [vmem:[%s3622 + $0x8] sm:$0xf]
        %v3626 = vld [vmem:[%s3622 + $0xc] sm:$0xf]
        %s3627 = scalar_lea.vmem %s11, 1
        %v3628 = vld [vmem:[%s3627] sm:$0x1]
        %v3630 = vlaneseq
        %v3631 = vshrl.u32 %v3630, 7
        %v3632 = vsub.s32 0, %v3631
        %v3633 = vrot.slane %v3628, %v3632
        %v3639 = vunpack.c.l.b16 %v3623
        %v3640 = vunpack.c.l.b16 %v3624
        %v3641 = vunpack.c.l.b16 %v3625
        %v3642 = vunpack.c.l.b16 %v3626
        %v3643 = vpack.c.b16 %v3640, %v3639
        %v3644 = vpack.c.b16 %v3642, %v3641
        %v3648 = vsel %vm538, %v3621, 0
        %3650 = vmatprep.subr.bf16.mxu0 0
        %3651 = vmatpush1.bf16.msra.mxu0 0
        %3652 = vmatprep.subr.bf16.mxu0 0
        %3653 = vmatpush1.bf16.msra.mxu0 0
        %3654 = vmatprep.subr.bf16.mxu0 0
        %3655 = vmatpush1.bf16.msra.mxu0 0
        %3656 = vmatprep.subr.bf16.mxu0 0
        %3657 = vmatpush1.bf16.msra.mxu0 0
        %3658 = vmatprep.subr.bf16.mxu0 0
        %3659 = vmatpush1.bf16.msra.mxu0 0
        %3660 = vmatprep.subr.bf16.mxu0 0
        %3661 = vmatpush1.bf16.msra.mxu0 0
        %3662 = vmatprep.subr.bf16.mxu0 0
        %3663 = vmatpush1.bf16.msra.mxu0 %v3644
        %3664 = vmatprep.subr.bf16.mxu0 0
        %3665 = vmatpush1.bf16.msra.mxu0 %v3643
        %3666 = vmatprep.subr.bf16.mxu0 0
        %3667 = vmatpush2.bf16.msra.mxu0 0
        %3668 = vmatprep.subr.bf16.mxu0 0
        %3669 = vmatpush2.bf16.msra.mxu0 0
        %3670 = vmatprep.subr.bf16.mxu0 0
        %3671 = vmatpush2.bf16.msra.mxu0 0
        %3672 = vmatprep.subr.bf16.mxu0 0
        %3673 = vmatpush2.bf16.msra.mxu0 0
        %3674 = vmatprep.subr.bf16.mxu0 0
        %3675 = vmatpush2.bf16.msra.mxu0 0
        %3676 = vmatprep.subr.bf16.mxu0 0
        %3677 = vmatpush2.bf16.msra.mxu0 0
        %3678 = vmatprep.subr.bf16.mxu0 0
        %3679 = vmatpush2.bf16.msra.mxu0 0
        %3680 = vmatprep.subr.bf16.mxu0 0
        %3681 = vmatpush2.bf16.msra.mxu0 0
        %3682 = vmatprep.mubr.bf16.mxu0 0
        %3683 = vmatmul.mubr.bf16.gmra.mxu0 %v3648
        %v3684 = vpop.f32.mrf.mxu0
        %v3685 = vadd.f32 %v3633, %v3684
        %v3686 = vpop.f32.mrf.mxu0
        %v3687 = vpop.f32.mrf.mxu0
        %v3688 = vpop.f32.mrf.mxu0
        %3689 = vdwg.mxu0
        %v3690 = vmul.f32 %v3685, 0.5
        %v3691 = vmul.f32 %v3685, 0.044715
        %v3692 = vmul.f32 %v3691, %v3685
        %v3693 = vmul.f32 %v3692, %v3685
        %v3694 = vadd.f32 %v3685, %v3693
        %v3695 = vmul.f32 %v3694, 0.7978846
        %v3696 = vtanh.pop %v3695
        %v3697 = vadd.f32 %v3696, 1.0
        %v3698 = vmul.f32 %v3690, %v3697
        %v3699 = vpack.c.bf16 %v3698, %v3698
        %s3700 = scalar_lea.vmem %s12, 32
        %v3701 = vld [vmem:[%s3700] sm:$0xf]
        %v3702 = vld [vmem:[%s3700 + $0x4] sm:$0xf]
        %v3703 = vld [vmem:[%s3700 + $0x8] sm:$0xf]
        %v3704 = vld [vmem:[%s3700 + $0xc] sm:$0xf]
        %v3705 = vld [vmem:[%s3700 + $0x10] sm:$0xf]
        %v3706 = vld [vmem:[%s3700 + $0x14] sm:$0xf]
        %v3707 = vld [vmem:[%s3700 + $0x18] sm:$0xf]
        %v3708 = vld [vmem:[%s3700 + $0x1c] sm:$0xf]
        %s3709 = scalar_lea.vmem %s13, 1
        %v3710 = vld [vmem:[%s3709] sm:$0x1]
        %v3712 = vlaneseq
        %v3713 = vshrl.u32 %v3712, 7
        %v3714 = vsub.s32 0, %v3713
        %v3715 = vrot.slane %v3710, %v3714
        %v3725 = vunpack.c.l.b16 %v3701
        %v3726 = vunpack.c.l.b16 %v3702
        %v3727 = vunpack.c.l.b16 %v3703
        %v3728 = vunpack.c.l.b16 %v3704
        %v3729 = vunpack.c.l.b16 %v3705
        %v3730 = vunpack.c.l.b16 %v3706
        %v3731 = vunpack.c.l.b16 %v3707
        %v3732 = vunpack.c.l.b16 %v3708
        %v3733 = vpack.c.b16 %v3726, %v3725
        %v3734 = vpack.c.b16 %v3728, %v3727
        %v3735 = vpack.c.b16 %v3730, %v3729
        %v3736 = vpack.c.b16 %v3732, %v3731
        %v3742 = vsel %vm2116, %v3699, 0
        %3744 = vmatprep.subr.bf16.mxu0 0
        %3745 = vmatpush1.bf16.msra.mxu0 0
        %3746 = vmatprep.subr.bf16.mxu0 0
        %3747 = vmatpush1.bf16.msra.mxu0 0
        %3748 = vmatprep.subr.bf16.mxu0 0
        %3749 = vmatpush1.bf16.msra.mxu0 0
        %3750 = vmatprep.subr.bf16.mxu0 0
        %3751 = vmatpush1.bf16.msra.mxu0 0
        %3752 = vmatprep.subr.bf16.mxu0 0
        %3753 = vmatpush1.bf16.msra.mxu0 %v3736
        %3754 = vmatprep.subr.bf16.mxu0 0
        %3755 = vmatpush1.bf16.msra.mxu0 %v3735
        %3756 = vmatprep.subr.bf16.mxu0 0
        %3757 = vmatpush1.bf16.msra.mxu0 %v3734
        %3758 = vmatprep.subr.bf16.mxu0 0
        %3759 = vmatpush1.bf16.msra.mxu0 %v3733
        %3760 = vmatprep.subr.bf16.mxu0 0
        %3761 = vmatpush2.bf16.msra.mxu0 0
        %3762 = vmatprep.subr.bf16.mxu0 0
        %3763 = vmatpush2.bf16.msra.mxu0 0
        %3764 = vmatprep.subr.bf16.mxu0 0
        %3765 = vmatpush2.bf16.msra.mxu0 0
        %3766 = vmatprep.subr.bf16.mxu0 0
        %3767 = vmatpush2.bf16.msra.mxu0 0
        %3768 = vmatprep.subr.bf16.mxu0 0
        %3769 = vmatpush2.bf16.msra.mxu0 0
        %3770 = vmatprep.subr.bf16.mxu0 0
        %3771 = vmatpush2.bf16.msra.mxu0 0
        %3772 = vmatprep.subr.bf16.mxu0 0
        %3773 = vmatpush2.bf16.msra.mxu0 0
        %3774 = vmatprep.subr.bf16.mxu0 0
        %3775 = vmatpush2.bf16.msra.mxu0 0
        %3776 = vmatprep.mubr.bf16.mxu0 0
        %3777 = vmatmul.mubr.bf16.gmra.mxu0 %v3742
        %v3778 = vpop.f32.mrf.mxu0
        %v3779 = vadd.f32 %v3715, %v3778
        %v3780 = vpop.f32.mrf.mxu0
        %v3781 = vpop.f32.mrf.mxu0
        %v3782 = vpop.f32.mrf.mxu0
        %3783 = vdwg.mxu0
        %v3784 = vadd.f32 %v3779, %v3620
        %s3785 = scalar_lea.vmem %s14, 1
        %v3786 = vld [vmem:[%s3785] sm:$0x1]
        %s3787 = scalar_lea.vmem %s15, 1
        %v3788 = vld [vmem:[%s3787] sm:$0x1]
        %v3789 = vsel %vm538, %v3784, 0.0
        %3790 = vadd.xlane.f32.xlu0 %v3789
        %v3791 = vpop.xlane.xlu0 %3790
        %v3792 = vmul.f32 %v3791, %v542
        %v3793 = vsub.f32 %v3784, %v3792
        %v3794 = vmul.f32 %v3793, %v3793
        %v3795 = vsel %vm538, %v3794, 0.0
        %3796 = vadd.xlane.f32.xlu0 %v3795
        %v3797 = vpop.xlane.xlu0 %3796
        %v3798 = vmul.f32 %v3797, %v542
        %v3799 = vadd.f32 %v3798, 1e-12
        %v3800 = vrsqrt.pop %v3799
        %v3801 = vmul.f32 %v3793, %v3800
        %v3803 = vlaneseq
        %v3804 = vshrl.u32 %v3803, 7
        %v3805 = vsub.s32 0, %v3804
        %v3806 = vrot.slane %v3786, %v3805
        %v3808 = vmul.f32 %v3801, %v3806
        %v3810 = vlaneseq
        %v3811 = vshrl.u32 %v3810, 7
        %v3812 = vsub.s32 0, %v3811
        %v3813 = vrot.slane %v3788, %v3812
        %v3815 = vadd.f32 %v3808, %v3813
        %3816 = vst.msk [vmem:[%s523] sm:$0xff] %vm538, %v3815
        %s3817 = sand.u32 %s384, 1
        %s3818 = scalar_lea.sflag [#allocation3], %s3817
        %s3819 = sand.u32 %s384, 1
        %s3820 = smul.addr %s3819, 8
        %s3821 = scalar_lea.vmem [#allocation2], %s3820
        // Predicated region
        $region85: #{bert_encoder_forward.1} parent=83 // pred_check
          %p3822 = pneg %p394
        $region86: #{bert_encoder_forward.1} parent=83 // pred_check_branch
          %3824 = sbr.rel (%p3822) target = $region88
        $region87: #{bert_encoder_forward.1} parent=83 // pred_region
          %s3826 = ssub.s32 128, 128
          %3827 = vsyncadd %s3818, %s3826
          %s3828 = smul.addr %s30, 128
          %s3829 = scalar_lea.hbm %s16, %s3828
          %s3831 = sshll.u32 %s3821, 4
          %s3832 = int_to_ptr.vmem [resolvable:$true] %s3831
          %3834 = dma.vmem_to_hbm [thread:$0]  %s3832, 128, %s3829, %s3818
        $region88: #{bert_encoder_forward.1} parent=83 // pred_fallthru
          _
      $region84: #{bert_encoder_forward.1} parent=5 // pred_fallthru
        _
      %p3835 = scmp.le.s32.totalorder 2, %s25
      // Predicated region
      $region89: #{bert_encoder_forward.1} parent=5 // pred_check
        %p3836 = pneg %p3835
      $region90: #{bert_encoder_forward.1} parent=5 // pred_check_branch
        %3838 = sbr.rel (%p3836) target = $region92
      $region91: #{bert_encoder_forward.1} parent=5 // pred_region
        %s3839 = ssub.s32 %s25, 2
        // Predicated region
        $region93: #{bert_encoder_forward.1} parent=91 // pred_check
          %p3840 = pneg %p400
        $region94: #{bert_encoder_forward.1} parent=91 // pred_check_branch
          %3842 = sbr.rel (%p3840) target = $region96
        $region95: #{bert_encoder_forward.1} parent=91 // pred_region
          %s3843 = sand.u32 %s385, 1
          %s3844 = scalar_lea.sflag [#allocation3], %s3843
          %s3845 = sand.u32 %s385, 1
          %s3846 = smul.addr %s3845, 8
          %s3847 = scalar_lea.vmem [#allocation2], %s3846
          %3848 = dma.done %s3844, 128
        $region96: #{bert_encoder_forward.1} parent=91 // pred_fallthru
          _
      $region92: #{bert_encoder_forward.1} parent=5 // pred_fallthru
        _
    $region6: #{bert_encoder_forward.1} parent=1 // loop_footer
      %s29 = sadd.s32 1, %s25
    $region7: #{bert_encoder_forward.1} parent=1 // loop_footer_branch
      %24 = sbr.rel target = $region3
    $region8: #{bert_encoder_forward.1} parent=1 // loop_exit
      _
    %3849 = vsyncpa [#allocation3], 1
    %s3850 = scalar_lea.sflag [#allocation3], 1
    %3851 = vsyncpa %s3850, 1

</llo_original>
